<compile_context>
chip_gen: v7x
topology: tpu7x:2x2x1
jax: 0.10.0
libtpu: 0.0.40
codegen_flags: <defaults>
</compile_context>

<pallas_src>
import jax
import jax.numpy as jnp
from jax.experimental import pallas as pl
from jax.experimental.pallas import tpu as pltpu


# --------------------------------------------------------------------------
# In-kernel helpers
# --------------------------------------------------------------------------
def _selection_matrices(W, Wo):
    # sw0[w, wo] = 1  iff w == 2*wo       (even-column taps -> conv_1)
    # sw1[w, wo] = 1  iff w == 2*wo + 1   (odd-column taps  -> conv_2)
    r = jax.lax.broadcasted_iota(jnp.int32, (W, Wo), 0)
    c = jax.lax.broadcasted_iota(jnp.int32, (W, Wo), 1)
    sw0 = (r == 2 * c).astype(jnp.float32)
    sw1 = (r == 2 * c + 1).astype(jnp.float32)
    return sw0, sw1


def _conv_row(x_ref, wbd, sw0, sw1, t):
    """relu + both stride-2 1x1 convs for one output row t of the h-tile.

    x_ref block: (1, C_in, 2*tile_h, W).  Returns (C_out, Wo) = [conv_1 ; conv_2].
    """
    even = jnp.maximum(x_ref[0, :, 2 * t, :], 0.0)        # (C_in, W)  row 2t
    odd = jnp.maximum(x_ref[0, :, 2 * t + 1, :], 0.0)     # (C_in, W)  row 2t+1
    taps1 = jnp.dot(even, sw0, preferred_element_type=jnp.float32)   # (C_in, Wo)
    taps2 = jnp.dot(odd, sw1, preferred_element_type=jnp.float32)    # (C_in, Wo)
    taps = jnp.concatenate([taps1, taps2], axis=0)                   # (2*C_in, Wo)
    return jnp.dot(wbd, taps, preferred_element_type=jnp.float32)    # (C_out, Wo)


def _make_stats_kernel(tile_h, Ho, W, Wo, C_out):
    def kernel(x_ref, wbd_ref, sum_ref, sq_ref):
        ih = pl.program_id(1)
        wbd = wbd_ref[...]
        sw0, sw1 = _selection_matrices(W, Wo)
        tot = jnp.zeros((C_out, 1), jnp.float32)
        tot2 = jnp.zeros((C_out, 1), jnp.float32)
        for t in range(tile_h):                      # static unroll over the h-tile
            y = _conv_row(x_ref, wbd, sw0, sw1, t)
            valid = (ih * tile_h + t) < Ho           # mask the ragged tail block
            tot = tot + jnp.where(valid, jnp.sum(y, axis=1, keepdims=True), 0.0)
            tot2 = tot2 + jnp.where(valid, jnp.sum(y * y, axis=1, keepdims=True), 0.0)
        sum_ref[0, 0, :, :] = tot
        sq_ref[0, 0, :, :] = tot2
    return kernel


def _make_apply_kernel(tile_h, W, Wo):
    def kernel(x_ref, wbd_ref, scale_ref, shift_ref, o_ref):
        wbd = wbd_ref[...]
        scale = scale_ref[...]                       # (C_out, 1)
        shift = shift_ref[...]                       # (C_out, 1)
        sw0, sw1 = _selection_matrices(W, Wo)
        for t in range(tile_h):                      # static unroll over the h-tile
            y = _conv_row(x_ref, wbd, sw0, sw1, t)
            # invalid tail rows write garbage that Pallas clips at the HBM boundary
            o_ref[0, :, t, :] = y * scale + shift
    return kernel


# --------------------------------------------------------------------------
# Tile sizing against the per-generation VMEM budget
# --------------------------------------------------------------------------
def _block_bytes(tile_h, C_in, C_out, W, Wo):
    x_blk = C_in * 2 * tile_h * W * 4
    o_blk = C_out * tile_h * Wo * 4
    small = C_out * (2 * C_in + 2) * 4 + 2 * W * Wo * 4
    return 2 * (x_blk + o_blk) + small               # double-buffered pipeline blocks


def _vmem_capacity_bytes():
    try:
        return int(pltpu.get_tpu_info().vmem_capacity_bytes)
    except Exception:
        return 64 * 1024 * 1024                      # conservative (v7x) fallback


def _pick_tile_h(Ho, C_in, C_out, W, Wo, budget):
    # tile_h must be a multiple of 8 or equal Ho (block-shape rule on the
    # second-to-last dims of the x / out blocks).
    max_unroll = 32
    if Ho <= max_unroll and _block_bytes(Ho, C_in, C_out, W, Wo) <= budget:
        return Ho                                    # full height -> no ragged tail
    tile_h = 8
    while (tile_h + 8 <= min(Ho, max_unroll)
           and _block_bytes(tile_h + 8, C_in, C_out, W, Wo) <= budget):
        tile_h += 8
    return Ho if Ho < 8 else tile_h


# --------------------------------------------------------------------------
# Wrapper
# --------------------------------------------------------------------------
@jax.jit
def factorized_reduce(x_nchw, w1_oihw, w2_oihw, gamma, beta, eps=1e-5):
    """FactorizedReduce forward.

    x_nchw : (N, C_in, H, W) float32
    w1_oihw, w2_oihw : (C_out//2, C_in, 1, 1) conv weights (bias=False)
    gamma, beta : (C_out,) BN affine params
    Returns (N, C_out, H//2, W//2) float32, NCHW (matching PyTorch).
    BN uses batch statistics (training-mode behaviour of a fresh nn.Module).
    """
    N, C_in, H, W = x_nchw.shape
    Co2 = w1_oihw.shape[0]
    C_out = 2 * Co2
    assert H % 2 == 0 and W % 2 == 0, "concat requires matching spatial dims"
    Ho, Wo = H // 2, W // 2

    x = x_nchw.astype(jnp.float32)

    # Block-diagonal fused weight: rows [:Co2] only see the even/even taps,
    # rows [Co2:] only the odd/odd taps -> a single matmul, no lane concat.
    w1m = w1_oihw[:, :, 0, 0].astype(jnp.float32)        # (Co2, C_in)
    w2m = w2_oihw[:, :, 0, 0].astype(jnp.float32)
    z = jnp.zeros((Co2, C_in), jnp.float32)
    wbd = jnp.concatenate(
        [jnp.concatenate([w1m, z], axis=1),
         jnp.concatenate([z, w2m], axis=1)], axis=0)     # (C_out, 2*C_in)

    vmem_cap = _vmem_capacity_bytes()
    tile_h = _pick_tile_h(Ho, C_in, C_out, W, Wo, vmem_cap // 3)
    nh = pl.cdiv(Ho, tile_h)
    vmem_limit = int(min(vmem_cap,
                         max(32 * 1024 * 1024,
                             3 * _block_bytes(tile_h, C_in, C_out, W, Wo))))
    cparams = pltpu.CompilerParams(
        dimension_semantics=("parallel", "parallel"),    # megacore-friendly
        vmem_limit_bytes=vmem_limit)

    x_spec = pl.BlockSpec((1, C_in, 2 * tile_h, W), lambda n, ih: (n, 0, ih, 0))
    wbd_spec = pl.BlockSpec((C_out, 2 * C_in), lambda n, ih: (0, 0))

    # ---- pass 1: per-(n, h-tile) partial BN statistics only ----
    sums, sqs = pl.pallas_call(
        _make_stats_kernel(tile_h, Ho, W, Wo, C_out),
        out_shape=(jax.ShapeDtypeStruct((N, nh, C_out, 1), jnp.float32),
                   jax.ShapeDtypeStruct((N, nh, C_out, 1), jnp.float32)),
        grid_spec=pltpu.PrefetchScalarGridSpec(
            num_scalar_prefetch=0,
            grid=(N, nh),
            in_specs=[x_spec, wbd_spec],
            out_specs=(pl.BlockSpec((1, 1, C_out, 1), lambda n, ih: (n, ih, 0, 0)),
                       pl.BlockSpec((1, 1, C_out, 1), lambda n, ih: (n, ih, 0, 0)))),
        compiler_params=cparams,
    )(x, wbd)

    # ---- tiny finalize in JAX: batch stats -> per-channel scale/shift ----
    # TODO(synk): E[y^2]-E[y]^2 in f32 can lose precision for large-mean inputs;
    # switch to a shifted/Welford accumulation if that regime matters.
    m = float(N * Ho * Wo)
    tsum = jnp.sum(sums, axis=(0, 1))[:, 0]              # (C_out,)
    tsq = jnp.sum(sqs, axis=(0, 1))[:, 0]
    mean = tsum / m
    var = tsq / m - mean * mean                          # biased (training-mode BN)
    inv = gamma.astype(jnp.float32) * jax.lax.rsqrt(var + eps)
    scale = inv.reshape(C_out, 1)
    shift = (beta.astype(jnp.float32) - mean * inv).reshape(C_out, 1)

    # ---- pass 2: recompute the cheap conv + apply BN, write NCHW output ----
    out = pl.pallas_call(
        _make_apply_kernel(tile_h, W, Wo),
        out_shape=jax.ShapeDtypeStruct((N, C_out, Ho, Wo), jnp.float32),
        grid_spec=pltpu.PrefetchScalarGridSpec(
            num_scalar_prefetch=0,
            grid=(N, nh),
            in_specs=[x_spec,
                      wbd_spec,
                      pl.BlockSpec((C_out, 1), lambda n, ih: (0, 0)),
                      pl.BlockSpec((C_out, 1), lambda n, ih: (0, 0))],
            out_specs=pl.BlockSpec((1, C_out, tile_h, Wo),
                                   lambda n, ih: (n, 0, ih, 0))),
        compiler_params=cparams,
    )(x, wbd, scale, shift)
    return out


# --------------------------------------------------------------------------
# Pure-JAX reference (mirrors the PyTorch forward exactly)
# --------------------------------------------------------------------------
def factorized_reduce_ref(x_nchw, w1_oihw, w2_oihw, gamma, beta, eps=1e-5):
    xr = jnp.maximum(x_nchw, 0.0)
    dn = ("NCHW", "OIHW", "NCHW")
    y1 = jax.lax.conv_general_dilated(xr, w1_oihw, (2, 2), "VALID",
                                      dimension_numbers=dn)
    y2 = jax.lax.conv_general_dilated(xr[:, :, 1:, 1:], w2_oihw, (2, 2), "VALID",
                                      dimension_numbers=dn)
    y = jnp.concatenate([y1, y2], axis=1)
    mean = y.mean(axis=(0, 2, 3), keepdims=True)
    var = y.var(axis=(0, 2, 3), keepdims=True)           # biased (training-mode BN)
    yhat = (y - mean) * jax.lax.rsqrt(var + eps)
    return yhat * gamma.reshape(1, -1, 1, 1) + beta.reshape(1, -1, 1, 1)


if __name__ == "__main__":
    # Module config (C_out must be even)
    N, C_in, H, W = 2, 4, 16, 16
    C_out = 8
    Co2 = C_out // 2

    key = jax.random.PRNGKey(0)
    kx, k1, k2, kg, kb = jax.random.split(key, 5)

    x = jax.random.normal(kx, (N, C_in, H, W), dtype=jnp.float32)
    # conv weights: (C_out//2, C_in, 1, 1), no bias (bias=False in the module)
    w1 = jax.random.normal(k1, (Co2, C_in, 1, 1), dtype=jnp.float32) * 0.1
    w2 = jax.random.normal(k2, (Co2, C_in, 1, 1), dtype=jnp.float32) * 0.1
    # BN affine params (affine=True); deterministic synthetic init
    gamma = 1.0 + 0.1 * jax.random.normal(kg, (C_out,), dtype=jnp.float32)
    beta = 0.1 * jax.random.normal(kb, (C_out,), dtype=jnp.float32)

    out = factorized_reduce(x, w1, w2, gamma, beta)
    out = jax.block_until_ready(out)

    ref = factorized_reduce_ref(x, w1, w2, gamma, beta)
    assert out.shape == (N, C_out, H // 2, W // 2), out.shape
    assert jnp.allclose(out, ref, atol=1e-4, rtol=1e-4), (
        float(jnp.max(jnp.abs(out - ref))))

    print("KERNEL_OK")
</pallas_src>

<mosaic_0001>
module attributes {stable_mosaic.version = 11 : i64} {
  func.func @kernel(%arg0: i32, %arg1: i32, %arg2: memref<1x4x16x16xf32, #tpu.memory_space<vmem>>, %arg3: memref<8x8xf32, #tpu.memory_space<vmem>>, %arg4: memref<1x1x8x1xf32, #tpu.memory_space<vmem>>, %arg5: memref<1x1x8x1xf32, #tpu.memory_space<vmem>>) attributes {dimension_semantics = [#tpu.dimension_semantics<parallel>, #tpu.dimension_semantics<parallel>], iteration_bounds = array<i64: 2, 1>, scalar_prefetch = 0 : i64, scratch_operands = 0 : i64, tpu.core_type = #tpu.core_type<tc>, window_params = [{transform_indices = @transform_0, window_bounds = array<i64: 1, 4, 16, 16>}, {pipeline_mode = #tpu.pipeline_mode<synchronous>, transform_indices = @transform_1, window_bounds = array<i64: 8, 8>}, {transform_indices = @transform_2, window_bounds = array<i64: 1, 1, 8, 1>}, {transform_indices = @transform_3, window_bounds = array<i64: 1, 1, 8, 1>}]} {
    %c0 = arith.constant 0 : index
    %c0_0 = arith.constant 0 : index
    %0 = vector.load %arg3[%c0, %c0_0] : memref<8x8xf32, #tpu.memory_space<vmem>>, vector<8x8xf32>
    %1 = tpu.iota {dimensions = array<i32: 0>} : vector<16x8xi32>
    %2 = tpu.iota {dimensions = array<i32: 1>} : vector<16x8xi32>
    %c2_i32 = arith.constant 2 : i32
    %3 = vector.broadcast %c2_i32 : i32 to vector<16x8xi32>
    %4 = arith.muli %3, %2 : vector<16x8xi32>
    %5 = arith.cmpi eq, %1, %4 : vector<16x8xi32>
    %6 = arith.extui %5 : vector<16x8xi1> to vector<16x8xi32>
    %7 = arith.sitofp %6 : vector<16x8xi32> to vector<16x8xf32>
    %c2_i32_1 = arith.constant 2 : i32
    %8 = vector.broadcast %c2_i32_1 : i32 to vector<16x8xi32>
    %9 = arith.muli %8, %2 : vector<16x8xi32>
    %c1_i32 = arith.constant 1 : i32
    %10 = vector.broadcast %c1_i32 : i32 to vector<16x8xi32>
    %11 = arith.addi %9, %10 : vector<16x8xi32>
    %12 = arith.cmpi eq, %1, %11 : vector<16x8xi32>
    %13 = arith.extui %12 : vector<16x8xi1> to vector<16x8xi32>
    %14 = arith.sitofp %13 : vector<16x8xi32> to vector<16x8xf32>
    %cst = arith.constant 0.000000e+00 : f32
    %15 = vector.broadcast %cst : f32 to vector<8x1xf32>
    %cst_2 = arith.constant 0.000000e+00 : f32
    %16 = vector.broadcast %cst_2 : f32 to vector<8x1xf32>
    %c0_3 = arith.constant 0 : index
    %c0_4 = arith.constant 0 : index
    %c0_5 = arith.constant 0 : index
    %c0_6 = arith.constant 0 : index
    %17 = vector.load %arg2[%c0_3, %c0_4, %c0_5, %c0_6] : memref<1x4x16x16xf32, #tpu.memory_space<vmem>>, vector<1x4x1x16xf32>
    %18 = vector.shape_cast %17 : vector<1x4x1x16xf32> to vector<4x16xf32>
    %cst_7 = arith.constant 0.000000e+00 : f32
    %19 = vector.broadcast %cst_7 : f32 to vector<4x16xf32>
    %20 = arith.maximumf %18, %19 : vector<4x16xf32>
    %c0_8 = arith.constant 0 : index
    %c0_9 = arith.constant 0 : index
    %c1 = arith.constant 1 : index
    %c0_10 = arith.constant 0 : index
    %21 = vector.load %arg2[%c0_8, %c0_9, %c1, %c0_10] : memref<1x4x16x16xf32, #tpu.memory_space<vmem>>, vector<1x4x1x16xf32>
    %22 = vector.shape_cast %21 : vector<1x4x1x16xf32> to vector<4x16xf32>
    %cst_11 = arith.constant 0.000000e+00 : f32
    %23 = vector.broadcast %cst_11 : f32 to vector<4x16xf32>
    %24 = arith.maximumf %22, %23 : vector<4x16xf32>
    %cst_12 = arith.constant dense<0.000000e+00> : vector<4x8xf32>
    %25 = tpu.matmul %20, %7, %cst_12 {dimension_numbers = #tpu.dot_dimension_numbers<[1], [0], [0], [1], [0, 0, 1, 1], [], []>} : vector<4x16xf32>, vector<16x8xf32>, vector<4x8xf32> -> vector<4x8xf32>
    %cst_13 = arith.constant dense<0.000000e+00> : vector<4x8xf32>
    %26 = tpu.matmul %24, %14, %cst_13 {dimension_numbers = #tpu.dot_dimension_numbers<[1], [0], [0], [1], [0, 0, 1, 1], [], []>} : vector<4x16xf32>, vector<16x8xf32>, vector<4x8xf32> -> vector<4x8xf32>
    %27 = tpu.concatenate %25, %26 in 0 : vector<4x8xf32>, vector<4x8xf32> -> vector<8x8xf32>
    %cst_14 = arith.constant dense<0.000000e+00> : vector<8x8xf32>
    %28 = tpu.matmul %0, %27, %cst_14 {dimension_numbers = #tpu.dot_dimension_numbers<[1], [0], [0], [1], [0, 0, 1, 1], [], []>} : vector<8x8xf32>, vector<8x8xf32>, vector<8x8xf32> -> vector<8x8xf32>
    %c8_i32 = arith.constant 8 : i32
    %29 = arith.muli %arg1, %c8_i32 : i32
    %c0_i32 = arith.constant 0 : i32
    %30 = arith.addi %29, %c0_i32 : i32
    %c8_i32_15 = arith.constant 8 : i32
    %31 = arith.cmpi slt, %30, %c8_i32_15 : i32
    %cst_16 = arith.constant dense<0.000000e+00> : vector<8xf32>
    %32 = vector.multi_reduction <add>, %28, %cst_16 [1] : vector<8x8xf32> to vector<8xf32>
    %33 = vector.shape_cast %32 : vector<8xf32> to vector<8x1xf32>
    %cst_17 = arith.constant 0.000000e+00 : f32
    %34 = vector.broadcast %cst_17 : f32 to vector<8x1xf32>
    %35 = arith.select %31, %33, %34 : vector<8x1xf32>
    %36 = arith.addf %15, %35 : vector<8x1xf32>
    %37 = arith.mulf %28, %28 : vector<8x8xf32>
    %cst_18 = arith.constant dense<0.000000e+00> : vector<8xf32>
    %38 = vector.multi_reduction <add>, %37, %cst_18 [1] : vector<8x8xf32> to vector<8xf32>
    %39 = vector.shape_cast %38 : vector<8xf32> to vector<8x1xf32>
    %cst_19 = arith.constant 0.000000e+00 : f32
    %40 = vector.broadcast %cst_19 : f32 to vector<8x1xf32>
    %41 = arith.select %31, %39, %40 : vector<8x1xf32>
    %42 = arith.addf %16, %41 : vector<8x1xf32>
    %c0_20 = arith.constant 0 : index
    %c0_21 = arith.constant 0 : index
    %c2 = arith.constant 2 : index
    %c0_22 = arith.constant 0 : index
    %43 = vector.load %arg2[%c0_20, %c0_21, %c2, %c0_22] : memref<1x4x16x16xf32, #tpu.memory_space<vmem>>, vector<1x4x1x16xf32>
    %44 = vector.shape_cast %43 : vector<1x4x1x16xf32> to vector<4x16xf32>
    %cst_23 = arith.constant 0.000000e+00 : f32
    %45 = vector.broadcast %cst_23 : f32 to vector<4x16xf32>
    %46 = arith.maximumf %44, %45 : vector<4x16xf32>
    %c0_24 = arith.constant 0 : index
    %c0_25 = arith.constant 0 : index
    %c3 = arith.constant 3 : index
    %c0_26 = arith.constant 0 : index
    %47 = vector.load %arg2[%c0_24, %c0_25, %c3, %c0_26] : memref<1x4x16x16xf32, #tpu.memory_space<vmem>>, vector<1x4x1x16xf32>
    %48 = vector.shape_cast %47 : vector<1x4x1x16xf32> to vector<4x16xf32>
    %cst_27 = arith.constant 0.000000e+00 : f32
    %49 = vector.broadcast %cst_27 : f32 to vector<4x16xf32>
    %50 = arith.maximumf %48, %49 : vector<4x16xf32>
    %cst_28 = arith.constant dense<0.000000e+00> : vector<4x8xf32>
    %51 = tpu.matmul %46, %7, %cst_28 {dimension_numbers = #tpu.dot_dimension_numbers<[1], [0], [0], [1], [0, 0, 1, 1], [], []>} : vector<4x16xf32>, vector<16x8xf32>, vector<4x8xf32> -> vector<4x8xf32>
    %cst_29 = arith.constant dense<0.000000e+00> : vector<4x8xf32>
    %52 = tpu.matmul %50, %14, %cst_29 {dimension_numbers = #tpu.dot_dimension_numbers<[1], [0], [0], [1], [0, 0, 1, 1], [], []>} : vector<4x16xf32>, vector<16x8xf32>, vector<4x8xf32> -> vector<4x8xf32>
    %53 = tpu.concatenate %51, %52 in 0 : vector<4x8xf32>, vector<4x8xf32> -> vector<8x8xf32>
    %cst_30 = arith.constant dense<0.000000e+00> : vector<8x8xf32>
    %54 = tpu.matmul %0, %53, %cst_30 {dimension_numbers = #tpu.dot_dimension_numbers<[1], [0], [0], [1], [0, 0, 1, 1], [], []>} : vector<8x8xf32>, vector<8x8xf32>, vector<8x8xf32> -> vector<8x8xf32>
    %c8_i32_31 = arith.constant 8 : i32
    %55 = arith.muli %arg1, %c8_i32_31 : i32
    %c1_i32_32 = arith.constant 1 : i32
    %56 = arith.addi %55, %c1_i32_32 : i32
    %c8_i32_33 = arith.constant 8 : i32
    %57 = arith.cmpi slt, %56, %c8_i32_33 : i32
    %cst_34 = arith.constant dense<0.000000e+00> : vector<8xf32>
    %58 = vector.multi_reduction <add>, %54, %cst_34 [1] : vector<8x8xf32> to vector<8xf32>
    %59 = vector.shape_cast %58 : vector<8xf32> to vector<8x1xf32>
    %cst_35 = arith.constant 0.000000e+00 : f32
    %60 = vector.broadcast %cst_35 : f32 to vector<8x1xf32>
    %61 = arith.select %57, %59, %60 : vector<8x1xf32>
    %62 = arith.addf %36, %61 : vector<8x1xf32>
    %63 = arith.mulf %54, %54 : vector<8x8xf32>
    %cst_36 = arith.constant dense<0.000000e+00> : vector<8xf32>
    %64 = vector.multi_reduction <add>, %63, %cst_36 [1] : vector<8x8xf32> to vector<8xf32>
    %65 = vector.shape_cast %64 : vector<8xf32> to vector<8x1xf32>
    %cst_37 = arith.constant 0.000000e+00 : f32
    %66 = vector.broadcast %cst_37 : f32 to vector<8x1xf32>
    %67 = arith.select %57, %65, %66 : vector<8x1xf32>
    %68 = arith.addf %42, %67 : vector<8x1xf32>
    %c0_38 = arith.constant 0 : index
    %c0_39 = arith.constant 0 : index
    %c4 = arith.constant 4 : index
    %c0_40 = arith.constant 0 : index
    %69 = vector.load %arg2[%c0_38, %c0_39, %c4, %c0_40] : memref<1x4x16x16xf32, #tpu.memory_space<vmem>>, vector<1x4x1x16xf32>
    %70 = vector.shape_cast %69 : vector<1x4x1x16xf32> to vector<4x16xf32>
    %cst_41 = arith.constant 0.000000e+00 : f32
    %71 = vector.broadcast %cst_41 : f32 to vector<4x16xf32>
    %72 = arith.maximumf %70, %71 : vector<4x16xf32>
    %c0_42 = arith.constant 0 : index
    %c0_43 = arith.constant 0 : index
    %c5 = arith.constant 5 : index
    %c0_44 = arith.constant 0 : index
    %73 = vector.load %arg2[%c0_42, %c0_43, %c5, %c0_44] : memref<1x4x16x16xf32, #tpu.memory_space<vmem>>, vector<1x4x1x16xf32>
    %74 = vector.shape_cast %73 : vector<1x4x1x16xf32> to vector<4x16xf32>
    %cst_45 = arith.constant 0.000000e+00 : f32
    %75 = vector.broadcast %cst_45 : f32 to vector<4x16xf32>
    %76 = arith.maximumf %74, %75 : vector<4x16xf32>
    %cst_46 = arith.constant dense<0.000000e+00> : vector<4x8xf32>
    %77 = tpu.matmul %72, %7, %cst_46 {dimension_numbers = #tpu.dot_dimension_numbers<[1], [0], [0], [1], [0, 0, 1, 1], [], []>} : vector<4x16xf32>, vector<16x8xf32>, vector<4x8xf32> -> vector<4x8xf32>
    %cst_47 = arith.constant dense<0.000000e+00> : vector<4x8xf32>
    %78 = tpu.matmul %76, %14, %cst_47 {dimension_numbers = #tpu.dot_dimension_numbers<[1], [0], [0], [1], [0, 0, 1, 1], [], []>} : vector<4x16xf32>, vector<16x8xf32>, vector<4x8xf32> -> vector<4x8xf32>
    %79 = tpu.concatenate %77, %78 in 0 : vector<4x8xf32>, vector<4x8xf32> -> vector<8x8xf32>
    %cst_48 = arith.constant dense<0.000000e+00> : vector<8x8xf32>
    %80 = tpu.matmul %0, %79, %cst_48 {dimension_numbers = #tpu.dot_dimension_numbers<[1], [0], [0], [1], [0, 0, 1, 1], [], []>} : vector<8x8xf32>, vector<8x8xf32>, vector<8x8xf32> -> vector<8x8xf32>
    %c8_i32_49 = arith.constant 8 : i32
    %81 = arith.muli %arg1, %c8_i32_49 : i32
    %c2_i32_50 = arith.constant 2 : i32
    %82 = arith.addi %81, %c2_i32_50 : i32
    %c8_i32_51 = arith.constant 8 : i32
    %83 = arith.cmpi slt, %82, %c8_i32_51 : i32
    %cst_52 = arith.constant dense<0.000000e+00> : vector<8xf32>
    %84 = vector.multi_reduction <add>, %80, %cst_52 [1] : vector<8x8xf32> to vector<8xf32>
    %85 = vector.shape_cast %84 : vector<8xf32> to vector<8x1xf32>
    %cst_53 = arith.constant 0.000000e+00 : f32
    %86 = vector.broadcast %cst_53 : f32 to vector<8x1xf32>
    %87 = arith.select %83, %85, %86 : vector<8x1xf32>
    %88 = arith.addf %62, %87 : vector<8x1xf32>
    %89 = arith.mulf %80, %80 : vector<8x8xf32>
    %cst_54 = arith.constant dense<0.000000e+00> : vector<8xf32>
    %90 = vector.multi_reduction <add>, %89, %cst_54 [1] : vector<8x8xf32> to vector<8xf32>
    %91 = vector.shape_cast %90 : vector<8xf32> to vector<8x1xf32>
    %cst_55 = arith.constant 0.000000e+00 : f32
    %92 = vector.broadcast %cst_55 : f32 to vector<8x1xf32>
    %93 = arith.select %83, %91, %92 : vector<8x1xf32>
    %94 = arith.addf %68, %93 : vector<8x1xf32>
    %c0_56 = arith.constant 0 : index
    %c0_57 = arith.constant 0 : index
    %c6 = arith.constant 6 : index
    %c0_58 = arith.constant 0 : index
    %95 = vector.load %arg2[%c0_56, %c0_57, %c6, %c0_58] : memref<1x4x16x16xf32, #tpu.memory_space<vmem>>, vector<1x4x1x16xf32>
    %96 = vector.shape_cast %95 : vector<1x4x1x16xf32> to vector<4x16xf32>
    %cst_59 = arith.constant 0.000000e+00 : f32
    %97 = vector.broadcast %cst_59 : f32 to vector<4x16xf32>
    %98 = arith.maximumf %96, %97 : vector<4x16xf32>
    %c0_60 = arith.constant 0 : index
    %c0_61 = arith.constant 0 : index
    %c7 = arith.constant 7 : index
    %c0_62 = arith.constant 0 : index
    %99 = vector.load %arg2[%c0_60, %c0_61, %c7, %c0_62] : memref<1x4x16x16xf32, #tpu.memory_space<vmem>>, vector<1x4x1x16xf32>
    %100 = vector.shape_cast %99 : vector<1x4x1x16xf32> to vector<4x16xf32>
    %cst_63 = arith.constant 0.000000e+00 : f32
    %101 = vector.broadcast %cst_63 : f32 to vector<4x16xf32>
    %102 = arith.maximumf %100, %101 : vector<4x16xf32>
    %cst_64 = arith.constant dense<0.000000e+00> : vector<4x8xf32>
    %103 = tpu.matmul %98, %7, %cst_64 {dimension_numbers = #tpu.dot_dimension_numbers<[1], [0], [0], [1], [0, 0, 1, 1], [], []>} : vector<4x16xf32>, vector<16x8xf32>, vector<4x8xf32> -> vector<4x8xf32>
    %cst_65 = arith.constant dense<0.000000e+00> : vector<4x8xf32>
    %104 = tpu.matmul %102, %14, %cst_65 {dimension_numbers = #tpu.dot_dimension_numbers<[1], [0], [0], [1], [0, 0, 1, 1], [], []>} : vector<4x16xf32>, vector<16x8xf32>, vector<4x8xf32> -> vector<4x8xf32>
    %105 = tpu.concatenate %103, %104 in 0 : vector<4x8xf32>, vector<4x8xf32> -> vector<8x8xf32>
    %cst_66 = arith.constant dense<0.000000e+00> : vector<8x8xf32>
    %106 = tpu.matmul %0, %105, %cst_66 {dimension_numbers = #tpu.dot_dimension_numbers<[1], [0], [0], [1], [0, 0, 1, 1], [], []>} : vector<8x8xf32>, vector<8x8xf32>, vector<8x8xf32> -> vector<8x8xf32>
    %c8_i32_67 = arith.constant 8 : i32
    %107 = arith.muli %arg1, %c8_i32_67 : i32
    %c3_i32 = arith.constant 3 : i32
    %108 = arith.addi %107, %c3_i32 : i32
    %c8_i32_68 = arith.constant 8 : i32
    %109 = arith.cmpi slt, %108, %c8_i32_68 : i32
    %cst_69 = arith.constant dense<0.000000e+00> : vector<8xf32>
    %110 = vector.multi_reduction <add>, %106, %cst_69 [1] : vector<8x8xf32> to vector<8xf32>
    %111 = vector.shape_cast %110 : vector<8xf32> to vector<8x1xf32>
    %cst_70 = arith.constant 0.000000e+00 : f32
    %112 = vector.broadcast %cst_70 : f32 to vector<8x1xf32>
    %113 = arith.select %109, %111, %112 : vector<8x1xf32>
    %114 = arith.addf %88, %113 : vector<8x1xf32>
    %115 = arith.mulf %106, %106 : vector<8x8xf32>
    %cst_71 = arith.constant dense<0.000000e+00> : vector<8xf32>
    %116 = vector.multi_reduction <add>, %115, %cst_71 [1] : vector<8x8xf32> to vector<8xf32>
    %117 = vector.shape_cast %116 : vector<8xf32> to vector<8x1xf32>
    %cst_72 = arith.constant 0.000000e+00 : f32
    %118 = vector.broadcast %cst_72 : f32 to vector<8x1xf32>
    %119 = arith.select %109, %117, %118 : vector<8x1xf32>
    %120 = arith.addf %94, %119 : vector<8x1xf32>
    %c0_73 = arith.constant 0 : index
    %c0_74 = arith.constant 0 : index
    %c8 = arith.constant 8 : index
    %c0_75 = arith.constant 0 : index
    %121 = vector.load %arg2[%c0_73, %c0_74, %c8, %c0_75] : memref<1x4x16x16xf32, #tpu.memory_space<vmem>>, vector<1x4x1x16xf32>
    %122 = vector.shape_cast %121 : vector<1x4x1x16xf32> to vector<4x16xf32>
    %cst_76 = arith.constant 0.000000e+00 : f32
    %123 = vector.broadcast %cst_76 : f32 to vector<4x16xf32>
    %124 = arith.maximumf %122, %123 : vector<4x16xf32>
    %c0_77 = arith.constant 0 : index
    %c0_78 = arith.constant 0 : index
    %c9 = arith.constant 9 : index
    %c0_79 = arith.constant 0 : index
    %125 = vector.load %arg2[%c0_77, %c0_78, %c9, %c0_79] : memref<1x4x16x16xf32, #tpu.memory_space<vmem>>, vector<1x4x1x16xf32>
    %126 = vector.shape_cast %125 : vector<1x4x1x16xf32> to vector<4x16xf32>
    %cst_80 = arith.constant 0.000000e+00 : f32
    %127 = vector.broadcast %cst_80 : f32 to vector<4x16xf32>
    %128 = arith.maximumf %126, %127 : vector<4x16xf32>
    %cst_81 = arith.constant dense<0.000000e+00> : vector<4x8xf32>
    %129 = tpu.matmul %124, %7, %cst_81 {dimension_numbers = #tpu.dot_dimension_numbers<[1], [0], [0], [1], [0, 0, 1, 1], [], []>} : vector<4x16xf32>, vector<16x8xf32>, vector<4x8xf32> -> vector<4x8xf32>
    %cst_82 = arith.constant dense<0.000000e+00> : vector<4x8xf32>
    %130 = tpu.matmul %128, %14, %cst_82 {dimension_numbers = #tpu.dot_dimension_numbers<[1], [0], [0], [1], [0, 0, 1, 1], [], []>} : vector<4x16xf32>, vector<16x8xf32>, vector<4x8xf32> -> vector<4x8xf32>
    %131 = tpu.concatenate %129, %130 in 0 : vector<4x8xf32>, vector<4x8xf32> -> vector<8x8xf32>
    %cst_83 = arith.constant dense<0.000000e+00> : vector<8x8xf32>
    %132 = tpu.matmul %0, %131, %cst_83 {dimension_numbers = #tpu.dot_dimension_numbers<[1], [0], [0], [1], [0, 0, 1, 1], [], []>} : vector<8x8xf32>, vector<8x8xf32>, vector<8x8xf32> -> vector<8x8xf32>
    %c8_i32_84 = arith.constant 8 : i32
    %133 = arith.muli %arg1, %c8_i32_84 : i32
    %c4_i32 = arith.constant 4 : i32
    %134 = arith.addi %133, %c4_i32 : i32
    %c8_i32_85 = arith.constant 8 : i32
    %135 = arith.cmpi slt, %134, %c8_i32_85 : i32
    %cst_86 = arith.constant dense<0.000000e+00> : vector<8xf32>
    %136 = vector.multi_reduction <add>, %132, %cst_86 [1] : vector<8x8xf32> to vector<8xf32>
    %137 = vector.shape_cast %136 : vector<8xf32> to vector<8x1xf32>
    %cst_87 = arith.constant 0.000000e+00 : f32
    %138 = vector.broadcast %cst_87 : f32 to vector<8x1xf32>
    %139 = arith.select %135, %137, %138 : vector<8x1xf32>
    %140 = arith.addf %114, %139 : vector<8x1xf32>
    %141 = arith.mulf %132, %132 : vector<8x8xf32>
    %cst_88 = arith.constant dense<0.000000e+00> : vector<8xf32>
    %142 = vector.multi_reduction <add>, %141, %cst_88 [1] : vector<8x8xf32> to vector<8xf32>
    %143 = vector.shape_cast %142 : vector<8xf32> to vector<8x1xf32>
    %cst_89 = arith.constant 0.000000e+00 : f32
    %144 = vector.broadcast %cst_89 : f32 to vector<8x1xf32>
    %145 = arith.select %135, %143, %144 : vector<8x1xf32>
    %146 = arith.addf %120, %145 : vector<8x1xf32>
    %c0_90 = arith.constant 0 : index
    %c0_91 = arith.constant 0 : index
    %c10 = arith.constant 10 : index
    %c0_92 = arith.constant 0 : index
    %147 = vector.load %arg2[%c0_90, %c0_91, %c10, %c0_92] : memref<1x4x16x16xf32, #tpu.memory_space<vmem>>, vector<1x4x1x16xf32>
    %148 = vector.shape_cast %147 : vector<1x4x1x16xf32> to vector<4x16xf32>
    %cst_93 = arith.constant 0.000000e+00 : f32
    %149 = vector.broadcast %cst_93 : f32 to vector<4x16xf32>
    %150 = arith.maximumf %148, %149 : vector<4x16xf32>
    %c0_94 = arith.constant 0 : index
    %c0_95 = arith.constant 0 : index
    %c11 = arith.constant 11 : index
    %c0_96 = arith.constant 0 : index
    %151 = vector.load %arg2[%c0_94, %c0_95, %c11, %c0_96] : memref<1x4x16x16xf32, #tpu.memory_space<vmem>>, vector<1x4x1x16xf32>
    %152 = vector.shape_cast %151 : vector<1x4x1x16xf32> to vector<4x16xf32>
    %cst_97 = arith.constant 0.000000e+00 : f32
    %153 = vector.broadcast %cst_97 : f32 to vector<4x16xf32>
    %154 = arith.maximumf %152, %153 : vector<4x16xf32>
    %cst_98 = arith.constant dense<0.000000e+00> : vector<4x8xf32>
    %155 = tpu.matmul %150, %7, %cst_98 {dimension_numbers = #tpu.dot_dimension_numbers<[1], [0], [0], [1], [0, 0, 1, 1], [], []>} : vector<4x16xf32>, vector<16x8xf32>, vector<4x8xf32> -> vector<4x8xf32>
    %cst_99 = arith.constant dense<0.000000e+00> : vector<4x8xf32>
    %156 = tpu.matmul %154, %14, %cst_99 {dimension_numbers = #tpu.dot_dimension_numbers<[1], [0], [0], [1], [0, 0, 1, 1], [], []>} : vector<4x16xf32>, vector<16x8xf32>, vector<4x8xf32> -> vector<4x8xf32>
    %157 = tpu.concatenate %155, %156 in 0 : vector<4x8xf32>, vector<4x8xf32> -> vector<8x8xf32>
    %cst_100 = arith.constant dense<0.000000e+00> : vector<8x8xf32>
    %158 = tpu.matmul %0, %157, %cst_100 {dimension_numbers = #tpu.dot_dimension_numbers<[1], [0], [0], [1], [0, 0, 1, 1], [], []>} : vector<8x8xf32>, vector<8x8xf32>, vector<8x8xf32> -> vector<8x8xf32>
    %c8_i32_101 = arith.constant 8 : i32
    %159 = arith.muli %arg1, %c8_i32_101 : i32
    %c5_i32 = arith.constant 5 : i32
    %160 = arith.addi %159, %c5_i32 : i32
    %c8_i32_102 = arith.constant 8 : i32
    %161 = arith.cmpi slt, %160, %c8_i32_102 : i32
    %cst_103 = arith.constant dense<0.000000e+00> : vector<8xf32>
    %162 = vector.multi_reduction <add>, %158, %cst_103 [1] : vector<8x8xf32> to vector<8xf32>
    %163 = vector.shape_cast %162 : vector<8xf32> to vector<8x1xf32>
    %cst_104 = arith.constant 0.000000e+00 : f32
    %164 = vector.broadcast %cst_104 : f32 to vector<8x1xf32>
    %165 = arith.select %161, %163, %164 : vector<8x1xf32>
    %166 = arith.addf %140, %165 : vector<8x1xf32>
    %167 = arith.mulf %158, %158 : vector<8x8xf32>
    %cst_105 = arith.constant dense<0.000000e+00> : vector<8xf32>
    %168 = vector.multi_reduction <add>, %167, %cst_105 [1] : vector<8x8xf32> to vector<8xf32>
    %169 = vector.shape_cast %168 : vector<8xf32> to vector<8x1xf32>
    %cst_106 = arith.constant 0.000000e+00 : f32
    %170 = vector.broadcast %cst_106 : f32 to vector<8x1xf32>
    %171 = arith.select %161, %169, %170 : vector<8x1xf32>
    %172 = arith.addf %146, %171 : vector<8x1xf32>
    %c0_107 = arith.constant 0 : index
    %c0_108 = arith.constant 0 : index
    %c12 = arith.constant 12 : index
    %c0_109 = arith.constant 0 : index
    %173 = vector.load %arg2[%c0_107, %c0_108, %c12, %c0_109] : memref<1x4x16x16xf32, #tpu.memory_space<vmem>>, vector<1x4x1x16xf32>
    %174 = vector.shape_cast %173 : vector<1x4x1x16xf32> to vector<4x16xf32>
    %cst_110 = arith.constant 0.000000e+00 : f32
    %175 = vector.broadcast %cst_110 : f32 to vector<4x16xf32>
    %176 = arith.maximumf %174, %175 : vector<4x16xf32>
    %c0_111 = arith.constant 0 : index
    %c0_112 = arith.constant 0 : index
    %c13 = arith.constant 13 : index
    %c0_113 = arith.constant 0 : index
    %177 = vector.load %arg2[%c0_111, %c0_112, %c13, %c0_113] : memref<1x4x16x16xf32, #tpu.memory_space<vmem>>, vector<1x4x1x16xf32>
    %178 = vector.shape_cast %177 : vector<1x4x1x16xf32> to vector<4x16xf32>
    %cst_114 = arith.constant 0.000000e+00 : f32
    %179 = vector.broadcast %cst_114 : f32 to vector<4x16xf32>
    %180 = arith.maximumf %178, %179 : vector<4x16xf32>
    %cst_115 = arith.constant dense<0.000000e+00> : vector<4x8xf32>
    %181 = tpu.matmul %176, %7, %cst_115 {dimension_numbers = #tpu.dot_dimension_numbers<[1], [0], [0], [1], [0, 0, 1, 1], [], []>} : vector<4x16xf32>, vector<16x8xf32>, vector<4x8xf32> -> vector<4x8xf32>
    %cst_116 = arith.constant dense<0.000000e+00> : vector<4x8xf32>
    %182 = tpu.matmul %180, %14, %cst_116 {dimension_numbers = #tpu.dot_dimension_numbers<[1], [0], [0], [1], [0, 0, 1, 1], [], []>} : vector<4x16xf32>, vector<16x8xf32>, vector<4x8xf32> -> vector<4x8xf32>
    %183 = tpu.concatenate %181, %182 in 0 : vector<4x8xf32>, vector<4x8xf32> -> vector<8x8xf32>
    %cst_117 = arith.constant dense<0.000000e+00> : vector<8x8xf32>
    %184 = tpu.matmul %0, %183, %cst_117 {dimension_numbers = #tpu.dot_dimension_numbers<[1], [0], [0], [1], [0, 0, 1, 1], [], []>} : vector<8x8xf32>, vector<8x8xf32>, vector<8x8xf32> -> vector<8x8xf32>
    %c8_i32_118 = arith.constant 8 : i32
    %185 = arith.muli %arg1, %c8_i32_118 : i32
    %c6_i32 = arith.constant 6 : i32
    %186 = arith.addi %185, %c6_i32 : i32
    %c8_i32_119 = arith.constant 8 : i32
    %187 = arith.cmpi slt, %186, %c8_i32_119 : i32
    %cst_120 = arith.constant dense<0.000000e+00> : vector<8xf32>
    %188 = vector.multi_reduction <add>, %184, %cst_120 [1] : vector<8x8xf32> to vector<8xf32>
    %189 = vector.shape_cast %188 : vector<8xf32> to vector<8x1xf32>
    %cst_121 = arith.constant 0.000000e+00 : f32
    %190 = vector.broadcast %cst_121 : f32 to vector<8x1xf32>
    %191 = arith.select %187, %189, %190 : vector<8x1xf32>
    %192 = arith.addf %166, %191 : vector<8x1xf32>
    %193 = arith.mulf %184, %184 : vector<8x8xf32>
    %cst_122 = arith.constant dense<0.000000e+00> : vector<8xf32>
    %194 = vector.multi_reduction <add>, %193, %cst_122 [1] : vector<8x8xf32> to vector<8xf32>
    %195 = vector.shape_cast %194 : vector<8xf32> to vector<8x1xf32>
    %cst_123 = arith.constant 0.000000e+00 : f32
    %196 = vector.broadcast %cst_123 : f32 to vector<8x1xf32>
    %197 = arith.select %187, %195, %196 : vector<8x1xf32>
    %198 = arith.addf %172, %197 : vector<8x1xf32>
    %c0_124 = arith.constant 0 : index
    %c0_125 = arith.constant 0 : index
    %c14 = arith.constant 14 : index
    %c0_126 = arith.constant 0 : index
    %199 = vector.load %arg2[%c0_124, %c0_125, %c14, %c0_126] : memref<1x4x16x16xf32, #tpu.memory_space<vmem>>, vector<1x4x1x16xf32>
    %200 = vector.shape_cast %199 : vector<1x4x1x16xf32> to vector<4x16xf32>
    %cst_127 = arith.constant 0.000000e+00 : f32
    %201 = vector.broadcast %cst_127 : f32 to vector<4x16xf32>
    %202 = arith.maximumf %200, %201 : vector<4x16xf32>
    %c0_128 = arith.constant 0 : index
    %c0_129 = arith.constant 0 : index
    %c15 = arith.constant 15 : index
    %c0_130 = arith.constant 0 : index
    %203 = vector.load %arg2[%c0_128, %c0_129, %c15, %c0_130] : memref<1x4x16x16xf32, #tpu.memory_space<vmem>>, vector<1x4x1x16xf32>
    %204 = vector.shape_cast %203 : vector<1x4x1x16xf32> to vector<4x16xf32>
    %cst_131 = arith.constant 0.000000e+00 : f32
    %205 = vector.broadcast %cst_131 : f32 to vector<4x16xf32>
    %206 = arith.maximumf %204, %205 : vector<4x16xf32>
    %cst_132 = arith.constant dense<0.000000e+00> : vector<4x8xf32>
    %207 = tpu.matmul %202, %7, %cst_132 {dimension_numbers = #tpu.dot_dimension_numbers<[1], [0], [0], [1], [0, 0, 1, 1], [], []>} : vector<4x16xf32>, vector<16x8xf32>, vector<4x8xf32> -> vector<4x8xf32>
    %cst_133 = arith.constant dense<0.000000e+00> : vector<4x8xf32>
    %208 = tpu.matmul %206, %14, %cst_133 {dimension_numbers = #tpu.dot_dimension_numbers<[1], [0], [0], [1], [0, 0, 1, 1], [], []>} : vector<4x16xf32>, vector<16x8xf32>, vector<4x8xf32> -> vector<4x8xf32>
    %209 = tpu.concatenate %207, %208 in 0 : vector<4x8xf32>, vector<4x8xf32> -> vector<8x8xf32>
    %cst_134 = arith.constant dense<0.000000e+00> : vector<8x8xf32>
    %210 = tpu.matmul %0, %209, %cst_134 {dimension_numbers = #tpu.dot_dimension_numbers<[1], [0], [0], [1], [0, 0, 1, 1], [], []>} : vector<8x8xf32>, vector<8x8xf32>, vector<8x8xf32> -> vector<8x8xf32>
    %c8_i32_135 = arith.constant 8 : i32
    %211 = arith.muli %arg1, %c8_i32_135 : i32
    %c7_i32 = arith.constant 7 : i32
    %212 = arith.addi %211, %c7_i32 : i32
    %c8_i32_136 = arith.constant 8 : i32
    %213 = arith.cmpi slt, %212, %c8_i32_136 : i32
    %cst_137 = arith.constant dense<0.000000e+00> : vector<8xf32>
    %214 = vector.multi_reduction <add>, %210, %cst_137 [1] : vector<8x8xf32> to vector<8xf32>
    %215 = vector.shape_cast %214 : vector<8xf32> to vector<8x1xf32>
    %cst_138 = arith.constant 0.000000e+00 : f32
    %216 = vector.broadcast %cst_138 : f32 to vector<8x1xf32>
    %217 = arith.select %213, %215, %216 : vector<8x1xf32>
    %218 = arith.addf %192, %217 : vector<8x1xf32>
    %219 = arith.mulf %210, %210 : vector<8x8xf32>
    %cst_139 = arith.constant dense<0.000000e+00> : vector<8xf32>
    %220 = vector.multi_reduction <add>, %219, %cst_139 [1] : vector<8x8xf32> to vector<8xf32>
    %221 = vector.shape_cast %220 : vector<8xf32> to vector<8x1xf32>
    %cst_140 = arith.constant 0.000000e+00 : f32
    %222 = vector.broadcast %cst_140 : f32 to vector<8x1xf32>
    %223 = arith.select %213, %221, %222 : vector<8x1xf32>
    %224 = arith.addf %198, %223 : vector<8x1xf32>
    %c0_141 = arith.constant 0 : index
    %c0_142 = arith.constant 0 : index
    %c0_143 = arith.constant 0 : index
    %c0_144 = arith.constant 0 : index
    %225 = vector.load %arg4[%c0_141, %c0_142, %c0_143, %c0_144] : memref<1x1x8x1xf32, #tpu.memory_space<vmem>>, vector<1x1x8x1xf32>
    %226 = vector.shape_cast %225 : vector<1x1x8x1xf32> to vector<8x1xf32>
    %227 = vector.shape_cast %218 : vector<8x1xf32> to vector<1x1x8x1xf32>
    tpu.vector_store %arg4[%c0_141, %c0_142, %c0_143, %c0_144], %227 {strides = array<i32>} : memref<1x1x8x1xf32, #tpu.memory_space<vmem>>, vector<1x1x8x1xf32>,
    %c0_145 = arith.constant 0 : index
    %c0_146 = arith.constant 0 : index
    %c0_147 = arith.constant 0 : index
    %c0_148 = arith.constant 0 : index
    %228 = vector.load %arg5[%c0_145, %c0_146, %c0_147, %c0_148] : memref<1x1x8x1xf32, #tpu.memory_space<vmem>>, vector<1x1x8x1xf32>
    %229 = vector.shape_cast %228 : vector<1x1x8x1xf32> to vector<8x1xf32>
    %230 = vector.shape_cast %224 : vector<8x1xf32> to vector<1x1x8x1xf32>
    tpu.vector_store %arg5[%c0_145, %c0_146, %c0_147, %c0_148], %230 {strides = array<i32>} : memref<1x1x8x1xf32, #tpu.memory_space<vmem>>, vector<1x1x8x1xf32>,
    return
  }
  func.func @transform_0(%arg0: i32, %arg1: i32) -> (i32, i32, i32, i32) {
    %c0_i32 = arith.constant 0 : i32
    %c0_i32_0 = arith.constant 0 : i32
    %c0_i32_1 = arith.constant 0 : i32
    return %arg0, %c0_i32, %arg1, %c0_i32_0 : i32, i32, i32, i32
  }
  func.func @transform_1(%arg0: i32, %arg1: i32) -> (i32, i32) {
    %c0_i32 = arith.constant 0 : i32
    %c0_i32_0 = arith.constant 0 : i32
    %c0_i32_1 = arith.constant 0 : i32
    return %c0_i32, %c0_i32_0 : i32, i32
  }
  func.func @transform_2(%arg0: i32, %arg1: i32) -> (i32, i32, i32, i32) {
    %c0_i32 = arith.constant 0 : i32
    %c0_i32_0 = arith.constant 0 : i32
    %c0_i32_1 = arith.constant 0 : i32
    return %arg0, %arg1, %c0_i32, %c0_i32_0 : i32, i32, i32, i32
  }
  func.func @transform_3(%arg0: i32, %arg1: i32) -> (i32, i32, i32, i32) {
    %c0_i32 = arith.constant 0 : i32
    %c0_i32_0 = arith.constant 0 : i32
    %c0_i32_1 = arith.constant 0 : i32
    return %arg0, %arg1, %c0_i32, %c0_i32_0 : i32, i32, i32, i32
  }
}

module attributes {stable_mosaic.version = 11 : i64} {
  func.func @kernel(%arg0: i32, %arg1: i32, %arg2: memref<1x4x16x16xf32, #tpu.memory_space<vmem>>, %arg3: memref<8x8xf32, #tpu.memory_space<vmem>>, %arg4: memref<8x1xf32, #tpu.memory_space<vmem>>, %arg5: memref<8x1xf32, #tpu.memory_space<vmem>>, %arg6: memref<1x8x8x8xf32, #tpu.memory_space<vmem>>) attributes {dimension_semantics = [#tpu.dimension_semantics<parallel>, #tpu.dimension_semantics<parallel>], iteration_bounds = array<i64: 2, 1>, scalar_prefetch = 0 : i64, scratch_operands = 0 : i64, tpu.core_type = #tpu.core_type<tc>, window_params = [{transform_indices = @transform_0, window_bounds = array<i64: 1, 4, 16, 16>}, {pipeline_mode = #tpu.pipeline_mode<synchronous>, transform_indices = @transform_1, window_bounds = array<i64: 8, 8>}, {pipeline_mode = #tpu.pipeline_mode<synchronous>, transform_indices = @transform_2, window_bounds = array<i64: 8, 1>}, {pipeline_mode = #tpu.pipeline_mode<synchronous>, transform_indices = @transform_3, window_bounds = array<i64: 8, 1>}, {transform_indices = @transform_4, window_bounds = array<i64: 1, 8, 8, 8>}]} {
    %c0 = arith.constant 0 : index
    %c0_0 = arith.constant 0 : index
    %0 = vector.load %arg3[%c0, %c0_0] : memref<8x8xf32, #tpu.memory_space<vmem>>, vector<8x8xf32>
    %c0_1 = arith.constant 0 : index
    %c0_2 = arith.constant 0 : index
    %1 = vector.load %arg4[%c0_1, %c0_2] : memref<8x1xf32, #tpu.memory_space<vmem>>, vector<8x1xf32>
    %c0_3 = arith.constant 0 : index
    %c0_4 = arith.constant 0 : index
    %2 = vector.load %arg5[%c0_3, %c0_4] : memref<8x1xf32, #tpu.memory_space<vmem>>, vector<8x1xf32>
    %3 = tpu.iota {dimensions = array<i32: 0>} : vector<16x8xi32>
    %4 = tpu.iota {dimensions = array<i32: 1>} : vector<16x8xi32>
    %c2_i32 = arith.constant 2 : i32
    %5 = vector.broadcast %c2_i32 : i32 to vector<16x8xi32>
    %6 = arith.muli %5, %4 : vector<16x8xi32>
    %7 = arith.cmpi eq, %3, %6 : vector<16x8xi32>
    %8 = arith.extui %7 : vector<16x8xi1> to vector<16x8xi32>
    %9 = arith.sitofp %8 : vector<16x8xi32> to vector<16x8xf32>
    %c2_i32_5 = arith.constant 2 : i32
    %10 = vector.broadcast %c2_i32_5 : i32 to vector<16x8xi32>
    %11 = arith.muli %10, %4 : vector<16x8xi32>
    %c1_i32 = arith.constant 1 : i32
    %12 = vector.broadcast %c1_i32 : i32 to vector<16x8xi32>
    %13 = arith.addi %11, %12 : vector<16x8xi32>
    %14 = arith.cmpi eq, %3, %13 : vector<16x8xi32>
    %15 = arith.extui %14 : vector<16x8xi1> to vector<16x8xi32>
    %16 = arith.sitofp %15 : vector<16x8xi32> to vector<16x8xf32>
    %c0_6 = arith.constant 0 : index
    %c0_7 = arith.constant 0 : index
    %c0_8 = arith.constant 0 : index
    %c0_9 = arith.constant 0 : index
    %17 = vector.load %arg2[%c0_6, %c0_7, %c0_8, %c0_9] : memref<1x4x16x16xf32, #tpu.memory_space<vmem>>, vector<1x4x1x16xf32>
    %18 = vector.shape_cast %17 : vector<1x4x1x16xf32> to vector<4x16xf32>
    %cst = arith.constant 0.000000e+00 : f32
    %19 = vector.broadcast %cst : f32 to vector<4x16xf32>
    %20 = arith.maximumf %18, %19 : vector<4x16xf32>
    %c0_10 = arith.constant 0 : index
    %c0_11 = arith.constant 0 : index
    %c1 = arith.constant 1 : index
    %c0_12 = arith.constant 0 : index
    %21 = vector.load %arg2[%c0_10, %c0_11, %c1, %c0_12] : memref<1x4x16x16xf32, #tpu.memory_space<vmem>>, vector<1x4x1x16xf32>
    %22 = vector.shape_cast %21 : vector<1x4x1x16xf32> to vector<4x16xf32>
    %cst_13 = arith.constant 0.000000e+00 : f32
    %23 = vector.broadcast %cst_13 : f32 to vector<4x16xf32>
    %24 = arith.maximumf %22, %23 : vector<4x16xf32>
    %cst_14 = arith.constant dense<0.000000e+00> : vector<4x8xf32>
    %25 = tpu.matmul %20, %9, %cst_14 {dimension_numbers = #tpu.dot_dimension_numbers<[1], [0], [0], [1], [0, 0, 1, 1], [], []>} : vector<4x16xf32>, vector<16x8xf32>, vector<4x8xf32> -> vector<4x8xf32>
    %cst_15 = arith.constant dense<0.000000e+00> : vector<4x8xf32>
    %26 = tpu.matmul %24, %16, %cst_15 {dimension_numbers = #tpu.dot_dimension_numbers<[1], [0], [0], [1], [0, 0, 1, 1], [], []>} : vector<4x16xf32>, vector<16x8xf32>, vector<4x8xf32> -> vector<4x8xf32>
    %27 = tpu.concatenate %25, %26 in 0 : vector<4x8xf32>, vector<4x8xf32> -> vector<8x8xf32>
    %cst_16 = arith.constant dense<0.000000e+00> : vector<8x8xf32>
    %28 = tpu.matmul %0, %27, %cst_16 {dimension_numbers = #tpu.dot_dimension_numbers<[1], [0], [0], [1], [0, 0, 1, 1], [], []>} : vector<8x8xf32>, vector<8x8xf32>, vector<8x8xf32> -> vector<8x8xf32>
    %29 = vector.broadcast %1 : vector<8x1xf32> to vector<8x8xf32>
    %30 = arith.mulf %28, %29 : vector<8x8xf32>
    %31 = vector.broadcast %2 : vector<8x1xf32> to vector<8x8xf32>
    %32 = arith.addf %30, %31 : vector<8x8xf32>
    %c0_17 = arith.constant 0 : index
    %c0_18 = arith.constant 0 : index
    %c0_19 = arith.constant 0 : index
    %c0_20 = arith.constant 0 : index
    %33 = vector.load %arg6[%c0_17, %c0_18, %c0_19, %c0_20] : memref<1x8x8x8xf32, #tpu.memory_space<vmem>>, vector<1x8x1x8xf32>
    %34 = vector.shape_cast %33 : vector<1x8x1x8xf32> to vector<8x8xf32>
    %35 = vector.shape_cast %32 : vector<8x8xf32> to vector<1x8x1x8xf32>
    tpu.vector_store %arg6[%c0_17, %c0_18, %c0_19, %c0_20], %35 {strides = array<i32>} : memref<1x8x8x8xf32, #tpu.memory_space<vmem>>, vector<1x8x1x8xf32>,
    %c0_21 = arith.constant 0 : index
    %c0_22 = arith.constant 0 : index
    %c2 = arith.constant 2 : index
    %c0_23 = arith.constant 0 : index
    %36 = vector.load %arg2[%c0_21, %c0_22, %c2, %c0_23] : memref<1x4x16x16xf32, #tpu.memory_space<vmem>>, vector<1x4x1x16xf32>
    %37 = vector.shape_cast %36 : vector<1x4x1x16xf32> to vector<4x16xf32>
    %cst_24 = arith.constant 0.000000e+00 : f32
    %38 = vector.broadcast %cst_24 : f32 to vector<4x16xf32>
    %39 = arith.maximumf %37, %38 : vector<4x16xf32>
    %c0_25 = arith.constant 0 : index
    %c0_26 = arith.constant 0 : index
    %c3 = arith.constant 3 : index
    %c0_27 = arith.constant 0 : index
    %40 = vector.load %arg2[%c0_25, %c0_26, %c3, %c0_27] : memref<1x4x16x16xf32, #tpu.memory_space<vmem>>, vector<1x4x1x16xf32>
    %41 = vector.shape_cast %40 : vector<1x4x1x16xf32> to vector<4x16xf32>
    %cst_28 = arith.constant 0.000000e+00 : f32
    %42 = vector.broadcast %cst_28 : f32 to vector<4x16xf32>
    %43 = arith.maximumf %41, %42 : vector<4x16xf32>
    %cst_29 = arith.constant dense<0.000000e+00> : vector<4x8xf32>
    %44 = tpu.matmul %39, %9, %cst_29 {dimension_numbers = #tpu.dot_dimension_numbers<[1], [0], [0], [1], [0, 0, 1, 1], [], []>} : vector<4x16xf32>, vector<16x8xf32>, vector<4x8xf32> -> vector<4x8xf32>
    %cst_30 = arith.constant dense<0.000000e+00> : vector<4x8xf32>
    %45 = tpu.matmul %43, %16, %cst_30 {dimension_numbers = #tpu.dot_dimension_numbers<[1], [0], [0], [1], [0, 0, 1, 1], [], []>} : vector<4x16xf32>, vector<16x8xf32>, vector<4x8xf32> -> vector<4x8xf32>
    %46 = tpu.concatenate %44, %45 in 0 : vector<4x8xf32>, vector<4x8xf32> -> vector<8x8xf32>
    %cst_31 = arith.constant dense<0.000000e+00> : vector<8x8xf32>
    %47 = tpu.matmul %0, %46, %cst_31 {dimension_numbers = #tpu.dot_dimension_numbers<[1], [0], [0], [1], [0, 0, 1, 1], [], []>} : vector<8x8xf32>, vector<8x8xf32>, vector<8x8xf32> -> vector<8x8xf32>
    %48 = vector.broadcast %1 : vector<8x1xf32> to vector<8x8xf32>
    %49 = arith.mulf %47, %48 : vector<8x8xf32>
    %50 = vector.broadcast %2 : vector<8x1xf32> to vector<8x8xf32>
    %51 = arith.addf %49, %50 : vector<8x8xf32>
    %c0_32 = arith.constant 0 : index
    %c0_33 = arith.constant 0 : index
    %c1_34 = arith.constant 1 : index
    %c0_35 = arith.constant 0 : index
    %52 = vector.load %arg6[%c0_32, %c0_33, %c1_34, %c0_35] : memref<1x8x8x8xf32, #tpu.memory_space<vmem>>, vector<1x8x1x8xf32>
    %53 = vector.shape_cast %52 : vector<1x8x1x8xf32> to vector<8x8xf32>
    %54 = vector.shape_cast %51 : vector<8x8xf32> to vector<1x8x1x8xf32>
    tpu.vector_store %arg6[%c0_32, %c0_33, %c1_34, %c0_35], %54 {strides = array<i32>} : memref<1x8x8x8xf32, #tpu.memory_space<vmem>>, vector<1x8x1x8xf32>,
    %c0_36 = arith.constant 0 : index
    %c0_37 = arith.constant 0 : index
    %c4 = arith.constant 4 : index
    %c0_38 = arith.constant 0 : index
    %55 = vector.load %arg2[%c0_36, %c0_37, %c4, %c0_38] : memref<1x4x16x16xf32, #tpu.memory_space<vmem>>, vector<1x4x1x16xf32>
    %56 = vector.shape_cast %55 : vector<1x4x1x16xf32> to vector<4x16xf32>
    %cst_39 = arith.constant 0.000000e+00 : f32
    %57 = vector.broadcast %cst_39 : f32 to vector<4x16xf32>
    %58 = arith.maximumf %56, %57 : vector<4x16xf32>
    %c0_40 = arith.constant 0 : index
    %c0_41 = arith.constant 0 : index
    %c5 = arith.constant 5 : index
    %c0_42 = arith.constant 0 : index
    %59 = vector.load %arg2[%c0_40, %c0_41, %c5, %c0_42] : memref<1x4x16x16xf32, #tpu.memory_space<vmem>>, vector<1x4x1x16xf32>
    %60 = vector.shape_cast %59 : vector<1x4x1x16xf32> to vector<4x16xf32>
    %cst_43 = arith.constant 0.000000e+00 : f32
    %61 = vector.broadcast %cst_43 : f32 to vector<4x16xf32>
    %62 = arith.maximumf %60, %61 : vector<4x16xf32>
    %cst_44 = arith.constant dense<0.000000e+00> : vector<4x8xf32>
    %63 = tpu.matmul %58, %9, %cst_44 {dimension_numbers = #tpu.dot_dimension_numbers<[1], [0], [0], [1], [0, 0, 1, 1], [], []>} : vector<4x16xf32>, vector<16x8xf32>, vector<4x8xf32> -> vector<4x8xf32>
    %cst_45 = arith.constant dense<0.000000e+00> : vector<4x8xf32>
    %64 = tpu.matmul %62, %16, %cst_45 {dimension_numbers = #tpu.dot_dimension_numbers<[1], [0], [0], [1], [0, 0, 1, 1], [], []>} : vector<4x16xf32>, vector<16x8xf32>, vector<4x8xf32> -> vector<4x8xf32>
    %65 = tpu.concatenate %63, %64 in 0 : vector<4x8xf32>, vector<4x8xf32> -> vector<8x8xf32>
    %cst_46 = arith.constant dense<0.000000e+00> : vector<8x8xf32>
    %66 = tpu.matmul %0, %65, %cst_46 {dimension_numbers = #tpu.dot_dimension_numbers<[1], [0], [0], [1], [0, 0, 1, 1], [], []>} : vector<8x8xf32>, vector<8x8xf32>, vector<8x8xf32> -> vector<8x8xf32>
    %67 = vector.broadcast %1 : vector<8x1xf32> to vector<8x8xf32>
    %68 = arith.mulf %66, %67 : vector<8x8xf32>
    %69 = vector.broadcast %2 : vector<8x1xf32> to vector<8x8xf32>
    %70 = arith.addf %68, %69 : vector<8x8xf32>
    %c0_47 = arith.constant 0 : index
    %c0_48 = arith.constant 0 : index
    %c2_49 = arith.constant 2 : index
    %c0_50 = arith.constant 0 : index
    %71 = vector.load %arg6[%c0_47, %c0_48, %c2_49, %c0_50] : memref<1x8x8x8xf32, #tpu.memory_space<vmem>>, vector<1x8x1x8xf32>
    %72 = vector.shape_cast %71 : vector<1x8x1x8xf32> to vector<8x8xf32>
    %73 = vector.shape_cast %70 : vector<8x8xf32> to vector<1x8x1x8xf32>
    tpu.vector_store %arg6[%c0_47, %c0_48, %c2_49, %c0_50], %73 {strides = array<i32>} : memref<1x8x8x8xf32, #tpu.memory_space<vmem>>, vector<1x8x1x8xf32>,
    %c0_51 = arith.constant 0 : index
    %c0_52 = arith.constant 0 : index
    %c6 = arith.constant 6 : index
    %c0_53 = arith.constant 0 : index
    %74 = vector.load %arg2[%c0_51, %c0_52, %c6, %c0_53] : memref<1x4x16x16xf32, #tpu.memory_space<vmem>>, vector<1x4x1x16xf32>
    %75 = vector.shape_cast %74 : vector<1x4x1x16xf32> to vector<4x16xf32>
    %cst_54 = arith.constant 0.000000e+00 : f32
    %76 = vector.broadcast %cst_54 : f32 to vector<4x16xf32>
    %77 = arith.maximumf %75, %76 : vector<4x16xf32>
    %c0_55 = arith.constant 0 : index
    %c0_56 = arith.constant 0 : index
    %c7 = arith.constant 7 : index
    %c0_57 = arith.constant 0 : index
    %78 = vector.load %arg2[%c0_55, %c0_56, %c7, %c0_57] : memref<1x4x16x16xf32, #tpu.memory_space<vmem>>, vector<1x4x1x16xf32>
    %79 = vector.shape_cast %78 : vector<1x4x1x16xf32> to vector<4x16xf32>
    %cst_58 = arith.constant 0.000000e+00 : f32
    %80 = vector.broadcast %cst_58 : f32 to vector<4x16xf32>
    %81 = arith.maximumf %79, %80 : vector<4x16xf32>
    %cst_59 = arith.constant dense<0.000000e+00> : vector<4x8xf32>
    %82 = tpu.matmul %77, %9, %cst_59 {dimension_numbers = #tpu.dot_dimension_numbers<[1], [0], [0], [1], [0, 0, 1, 1], [], []>} : vector<4x16xf32>, vector<16x8xf32>, vector<4x8xf32> -> vector<4x8xf32>
    %cst_60 = arith.constant dense<0.000000e+00> : vector<4x8xf32>
    %83 = tpu.matmul %81, %16, %cst_60 {dimension_numbers = #tpu.dot_dimension_numbers<[1], [0], [0], [1], [0, 0, 1, 1], [], []>} : vector<4x16xf32>, vector<16x8xf32>, vector<4x8xf32> -> vector<4x8xf32>
    %84 = tpu.concatenate %82, %83 in 0 : vector<4x8xf32>, vector<4x8xf32> -> vector<8x8xf32>
    %cst_61 = arith.constant dense<0.000000e+00> : vector<8x8xf32>
    %85 = tpu.matmul %0, %84, %cst_61 {dimension_numbers = #tpu.dot_dimension_numbers<[1], [0], [0], [1], [0, 0, 1, 1], [], []>} : vector<8x8xf32>, vector<8x8xf32>, vector<8x8xf32> -> vector<8x8xf32>
    %86 = vector.broadcast %1 : vector<8x1xf32> to vector<8x8xf32>
    %87 = arith.mulf %85, %86 : vector<8x8xf32>
    %88 = vector.broadcast %2 : vector<8x1xf32> to vector<8x8xf32>
    %89 = arith.addf %87, %88 : vector<8x8xf32>
    %c0_62 = arith.constant 0 : index
    %c0_63 = arith.constant 0 : index
    %c3_64 = arith.constant 3 : index
    %c0_65 = arith.constant 0 : index
    %90 = vector.load %arg6[%c0_62, %c0_63, %c3_64, %c0_65] : memref<1x8x8x8xf32, #tpu.memory_space<vmem>>, vector<1x8x1x8xf32>
    %91 = vector.shape_cast %90 : vector<1x8x1x8xf32> to vector<8x8xf32>
    %92 = vector.shape_cast %89 : vector<8x8xf32> to vector<1x8x1x8xf32>
    tpu.vector_store %arg6[%c0_62, %c0_63, %c3_64, %c0_65], %92 {strides = array<i32>} : memref<1x8x8x8xf32, #tpu.memory_space<vmem>>, vector<1x8x1x8xf32>,
    %c0_66 = arith.constant 0 : index
    %c0_67 = arith.constant 0 : index
    %c8 = arith.constant 8 : index
    %c0_68 = arith.constant 0 : index
    %93 = vector.load %arg2[%c0_66, %c0_67, %c8, %c0_68] : memref<1x4x16x16xf32, #tpu.memory_space<vmem>>, vector<1x4x1x16xf32>
    %94 = vector.shape_cast %93 : vector<1x4x1x16xf32> to vector<4x16xf32>
    %cst_69 = arith.constant 0.000000e+00 : f32
    %95 = vector.broadcast %cst_69 : f32 to vector<4x16xf32>
    %96 = arith.maximumf %94, %95 : vector<4x16xf32>
    %c0_70 = arith.constant 0 : index
    %c0_71 = arith.constant 0 : index
    %c9 = arith.constant 9 : index
    %c0_72 = arith.constant 0 : index
    %97 = vector.load %arg2[%c0_70, %c0_71, %c9, %c0_72] : memref<1x4x16x16xf32, #tpu.memory_space<vmem>>, vector<1x4x1x16xf32>
    %98 = vector.shape_cast %97 : vector<1x4x1x16xf32> to vector<4x16xf32>
    %cst_73 = arith.constant 0.000000e+00 : f32
    %99 = vector.broadcast %cst_73 : f32 to vector<4x16xf32>
    %100 = arith.maximumf %98, %99 : vector<4x16xf32>
    %cst_74 = arith.constant dense<0.000000e+00> : vector<4x8xf32>
    %101 = tpu.matmul %96, %9, %cst_74 {dimension_numbers = #tpu.dot_dimension_numbers<[1], [0], [0], [1], [0, 0, 1, 1], [], []>} : vector<4x16xf32>, vector<16x8xf32>, vector<4x8xf32> -> vector<4x8xf32>
    %cst_75 = arith.constant dense<0.000000e+00> : vector<4x8xf32>
    %102 = tpu.matmul %100, %16, %cst_75 {dimension_numbers = #tpu.dot_dimension_numbers<[1], [0], [0], [1], [0, 0, 1, 1], [], []>} : vector<4x16xf32>, vector<16x8xf32>, vector<4x8xf32> -> vector<4x8xf32>
    %103 = tpu.concatenate %101, %102 in 0 : vector<4x8xf32>, vector<4x8xf32> -> vector<8x8xf32>
    %cst_76 = arith.constant dense<0.000000e+00> : vector<8x8xf32>
    %104 = tpu.matmul %0, %103, %cst_76 {dimension_numbers = #tpu.dot_dimension_numbers<[1], [0], [0], [1], [0, 0, 1, 1], [], []>} : vector<8x8xf32>, vector<8x8xf32>, vector<8x8xf32> -> vector<8x8xf32>
    %105 = vector.broadcast %1 : vector<8x1xf32> to vector<8x8xf32>
    %106 = arith.mulf %104, %105 : vector<8x8xf32>
    %107 = vector.broadcast %2 : vector<8x1xf32> to vector<8x8xf32>
    %108 = arith.addf %106, %107 : vector<8x8xf32>
    %c0_77 = arith.constant 0 : index
    %c0_78 = arith.constant 0 : index
    %c4_79 = arith.constant 4 : index
    %c0_80 = arith.constant 0 : index
    %109 = vector.load %arg6[%c0_77, %c0_78, %c4_79, %c0_80] : memref<1x8x8x8xf32, #tpu.memory_space<vmem>>, vector<1x8x1x8xf32>
    %110 = vector.shape_cast %109 : vector<1x8x1x8xf32> to vector<8x8xf32>
    %111 = vector.shape_cast %108 : vector<8x8xf32> to vector<1x8x1x8xf32>
    tpu.vector_store %arg6[%c0_77, %c0_78, %c4_79, %c0_80], %111 {strides = array<i32>} : memref<1x8x8x8xf32, #tpu.memory_space<vmem>>, vector<1x8x1x8xf32>,
    %c0_81 = arith.constant 0 : index
    %c0_82 = arith.constant 0 : index
    %c10 = arith.constant 10 : index
    %c0_83 = arith.constant 0 : index
    %112 = vector.load %arg2[%c0_81, %c0_82, %c10, %c0_83] : memref<1x4x16x16xf32, #tpu.memory_space<vmem>>, vector<1x4x1x16xf32>
    %113 = vector.shape_cast %112 : vector<1x4x1x16xf32> to vector<4x16xf32>
    %cst_84 = arith.constant 0.000000e+00 : f32
    %114 = vector.broadcast %cst_84 : f32 to vector<4x16xf32>
    %115 = arith.maximumf %113, %114 : vector<4x16xf32>
    %c0_85 = arith.constant 0 : index
    %c0_86 = arith.constant 0 : index
    %c11 = arith.constant 11 : index
    %c0_87 = arith.constant 0 : index
    %116 = vector.load %arg2[%c0_85, %c0_86, %c11, %c0_87] : memref<1x4x16x16xf32, #tpu.memory_space<vmem>>, vector<1x4x1x16xf32>
    %117 = vector.shape_cast %116 : vector<1x4x1x16xf32> to vector<4x16xf32>
    %cst_88 = arith.constant 0.000000e+00 : f32
    %118 = vector.broadcast %cst_88 : f32 to vector<4x16xf32>
    %119 = arith.maximumf %117, %118 : vector<4x16xf32>
    %cst_89 = arith.constant dense<0.000000e+00> : vector<4x8xf32>
    %120 = tpu.matmul %115, %9, %cst_89 {dimension_numbers = #tpu.dot_dimension_numbers<[1], [0], [0], [1], [0, 0, 1, 1], [], []>} : vector<4x16xf32>, vector<16x8xf32>, vector<4x8xf32> -> vector<4x8xf32>
    %cst_90 = arith.constant dense<0.000000e+00> : vector<4x8xf32>
    %121 = tpu.matmul %119, %16, %cst_90 {dimension_numbers = #tpu.dot_dimension_numbers<[1], [0], [0], [1], [0, 0, 1, 1], [], []>} : vector<4x16xf32>, vector<16x8xf32>, vector<4x8xf32> -> vector<4x8xf32>
    %122 = tpu.concatenate %120, %121 in 0 : vector<4x8xf32>, vector<4x8xf32> -> vector<8x8xf32>
    %cst_91 = arith.constant dense<0.000000e+00> : vector<8x8xf32>
    %123 = tpu.matmul %0, %122, %cst_91 {dimension_numbers = #tpu.dot_dimension_numbers<[1], [0], [0], [1], [0, 0, 1, 1], [], []>} : vector<8x8xf32>, vector<8x8xf32>, vector<8x8xf32> -> vector<8x8xf32>
    %124 = vector.broadcast %1 : vector<8x1xf32> to vector<8x8xf32>
    %125 = arith.mulf %123, %124 : vector<8x8xf32>
    %126 = vector.broadcast %2 : vector<8x1xf32> to vector<8x8xf32>
    %127 = arith.addf %125, %126 : vector<8x8xf32>
    %c0_92 = arith.constant 0 : index
    %c0_93 = arith.constant 0 : index
    %c5_94 = arith.constant 5 : index
    %c0_95 = arith.constant 0 : index
    %128 = vector.load %arg6[%c0_92, %c0_93, %c5_94, %c0_95] : memref<1x8x8x8xf32, #tpu.memory_space<vmem>>, vector<1x8x1x8xf32>
    %129 = vector.shape_cast %128 : vector<1x8x1x8xf32> to vector<8x8xf32>
    %130 = vector.shape_cast %127 : vector<8x8xf32> to vector<1x8x1x8xf32>
    tpu.vector_store %arg6[%c0_92, %c0_93, %c5_94, %c0_95], %130 {strides = array<i32>} : memref<1x8x8x8xf32, #tpu.memory_space<vmem>>, vector<1x8x1x8xf32>,
    %c0_96 = arith.constant 0 : index
    %c0_97 = arith.constant 0 : index
    %c12 = arith.constant 12 : index
    %c0_98 = arith.constant 0 : index
    %131 = vector.load %arg2[%c0_96, %c0_97, %c12, %c0_98] : memref<1x4x16x16xf32, #tpu.memory_space<vmem>>, vector<1x4x1x16xf32>
    %132 = vector.shape_cast %131 : vector<1x4x1x16xf32> to vector<4x16xf32>
    %cst_99 = arith.constant 0.000000e+00 : f32
    %133 = vector.broadcast %cst_99 : f32 to vector<4x16xf32>
    %134 = arith.maximumf %132, %133 : vector<4x16xf32>
    %c0_100 = arith.constant 0 : index
    %c0_101 = arith.constant 0 : index
    %c13 = arith.constant 13 : index
    %c0_102 = arith.constant 0 : index
    %135 = vector.load %arg2[%c0_100, %c0_101, %c13, %c0_102] : memref<1x4x16x16xf32, #tpu.memory_space<vmem>>, vector<1x4x1x16xf32>
    %136 = vector.shape_cast %135 : vector<1x4x1x16xf32> to vector<4x16xf32>
    %cst_103 = arith.constant 0.000000e+00 : f32
    %137 = vector.broadcast %cst_103 : f32 to vector<4x16xf32>
    %138 = arith.maximumf %136, %137 : vector<4x16xf32>
    %cst_104 = arith.constant dense<0.000000e+00> : vector<4x8xf32>
    %139 = tpu.matmul %134, %9, %cst_104 {dimension_numbers = #tpu.dot_dimension_numbers<[1], [0], [0], [1], [0, 0, 1, 1], [], []>} : vector<4x16xf32>, vector<16x8xf32>, vector<4x8xf32> -> vector<4x8xf32>
    %cst_105 = arith.constant dense<0.000000e+00> : vector<4x8xf32>
    %140 = tpu.matmul %138, %16, %cst_105 {dimension_numbers = #tpu.dot_dimension_numbers<[1], [0], [0], [1], [0, 0, 1, 1], [], []>} : vector<4x16xf32>, vector<16x8xf32>, vector<4x8xf32> -> vector<4x8xf32>
    %141 = tpu.concatenate %139, %140 in 0 : vector<4x8xf32>, vector<4x8xf32> -> vector<8x8xf32>
    %cst_106 = arith.constant dense<0.000000e+00> : vector<8x8xf32>
    %142 = tpu.matmul %0, %141, %cst_106 {dimension_numbers = #tpu.dot_dimension_numbers<[1], [0], [0], [1], [0, 0, 1, 1], [], []>} : vector<8x8xf32>, vector<8x8xf32>, vector<8x8xf32> -> vector<8x8xf32>
    %143 = vector.broadcast %1 : vector<8x1xf32> to vector<8x8xf32>
    %144 = arith.mulf %142, %143 : vector<8x8xf32>
    %145 = vector.broadcast %2 : vector<8x1xf32> to vector<8x8xf32>
    %146 = arith.addf %144, %145 : vector<8x8xf32>
    %c0_107 = arith.constant 0 : index
    %c0_108 = arith.constant 0 : index
    %c6_109 = arith.constant 6 : index
    %c0_110 = arith.constant 0 : index
    %147 = vector.load %arg6[%c0_107, %c0_108, %c6_109, %c0_110] : memref<1x8x8x8xf32, #tpu.memory_space<vmem>>, vector<1x8x1x8xf32>
    %148 = vector.shape_cast %147 : vector<1x8x1x8xf32> to vector<8x8xf32>
    %149 = vector.shape_cast %146 : vector<8x8xf32> to vector<1x8x1x8xf32>
    tpu.vector_store %arg6[%c0_107, %c0_108, %c6_109, %c0_110], %149 {strides = array<i32>} : memref<1x8x8x8xf32, #tpu.memory_space<vmem>>, vector<1x8x1x8xf32>,
    %c0_111 = arith.constant 0 : index
    %c0_112 = arith.constant 0 : index
    %c14 = arith.constant 14 : index
    %c0_113 = arith.constant 0 : index
    %150 = vector.load %arg2[%c0_111, %c0_112, %c14, %c0_113] : memref<1x4x16x16xf32, #tpu.memory_space<vmem>>, vector<1x4x1x16xf32>
    %151 = vector.shape_cast %150 : vector<1x4x1x16xf32> to vector<4x16xf32>
    %cst_114 = arith.constant 0.000000e+00 : f32
    %152 = vector.broadcast %cst_114 : f32 to vector<4x16xf32>
    %153 = arith.maximumf %151, %152 : vector<4x16xf32>
    %c0_115 = arith.constant 0 : index
    %c0_116 = arith.constant 0 : index
    %c15 = arith.constant 15 : index
    %c0_117 = arith.constant 0 : index
    %154 = vector.load %arg2[%c0_115, %c0_116, %c15, %c0_117] : memref<1x4x16x16xf32, #tpu.memory_space<vmem>>, vector<1x4x1x16xf32>
    %155 = vector.shape_cast %154 : vector<1x4x1x16xf32> to vector<4x16xf32>
    %cst_118 = arith.constant 0.000000e+00 : f32
    %156 = vector.broadcast %cst_118 : f32 to vector<4x16xf32>
    %157 = arith.maximumf %155, %156 : vector<4x16xf32>
    %cst_119 = arith.constant dense<0.000000e+00> : vector<4x8xf32>
    %158 = tpu.matmul %153, %9, %cst_119 {dimension_numbers = #tpu.dot_dimension_numbers<[1], [0], [0], [1], [0, 0, 1, 1], [], []>} : vector<4x16xf32>, vector<16x8xf32>, vector<4x8xf32> -> vector<4x8xf32>
    %cst_120 = arith.constant dense<0.000000e+00> : vector<4x8xf32>
    %159 = tpu.matmul %157, %16, %cst_120 {dimension_numbers = #tpu.dot_dimension_numbers<[1], [0], [0], [1], [0, 0, 1, 1], [], []>} : vector<4x16xf32>, vector<16x8xf32>, vector<4x8xf32> -> vector<4x8xf32>
    %160 = tpu.concatenate %158, %159 in 0 : vector<4x8xf32>, vector<4x8xf32> -> vector<8x8xf32>
    %cst_121 = arith.constant dense<0.000000e+00> : vector<8x8xf32>
    %161 = tpu.matmul %0, %160, %cst_121 {dimension_numbers = #tpu.dot_dimension_numbers<[1], [0], [0], [1], [0, 0, 1, 1], [], []>} : vector<8x8xf32>, vector<8x8xf32>, vector<8x8xf32> -> vector<8x8xf32>
    %162 = vector.broadcast %1 : vector<8x1xf32> to vector<8x8xf32>
    %163 = arith.mulf %161, %162 : vector<8x8xf32>
    %164 = vector.broadcast %2 : vector<8x1xf32> to vector<8x8xf32>
    %165 = arith.addf %163, %164 : vector<8x8xf32>
    %c0_122 = arith.constant 0 : index
    %c0_123 = arith.constant 0 : index
    %c7_124 = arith.constant 7 : index
    %c0_125 = arith.constant 0 : index
    %166 = vector.load %arg6[%c0_122, %c0_123, %c7_124, %c0_125] : memref<1x8x8x8xf32, #tpu.memory_space<vmem>>, vector<1x8x1x8xf32>
    %167 = vector.shape_cast %166 : vector<1x8x1x8xf32> to vector<8x8xf32>
    %168 = vector.shape_cast %165 : vector<8x8xf32> to vector<1x8x1x8xf32>
    tpu.vector_store %arg6[%c0_122, %c0_123, %c7_124, %c0_125], %168 {strides = array<i32>} : memref<1x8x8x8xf32, #tpu.memory_space<vmem>>, vector<1x8x1x8xf32>,
    return
  }
  func.func @transform_0(%arg0: i32, %arg1: i32) -> (i32, i32, i32, i32) {
    %c0_i32 = arith.constant 0 : i32
    %c0_i32_0 = arith.constant 0 : i32
    %c0_i32_1 = arith.constant 0 : i32
    return %arg0, %c0_i32, %arg1, %c0_i32_0 : i32, i32, i32, i32
  }
  func.func @transform_1(%arg0: i32, %arg1: i32) -> (i32, i32) {
    %c0_i32 = arith.constant 0 : i32
    %c0_i32_0 = arith.constant 0 : i32
    %c0_i32_1 = arith.constant 0 : i32
    return %c0_i32, %c0_i32_0 : i32, i32
  }
  func.func @transform_2(%arg0: i32, %arg1: i32) -> (i32, i32) {
    %c0_i32 = arith.constant 0 : i32
    %c0_i32_0 = arith.constant 0 : i32
    %c0_i32_1 = arith.constant 0 : i32
    return %c0_i32, %c0_i32_0 : i32, i32
  }
  func.func @transform_3(%arg0: i32, %arg1: i32) -> (i32, i32) {
    %c0_i32 = arith.constant 0 : i32
    %c0_i32_0 = arith.constant 0 : i32
    %c0_i32_1 = arith.constant 0 : i32
    return %c0_i32, %c0_i32_0 : i32, i32
  }
  func.func @transform_4(%arg0: i32, %arg1: i32) -> (i32, i32, i32, i32) {
    %c0_i32 = arith.constant 0 : i32
    %c0_i32_0 = arith.constant 0 : i32
    %c0_i32_1 = arith.constant 0 : i32
    return %arg0, %c0_i32, %arg1, %c0_i32_0 : i32, i32, i32, i32
  }
}

</mosaic_0001>

<llo_original>
// kernel: factorized_reduce.2
$region0: #{factorized_reduce.2}
  #allocation0 [shape = 'u32[]', space=smem, size = 0x4, offset = 0x4, fixed_abs, tag = 'smem constant byte address 0x4 - core index']
  #allocation1 [shape = 'u32[144,128]{1,0:T(1,128)}', space=vmem, size = 0x12000, scoped, tag = 'internal scratch']
  %s0 = inlined_call_operand.hbm [shape: f32[2,4,16,16], index: 0, kind: input, shape index: {}]
  %s1 = inlined_call_operand.vmem [shape: f32[8,8], index: 1, kind: input, shape index: {}]
  %s2 = inlined_call_operand.vmem [shape: f32[2,1,8,1], index: 2, kind: output, shape index: {0}]
  %s3 = inlined_call_operand.vmem [shape: f32[2,1,8,1], index: 3, kind: output, shape index: {1}]
  %4 = xla_tuple %s2, %s3
  %s5 = sld [smem:[#allocation0]]
  $region53: #{factorized_reduce.2} parent=0
    _
  %s7 = ssub.s32 1, %s5
  %s8 = scalar_select 0, %s7, %s5
  $region1: #{factorized_reduce.2} parent=0
    #allocation2 [shape = 'u8[65536]{0}', space=vmem, size = 0x10000, scoped, tag = 'input window, operand 0']
    #allocation3 [shape = 's32[2]{0}', space=sflag, size = 0x8, scoped, tag = 'scoped memory for factorized_reduce.2']
    %9 = vsyncpa [#allocation3], 0
    %s10 = scalar_lea.sflag [#allocation3], 1
    %11 = vsyncpa %s10, 0
    loop: start=0, step=1, limit=4
    $region2: #{factorized_reduce.2} parent=1 // loop_pre_header
      _
    $region3: #{factorized_reduce.2} parent=1 // loop_header
      %s13 = sphi 0, %s17
      %p14 = scmp.ge.s32.totalorder %s13, 4
      %s20 = sphi 0, %s32
      %s21 = sphi 0, %s28
      %s22 = sphi 0, %s20
      %s23 = sphi 0, %s21
      %s24 = sphi 0, %s22
      %s25 = sphi 0, %s23
      %s37 = sphi 0, %s39
      %s40 = sphi 0, %s37
      %s41 = sphi 0, %s40
      %s57 = sphi 0, %s41
      %s61 = sphi 0, %s61
      %s63 = sphi 0, %s61
      %s64 = sphi 0, %s63
      %s78 = sphi 0, %s64
      %s86 = sphi 0, %s88
      %s89 = sphi 0, %s86
      %s90 = sphi 0, %s89
      %s106 = sphi 0, %s90
      %s114 = sphi 0, %s116
      %s117 = sphi 0, %s114
      %s118 = sphi 0, %s117
      %s134 = sphi 0, %s118
    $region4: #{factorized_reduce.2} parent=1 // loop_header_branch
      %16 = sbr.rel (%p14) target = $region8
    $region5: #{factorized_reduce.2} parent=1 // loop_body
      %s18 = ssub.s32 %s13, 1
      %s19 = ssub.s32 %s13, 2
      %s26 = sadd.s32 1, %s21
      %p27 = scmp.ge.s32.totalorder %s26, 1
      %s28 = scalar_select %p27, 0, %s26
      %s29 = sadd.s32 1, %s20
      %s30 = scalar_select %p27, %s29, %s20
      %p31 = scmp.ge.s32.totalorder %s30, 2
      %s32 = scalar_select %p31, 0, %s30
      %s33 = ssub.s32 %s20, %s32
      %s34 = ssub.s32 %s21, %s28
      %s35 = sor.u32 %s33, %s34
      %p36 = scmp.eq.s32.totalorder %s35, 0
      %s38 = sadd.s32 %s37, 1
      %s39 = scalar_select %p36, %s37, %s38
      %p42 = pneg %p36
      %p43 = scmp.eq.s32.totalorder %s13, 1
      %p44 = por %p42, %p43
      %p45 = scmp.ne.s32.totalorder %s37, %s40
      %p46 = scmp.eq.s32.totalorder %s13, 0
      %p47 = por %p45, %p46
      %p48 = scmp.ne.s32.totalorder %s37, %s40
      %p49 = scmp.eq.s32.totalorder %s18, 1
      %p50 = por %p48, %p49
      %p51 = scmp.ne.s32.totalorder %s40, %s41
      %p52 = scmp.eq.s32.totalorder %s18, 0
      %p53 = por %p51, %p52
      %p54 = scmp.ne.s32.totalorder %s40, %s41
      %p55 = scmp.eq.s32.totalorder %s19, 1
      %p56 = por %p54, %p55
      %p58 = scmp.ne.s32.totalorder %s41, %s57
      %p59 = scmp.eq.s32.totalorder %s19, 0
      %p60 = por %p58, %p59
      %s62 = sadd.s32 %s61, 1
      %p65 = scmp.eq.s32.totalorder %s13, 1
      %p66 = scmp.ne.s32.totalorder %s61, %s63
      %p67 = scmp.eq.s32.totalorder %s13, 0
      %p68 = por %p66, %p67
      %p69 = scmp.ne.s32.totalorder %s61, %s63
      %p70 = scmp.eq.s32.totalorder %s18, 1
      %p71 = por %p69, %p70
      %p72 = scmp.ne.s32.totalorder %s63, %s64
      %p73 = scmp.eq.s32.totalorder %s18, 0
      %p74 = por %p72, %p73
      %p75 = scmp.ne.s32.totalorder %s63, %s64
      %p76 = scmp.eq.s32.totalorder %s19, 1
      %p77 = por %p75, %p76
      %p79 = scmp.ne.s32.totalorder %s64, %s78
      %p80 = scmp.eq.s32.totalorder %s19, 0
      %p81 = por %p79, %p80
      %s82 = ssub.s32 %s20, %s32
      %s83 = ssub.s32 %s21, %s28
      %s84 = sor.u32 %s82, %s83
      %p85 = scmp.eq.s32.totalorder %s84, 0
      %s87 = sadd.s32 %s86, 1
      %s88 = scalar_select %p85, %s86, %s87
      %p91 = pneg %p85
      %p92 = scmp.eq.s32.totalorder %s13, 1
      %p93 = por %p91, %p92
      %p94 = scmp.ne.s32.totalorder %s86, %s89
      %p95 = scmp.eq.s32.totalorder %s13, 0
      %p96 = por %p94, %p95
      %p97 = scmp.ne.s32.totalorder %s86, %s89
      %p98 = scmp.eq.s32.totalorder %s18, 1
      %p99 = por %p97, %p98
      %p100 = scmp.ne.s32.totalorder %s89, %s90
      %p101 = scmp.eq.s32.totalorder %s18, 0
      %p102 = por %p100, %p101
      %p103 = scmp.ne.s32.totalorder %s89, %s90
      %p104 = scmp.eq.s32.totalorder %s19, 1
      %p105 = por %p103, %p104
      %p107 = scmp.ne.s32.totalorder %s90, %s106
      %p108 = scmp.eq.s32.totalorder %s19, 0
      %p109 = por %p107, %p108
      %s110 = ssub.s32 %s20, %s32
      %s111 = ssub.s32 %s21, %s28
      %s112 = sor.u32 %s110, %s111
      %p113 = scmp.eq.s32.totalorder %s112, 0
      %s115 = sadd.s32 %s114, 1
      %s116 = scalar_select %p113, %s114, %s115
      %p119 = pneg %p113
      %p120 = scmp.eq.s32.totalorder %s13, 1
      %p121 = por %p119, %p120
      %p122 = scmp.ne.s32.totalorder %s114, %s117
      %p123 = scmp.eq.s32.totalorder %s13, 0
      %p124 = por %p122, %p123
      %p125 = scmp.ne.s32.totalorder %s114, %s117
      %p126 = scmp.eq.s32.totalorder %s18, 1
      %p127 = por %p125, %p126
      %p128 = scmp.ne.s32.totalorder %s117, %s118
      %p129 = scmp.eq.s32.totalorder %s18, 0
      %p130 = por %p128, %p129
      %p131 = scmp.ne.s32.totalorder %s117, %s118
      %p132 = scmp.eq.s32.totalorder %s19, 1
      %p133 = por %p131, %p132
      %p135 = scmp.ne.s32.totalorder %s118, %s134
      %p136 = scmp.eq.s32.totalorder %s19, 0
      %p137 = por %p135, %p136
      %p138 = scmp.le.s32.totalorder 1, %s13
      %p139 = scmp.lt.s32.totalorder %s13, 3
      %p140 = pnand %p138, %p139
      %p141 = pneg %p140
      // Predicated region
      $region9: #{factorized_reduce.2} parent=5 // pred_check
        _
      $region10: #{factorized_reduce.2} parent=5 // pred_check_branch
        %143 = sbr.rel (%p140) target = $region12
      $region11: #{factorized_reduce.2} parent=5 // pred_region
        %s144 = ssub.s32 %s13, 1
        // Predicated region
        $region13: #{factorized_reduce.2} parent=11 // pred_check
          %p145 = pneg %p74
        $region14: #{factorized_reduce.2} parent=11 // pred_check_branch
          %147 = sbr.rel (%p145) target = $region16
        $region15: #{factorized_reduce.2} parent=11 // pred_region
          _
        $region16: #{factorized_reduce.2} parent=11 // pred_fallthru
          _
      $region12: #{factorized_reduce.2} parent=5 // pred_fallthru
        _
      %p148 = scmp.lt.s32.totalorder %s13, 2
      // Predicated region
      $region17: #{factorized_reduce.2} parent=5 // pred_check
        %p149 = pneg %p148
      $region18: #{factorized_reduce.2} parent=5 // pred_check_branch
        %151 = sbr.rel (%p149) target = $region20
      $region19: #{factorized_reduce.2} parent=5 // pred_region
        // Predicated region
        $region21: #{factorized_reduce.2} parent=19 // pred_check
          %p152 = pneg %p47
        $region22: #{factorized_reduce.2} parent=19 // pred_check_branch
          %154 = sbr.rel (%p152) target = $region24
        $region23: #{factorized_reduce.2} parent=19 // pred_region
          %s155 = sand.u32 %s37, 1
          %s156 = scalar_lea.sflag [#allocation3], %s155
          %s157 = sand.u32 %s37, 1
          %s158 = smul.addr %s157, 64
          %s159 = scalar_lea.vmem [#allocation2], %s158
          %s160 = smul.u32 2, %s21
          %s162 = ssub.s32 1024, 1024
          %163 = vsyncadd %s156, %s162
          %s164 = smul.addr %s20, 8
          %s165 = sadd.s32 %s160, %s164
          %s166 = smul.addr %s165, 128
          %s167 = scalar_lea.hbm %s0, %s166
          %s168 = sshll.u32 %s159, 4
          %s169 = int_to_ptr.vmem [resolvable:$true] %s168
          %174 = dma.hbm_to_vmem [thread:$0]  %s167, 1024, %s169, %s156, 128, 128, 8
        $region24: #{factorized_reduce.2} parent=19 // pred_fallthru
          _
      $region20: #{factorized_reduce.2} parent=5 // pred_fallthru
        _
      %p175 = scmp.le.s32.totalorder 1, %s13
      %p176 = scmp.lt.s32.totalorder %s13, 3
      %p177 = pnand %p175, %p176
      %p178 = pneg %p177
      // Predicated region
      $region25: #{factorized_reduce.2} parent=5 // pred_check
        _
      $region26: #{factorized_reduce.2} parent=5 // pred_check_branch
        %180 = sbr.rel (%p177) target = $region28
      $region27: #{factorized_reduce.2} parent=5 // pred_region
        %s181 = ssub.s32 %s13, 1
        %s182 = sand.u32 %s40, 1
        %s183 = scalar_lea.sflag [#allocation3], %s182
        %s184 = sand.u32 %s40, 1
        %s185 = smul.addr %s184, 64
        %s186 = scalar_lea.vmem [#allocation2], %s185
        // Predicated region
        $region29: #{factorized_reduce.2} parent=27 // pred_check
          %p187 = pneg %p53
        $region30: #{factorized_reduce.2} parent=27 // pred_check_branch
          %189 = sbr.rel (%p187) target = $region32
        $region31: #{factorized_reduce.2} parent=27 // pred_region
          %190 = dma.done %s183, 1024
        $region32: #{factorized_reduce.2} parent=27 // pred_fallthru
          _
        %s191 = sand.u32 %s40, 1
        %s192 = scalar_lea.sflag [#allocation3], %s191
        %s193 = sand.u32 %s40, 1
        %s194 = smul.addr %s193, 64
        %s195 = scalar_lea.vmem [#allocation2], %s194
        %p196 = pneg %p53
        %p197 = pneg %p50
        %p198 = pneg %p74
        %p199 = pneg %p71
        %p200 = pneg %p102
        %p201 = pneg %p99
        %p202 = scmp.lt.s32.totalorder %s22, 1
        %s203 = scalar_select %p202, %s22, 1
        %p204 = scmp.lt.s32.totalorder %s23, 0
        %s205 = scalar_select %p204, %s23, 0
        %s206 = sadd.s32 %s205, %s203
        %s207 = smul.addr %s206, 8
        %s208 = scalar_lea.vmem %s2, %s207
        %p209 = pneg %p130
        %p210 = pneg %p127
        %p211 = scmp.lt.s32.totalorder %s22, 1
        %s212 = scalar_select %p211, %s22, 1
        %p213 = scmp.lt.s32.totalorder %s23, 0
        %s214 = scalar_select %p213, %s23, 0
        %s215 = sadd.s32 %s214, %s212
        %s216 = smul.addr %s215, 8
        %s217 = scalar_lea.vmem %s3, %s216
        %s218 = smul.u32 2, %s23
        %p219 = scmp.lt.s32.totalorder %s22, 1
        %s220 = scalar_select %p219, %s22, 1
        %p221 = scmp.lt.s32.totalorder %s23, 0
        %s222 = scalar_select %p221, %s23, 0
        %s223 = sadd.s32 %s222, %s220
        %s224 = smul.addr %s223, 8
        %s225 = scalar_lea.vmem %s2, %s224
        %p226 = scmp.lt.s32.totalorder %s22, 1
        %s227 = scalar_select %p226, %s22, 1
        %p228 = scmp.lt.s32.totalorder %s23, 0
        %s229 = scalar_select %p228, %s23, 0
        %s230 = sadd.s32 %s229, %s227
        %s231 = smul.addr %s230, 8
        %s232 = scalar_lea.vmem %s3, %s231
        %v233 = vld [vmem:[%s1] sm:$0xff]
        %v234 = vlaneseq
        %v235 = vshrl.u32 %v234, 7
        %v236 = vadd.s32 %v235, 8
        %v237 = vlaneseq
        %v238 = vand.u32 %v237, 127
        %v239 = vmul.u32 %v238, 2
        %vm240 = vcmp.eq.s32.totalorder %v235, %v239
        %vm241 = vcmp.eq.s32.totalorder %v236, %v239
        %v242 = vsel %vm240, 1, 0
        %v243 = vsel %vm241, 1, 0
        %v244 = vcvt.s32.f32 %v242
        %v245 = vcvt.s32.f32 %v243
        %v246 = vadd.s32 %v239, 1
        %vm247 = vcmp.eq.s32.totalorder %v235, %v246
        %vm248 = vcmp.eq.s32.totalorder %v236, %v246
        %v249 = vsel %vm247, 1, 0
        %v250 = vsel %vm248, 1, 0
        %v251 = vcvt.s32.f32 %v249
        %v252 = vcvt.s32.f32 %v250
        %v253 = vld [vmem:[%s186] sm:$0x1]
        %v254 = vld [vmem:[%s186 + $0x10] sm:$0x1]
        %v255 = vld [vmem:[%s186 + $0x20] sm:$0x1]
        %v256 = vld [vmem:[%s186 + $0x30] sm:$0x1]
        %v257 = vmax.f32 %v253, 0.0
        %v258 = vmax.f32 %v254, 0.0
        %v259 = vmax.f32 %v255, 0.0
        %v260 = vmax.f32 %v256, 0.0
        %v261 = vld [vmem:[%s186 + $0x1] sm:$0x1]
        %v262 = vld [vmem:[%s186 + $0x11] sm:$0x1]
        %v263 = vld [vmem:[%s186 + $0x21] sm:$0x1]
        %v264 = vld [vmem:[%s186 + $0x31] sm:$0x1]
        %v265 = vmax.f32 %v261, 0.0
        %v266 = vmax.f32 %v262, 0.0
        %v267 = vmax.f32 %v263, 0.0
        %v268 = vmax.f32 %v264, 0.0
        %v273 = vrot.slane %v258, 7
        %vm274 = vcmask 1041409
        %v275 = vsel %vm274, %v273, %v257
        %v276 = vrot.slane %v259, 6
        %vm277 = vcmask 1042434
        %v278 = vsel %vm277, %v276, %v275
        %v279 = vrot.slane %v260, 5
        %vm280 = vcmask 1043459
        %v281 = vsel %vm280, %v279, %v278
        %vm282 = vcmask 130048
        %v283 = vsel %vm282, %v281, 0
        %285 = vmatprep.subr.mxu0 0.0
        %286 = vmatpush1.msra.mxu0 %v244
        %287 = vmatprep.subr.mxu0 0.0
        %288 = vmatpush1.msra.mxu0 %v245
        %289 = vmatprep.subr.mxu0 0.0
        %290 = vmatpush1.msra.mxu0 0.0
        %291 = vmatprep.subr.mxu0 0.0
        %292 = vmatpush1.msra.mxu0 0.0
        %293 = vmatprep.subr.mxu0 0.0
        %294 = vmatpush1.msra.mxu0 0.0
        %295 = vmatprep.subr.mxu0 0.0
        %296 = vmatpush1.msra.mxu0 0.0
        %297 = vmatprep.subr.mxu0 0.0
        %298 = vmatpush1.msra.mxu0 0.0
        %299 = vmatprep.subr.mxu0 0.0
        %300 = vmatpush1.msra.mxu0 0.0
        %301 = vmatprep.subr.mxu0 0.0
        %302 = vmatpush1.msra.mxu0 0.0
        %303 = vmatprep.subr.mxu0 0.0
        %304 = vmatpush1.msra.mxu0 0.0
        %305 = vmatprep.subr.mxu0 0.0
        %306 = vmatpush1.msra.mxu0 0.0
        %307 = vmatprep.subr.mxu0 0.0
        %308 = vmatpush1.msra.mxu0 0.0
        %309 = vmatprep.subr.mxu0 0.0
        %310 = vmatpush1.msra.mxu0 0.0
        %311 = vmatprep.subr.mxu0 0.0
        %312 = vmatpush1.msra.mxu0 0.0
        %313 = vmatprep.subr.mxu0 0.0
        %314 = vmatpush1.msra.mxu0 0.0
        %315 = vmatprep.subr.mxu0 0.0
        %316 = vmatpush1.msra.mxu0 0.0
        %317 = vmatprep.subr.mxu0 0.0
        %318 = vmatpush1.msra.mxu0 0.0
        %319 = vmatprep.subr.mxu0 0.0
        %320 = vmatpush1.msra.mxu0 0.0
        %321 = vmatprep.subr.mxu0 0.0
        %322 = vmatpush1.msra.mxu0 0.0
        %323 = vmatprep.subr.mxu0 0.0
        %324 = vmatpush1.msra.mxu0 0.0
        %325 = vmatprep.subr.mxu0 0.0
        %326 = vmatpush1.msra.mxu0 0.0
        %327 = vmatprep.subr.mxu0 0.0
        %328 = vmatpush1.msra.mxu0 0.0
        %329 = vmatprep.subr.mxu0 0.0
        %330 = vmatpush1.msra.mxu0 0.0
        %331 = vmatprep.subr.mxu0 0.0
        %332 = vmatpush1.msra.mxu0 0.0
        %333 = vmatprep.subr.mxu0 0.0
        %334 = vmatpush1.msra.mxu0 0.0
        %335 = vmatprep.subr.mxu0 0.0
        %336 = vmatpush1.msra.mxu0 0.0
        %337 = vmatprep.subr.mxu0 0.0
        %338 = vmatpush1.msra.mxu0 0.0
        %339 = vmatprep.subr.mxu0 0.0
        %340 = vmatpush1.msra.mxu0 0.0
        %341 = vmatprep.subr.mxu0 0.0
        %342 = vmatpush1.msra.mxu0 0.0
        %343 = vmatprep.subr.mxu0 0.0
        %344 = vmatpush1.msra.mxu0 0.0
        %345 = vmatprep.subr.mxu0 0.0
        %346 = vmatpush1.msra.mxu0 0.0
        %347 = vmatprep.subr.mxu0 0.0
        %348 = vmatpush1.msra.mxu0 0.0
        %349 = vmatprep.mubr.f32.mxu0 0.0
        %350 = vmatmul.mubr.f32.gmra.mrb[0].mxu0 %v283
        %v351 = vpop.f32.mrb[0].mxu0
        %v352 = vadd.f32 0.0, %v351
        %v353 = vpop.f32.mrb[0].mxu0
        %354 = vdwg.mxu0
        %v359 = vrot.slane %v266, 7
        %v360 = vsel %vm274, %v359, %v265
        %v361 = vrot.slane %v267, 6
        %v362 = vsel %vm277, %v361, %v360
        %v363 = vrot.slane %v268, 5
        %v364 = vsel %vm280, %v363, %v362
        %v365 = vsel %vm282, %v364, 0
        %367 = vmatprep.subr.mxu0 0.0
        %368 = vmatpush1.msra.mxu0 %v251
        %369 = vmatprep.subr.mxu0 0.0
        %370 = vmatpush1.msra.mxu0 %v252
        %371 = vmatprep.subr.mxu0 0.0
        %372 = vmatpush1.msra.mxu0 0.0
        %373 = vmatprep.subr.mxu0 0.0
        %374 = vmatpush1.msra.mxu0 0.0
        %375 = vmatprep.subr.mxu0 0.0
        %376 = vmatpush1.msra.mxu0 0.0
        %377 = vmatprep.subr.mxu0 0.0
        %378 = vmatpush1.msra.mxu0 0.0
        %379 = vmatprep.subr.mxu0 0.0
        %380 = vmatpush1.msra.mxu0 0.0
        %381 = vmatprep.subr.mxu0 0.0
        %382 = vmatpush1.msra.mxu0 0.0
        %383 = vmatprep.subr.mxu0 0.0
        %384 = vmatpush1.msra.mxu0 0.0
        %385 = vmatprep.subr.mxu0 0.0
        %386 = vmatpush1.msra.mxu0 0.0
        %387 = vmatprep.subr.mxu0 0.0
        %388 = vmatpush1.msra.mxu0 0.0
        %389 = vmatprep.subr.mxu0 0.0
        %390 = vmatpush1.msra.mxu0 0.0
        %391 = vmatprep.subr.mxu0 0.0
        %392 = vmatpush1.msra.mxu0 0.0
        %393 = vmatprep.subr.mxu0 0.0
        %394 = vmatpush1.msra.mxu0 0.0
        %395 = vmatprep.subr.mxu0 0.0
        %396 = vmatpush1.msra.mxu0 0.0
        %397 = vmatprep.subr.mxu0 0.0
        %398 = vmatpush1.msra.mxu0 0.0
        %399 = vmatprep.subr.mxu0 0.0
        %400 = vmatpush1.msra.mxu0 0.0
        %401 = vmatprep.subr.mxu0 0.0
        %402 = vmatpush1.msra.mxu0 0.0
        %403 = vmatprep.subr.mxu0 0.0
        %404 = vmatpush1.msra.mxu0 0.0
        %405 = vmatprep.subr.mxu0 0.0
        %406 = vmatpush1.msra.mxu0 0.0
        %407 = vmatprep.subr.mxu0 0.0
        %408 = vmatpush1.msra.mxu0 0.0
        %409 = vmatprep.subr.mxu0 0.0
        %410 = vmatpush1.msra.mxu0 0.0
        %411 = vmatprep.subr.mxu0 0.0
        %412 = vmatpush1.msra.mxu0 0.0
        %413 = vmatprep.subr.mxu0 0.0
        %414 = vmatpush1.msra.mxu0 0.0
        %415 = vmatprep.subr.mxu0 0.0
        %416 = vmatpush1.msra.mxu0 0.0
        %417 = vmatprep.subr.mxu0 0.0
        %418 = vmatpush1.msra.mxu0 0.0
        %419 = vmatprep.subr.mxu0 0.0
        %420 = vmatpush1.msra.mxu0 0.0
        %421 = vmatprep.subr.mxu0 0.0
        %422 = vmatpush1.msra.mxu0 0.0
        %423 = vmatprep.subr.mxu0 0.0
        %424 = vmatpush1.msra.mxu0 0.0
        %425 = vmatprep.subr.mxu0 0.0
        %426 = vmatpush1.msra.mxu0 0.0
        %427 = vmatprep.subr.mxu0 0.0
        %428 = vmatpush1.msra.mxu0 0.0
        %429 = vmatprep.subr.mxu0 0.0
        %430 = vmatpush1.msra.mxu0 0.0
        %431 = vmatprep.mubr.f32.mxu0 0.0
        %432 = vmatmul.mubr.f32.gmra.mrb[0].mxu0 %v365
        %v433 = vpop.f32.mrb[0].mxu0
        %v434 = vadd.f32 0.0, %v433
        %v435 = vpop.f32.mrb[0].mxu0
        %436 = vdwg.mxu0
        %v438 = vrot.slane %v434, 4
        %vm440 = vcmask 1043456
        %v441 = vsel %vm440, %v352, %v438
        %vm442 = vcmask 64512
        %v444 = vsel %vm442, %v233, 0
        %446 = vmatprep.subr.mxu0 0.0
        %447 = vmatpush1.msra.mxu0 %v441
        %448 = vmatprep.subr.mxu0 0.0
        %449 = vmatpush1.msra.mxu0 0.0
        %450 = vmatprep.subr.mxu0 0.0
        %451 = vmatpush1.msra.mxu0 0.0
        %452 = vmatprep.subr.mxu0 0.0
        %453 = vmatpush1.msra.mxu0 0.0
        %454 = vmatprep.subr.mxu0 0.0
        %455 = vmatpush1.msra.mxu0 0.0
        %456 = vmatprep.subr.mxu0 0.0
        %457 = vmatpush1.msra.mxu0 0.0
        %458 = vmatprep.subr.mxu0 0.0
        %459 = vmatpush1.msra.mxu0 0.0
        %460 = vmatprep.subr.mxu0 0.0
        %461 = vmatpush1.msra.mxu0 0.0
        %462 = vmatprep.subr.mxu0 0.0
        %463 = vmatpush1.msra.mxu0 0.0
        %464 = vmatprep.subr.mxu0 0.0
        %465 = vmatpush1.msra.mxu0 0.0
        %466 = vmatprep.subr.mxu0 0.0
        %467 = vmatpush1.msra.mxu0 0.0
        %468 = vmatprep.subr.mxu0 0.0
        %469 = vmatpush1.msra.mxu0 0.0
        %470 = vmatprep.subr.mxu0 0.0
        %471 = vmatpush1.msra.mxu0 0.0
        %472 = vmatprep.subr.mxu0 0.0
        %473 = vmatpush1.msra.mxu0 0.0
        %474 = vmatprep.subr.mxu0 0.0
        %475 = vmatpush1.msra.mxu0 0.0
        %476 = vmatprep.subr.mxu0 0.0
        %477 = vmatpush1.msra.mxu0 0.0
        %478 = vmatprep.subr.mxu0 0.0
        %479 = vmatpush1.msra.mxu0 0.0
        %480 = vmatprep.subr.mxu0 0.0
        %481 = vmatpush1.msra.mxu0 0.0
        %482 = vmatprep.subr.mxu0 0.0
        %483 = vmatpush1.msra.mxu0 0.0
        %484 = vmatprep.subr.mxu0 0.0
        %485 = vmatpush1.msra.mxu0 0.0
        %486 = vmatprep.subr.mxu0 0.0
        %487 = vmatpush1.msra.mxu0 0.0
        %488 = vmatprep.subr.mxu0 0.0
        %489 = vmatpush1.msra.mxu0 0.0
        %490 = vmatprep.subr.mxu0 0.0
        %491 = vmatpush1.msra.mxu0 0.0
        %492 = vmatprep.subr.mxu0 0.0
        %493 = vmatpush1.msra.mxu0 0.0
        %494 = vmatprep.subr.mxu0 0.0
        %495 = vmatpush1.msra.mxu0 0.0
        %496 = vmatprep.subr.mxu0 0.0
        %497 = vmatpush1.msra.mxu0 0.0
        %498 = vmatprep.subr.mxu0 0.0
        %499 = vmatpush1.msra.mxu0 0.0
        %500 = vmatprep.subr.mxu0 0.0
        %501 = vmatpush1.msra.mxu0 0.0
        %502 = vmatprep.subr.mxu0 0.0
        %503 = vmatpush1.msra.mxu0 0.0
        %504 = vmatprep.subr.mxu0 0.0
        %505 = vmatpush1.msra.mxu0 0.0
        %506 = vmatprep.subr.mxu0 0.0
        %507 = vmatpush1.msra.mxu0 0.0
        %508 = vmatprep.subr.mxu0 0.0
        %509 = vmatpush1.msra.mxu0 0.0
        %510 = vmatprep.mubr.f32.mxu0 0.0
        %511 = vmatmul.mubr.f32.gmra.mrb[0].mxu0 %v444
        %v512 = vpop.f32.mrb[0].mxu0
        %v513 = vadd.f32 0.0, %v512
        %v514 = vpop.f32.mrb[0].mxu0
        %515 = vdwg.mxu0
        %s516 = smul.u32 %s23, 8
        %p517 = scmp.lt.s32.totalorder %s516, 8
        %v518 = vsel %vm442, %v513, 0.0
        %519 = vadd.xlane.f32.xlu0 %v518
        %v520 = vpop.xlane.xlu0 %519
        %s521 = scalar_select %p517, 1, 0
        %v522 = vstv %s521
        %vm523 = vcmp.eq.s32.totalorder %v522, 1
        %v524 = vsel %vm523, %v520, 0.0
        %v525 = vadd.f32 %v524, 0.0
        %v526 = vmul.f32 %v513, %v513
        %v527 = vsel %vm442, %v526, 0.0
        %528 = vadd.xlane.f32.xlu0 %v527
        %v529 = vpop.xlane.xlu0 %528
        %v530 = vsel %vm523, %v529, 0.0
        %v531 = vadd.f32 %v530, 0.0
        %v532 = vld [vmem:[%s186 + $0x2] sm:$0x1]
        %v533 = vld [vmem:[%s186 + $0x12] sm:$0x1]
        %v534 = vld [vmem:[%s186 + $0x22] sm:$0x1]
        %v535 = vld [vmem:[%s186 + $0x32] sm:$0x1]
        %v536 = vmax.f32 %v532, 0.0
        %v537 = vmax.f32 %v533, 0.0
        %v538 = vmax.f32 %v534, 0.0
        %v539 = vmax.f32 %v535, 0.0
        %v540 = vld [vmem:[%s186 + $0x3] sm:$0x1]
        %v541 = vld [vmem:[%s186 + $0x13] sm:$0x1]
        %v542 = vld [vmem:[%s186 + $0x23] sm:$0x1]
        %v543 = vld [vmem:[%s186 + $0x33] sm:$0x1]
        %v544 = vmax.f32 %v540, 0.0
        %v545 = vmax.f32 %v541, 0.0
        %v546 = vmax.f32 %v542, 0.0
        %v547 = vmax.f32 %v543, 0.0
        %v552 = vrot.slane %v537, 7
        %v553 = vsel %vm274, %v552, %v536
        %v554 = vrot.slane %v538, 6
        %v555 = vsel %vm277, %v554, %v553
        %v556 = vrot.slane %v539, 5
        %v557 = vsel %vm280, %v556, %v555
        %v558 = vsel %vm282, %v557, 0
        %560 = vmatprep.subr.mxu0 0.0
        %561 = vmatpush1.msra.mxu0 %v244
        %562 = vmatprep.subr.mxu0 0.0
        %563 = vmatpush1.msra.mxu0 %v245
        %564 = vmatprep.subr.mxu0 0.0
        %565 = vmatpush1.msra.mxu0 0.0
        %566 = vmatprep.subr.mxu0 0.0
        %567 = vmatpush1.msra.mxu0 0.0
        %568 = vmatprep.subr.mxu0 0.0
        %569 = vmatpush1.msra.mxu0 0.0
        %570 = vmatprep.subr.mxu0 0.0
        %571 = vmatpush1.msra.mxu0 0.0
        %572 = vmatprep.subr.mxu0 0.0
        %573 = vmatpush1.msra.mxu0 0.0
        %574 = vmatprep.subr.mxu0 0.0
        %575 = vmatpush1.msra.mxu0 0.0
        %576 = vmatprep.subr.mxu0 0.0
        %577 = vmatpush1.msra.mxu0 0.0
        %578 = vmatprep.subr.mxu0 0.0
        %579 = vmatpush1.msra.mxu0 0.0
        %580 = vmatprep.subr.mxu0 0.0
        %581 = vmatpush1.msra.mxu0 0.0
        %582 = vmatprep.subr.mxu0 0.0
        %583 = vmatpush1.msra.mxu0 0.0
        %584 = vmatprep.subr.mxu0 0.0
        %585 = vmatpush1.msra.mxu0 0.0
        %586 = vmatprep.subr.mxu0 0.0
        %587 = vmatpush1.msra.mxu0 0.0
        %588 = vmatprep.subr.mxu0 0.0
        %589 = vmatpush1.msra.mxu0 0.0
        %590 = vmatprep.subr.mxu0 0.0
        %591 = vmatpush1.msra.mxu0 0.0
        %592 = vmatprep.subr.mxu0 0.0
        %593 = vmatpush1.msra.mxu0 0.0
        %594 = vmatprep.subr.mxu0 0.0
        %595 = vmatpush1.msra.mxu0 0.0
        %596 = vmatprep.subr.mxu0 0.0
        %597 = vmatpush1.msra.mxu0 0.0
        %598 = vmatprep.subr.mxu0 0.0
        %599 = vmatpush1.msra.mxu0 0.0
        %600 = vmatprep.subr.mxu0 0.0
        %601 = vmatpush1.msra.mxu0 0.0
        %602 = vmatprep.subr.mxu0 0.0
        %603 = vmatpush1.msra.mxu0 0.0
        %604 = vmatprep.subr.mxu0 0.0
        %605 = vmatpush1.msra.mxu0 0.0
        %606 = vmatprep.subr.mxu0 0.0
        %607 = vmatpush1.msra.mxu0 0.0
        %608 = vmatprep.subr.mxu0 0.0
        %609 = vmatpush1.msra.mxu0 0.0
        %610 = vmatprep.subr.mxu0 0.0
        %611 = vmatpush1.msra.mxu0 0.0
        %612 = vmatprep.subr.mxu0 0.0
        %613 = vmatpush1.msra.mxu0 0.0
        %614 = vmatprep.subr.mxu0 0.0
        %615 = vmatpush1.msra.mxu0 0.0
        %616 = vmatprep.subr.mxu0 0.0
        %617 = vmatpush1.msra.mxu0 0.0
        %618 = vmatprep.subr.mxu0 0.0
        %619 = vmatpush1.msra.mxu0 0.0
        %620 = vmatprep.subr.mxu0 0.0
        %621 = vmatpush1.msra.mxu0 0.0
        %622 = vmatprep.subr.mxu0 0.0
        %623 = vmatpush1.msra.mxu0 0.0
        %624 = vmatprep.mubr.f32.mxu0 0.0
        %625 = vmatmul.mubr.f32.gmra.mrb[0].mxu0 %v558
        %v626 = vpop.f32.mrb[0].mxu0
        %v627 = vadd.f32 0.0, %v626
        %v628 = vpop.f32.mrb[0].mxu0
        %629 = vdwg.mxu0
        %v634 = vrot.slane %v545, 7
        %v635 = vsel %vm274, %v634, %v544
        %v636 = vrot.slane %v546, 6
        %v637 = vsel %vm277, %v636, %v635
        %v638 = vrot.slane %v547, 5
        %v639 = vsel %vm280, %v638, %v637
        %v640 = vsel %vm282, %v639, 0
        %642 = vmatprep.subr.mxu0 0.0
        %643 = vmatpush1.msra.mxu0 %v251
        %644 = vmatprep.subr.mxu0 0.0
        %645 = vmatpush1.msra.mxu0 %v252
        %646 = vmatprep.subr.mxu0 0.0
        %647 = vmatpush1.msra.mxu0 0.0
        %648 = vmatprep.subr.mxu0 0.0
        %649 = vmatpush1.msra.mxu0 0.0
        %650 = vmatprep.subr.mxu0 0.0
        %651 = vmatpush1.msra.mxu0 0.0
        %652 = vmatprep.subr.mxu0 0.0
        %653 = vmatpush1.msra.mxu0 0.0
        %654 = vmatprep.subr.mxu0 0.0
        %655 = vmatpush1.msra.mxu0 0.0
        %656 = vmatprep.subr.mxu0 0.0
        %657 = vmatpush1.msra.mxu0 0.0
        %658 = vmatprep.subr.mxu0 0.0
        %659 = vmatpush1.msra.mxu0 0.0
        %660 = vmatprep.subr.mxu0 0.0
        %661 = vmatpush1.msra.mxu0 0.0
        %662 = vmatprep.subr.mxu0 0.0
        %663 = vmatpush1.msra.mxu0 0.0
        %664 = vmatprep.subr.mxu0 0.0
        %665 = vmatpush1.msra.mxu0 0.0
        %666 = vmatprep.subr.mxu0 0.0
        %667 = vmatpush1.msra.mxu0 0.0
        %668 = vmatprep.subr.mxu0 0.0
        %669 = vmatpush1.msra.mxu0 0.0
        %670 = vmatprep.subr.mxu0 0.0
        %671 = vmatpush1.msra.mxu0 0.0
        %672 = vmatprep.subr.mxu0 0.0
        %673 = vmatpush1.msra.mxu0 0.0
        %674 = vmatprep.subr.mxu0 0.0
        %675 = vmatpush1.msra.mxu0 0.0
        %676 = vmatprep.subr.mxu0 0.0
        %677 = vmatpush1.msra.mxu0 0.0
        %678 = vmatprep.subr.mxu0 0.0
        %679 = vmatpush1.msra.mxu0 0.0
        %680 = vmatprep.subr.mxu0 0.0
        %681 = vmatpush1.msra.mxu0 0.0
        %682 = vmatprep.subr.mxu0 0.0
        %683 = vmatpush1.msra.mxu0 0.0
        %684 = vmatprep.subr.mxu0 0.0
        %685 = vmatpush1.msra.mxu0 0.0
        %686 = vmatprep.subr.mxu0 0.0
        %687 = vmatpush1.msra.mxu0 0.0
        %688 = vmatprep.subr.mxu0 0.0
        %689 = vmatpush1.msra.mxu0 0.0
        %690 = vmatprep.subr.mxu0 0.0
        %691 = vmatpush1.msra.mxu0 0.0
        %692 = vmatprep.subr.mxu0 0.0
        %693 = vmatpush1.msra.mxu0 0.0
        %694 = vmatprep.subr.mxu0 0.0
        %695 = vmatpush1.msra.mxu0 0.0
        %696 = vmatprep.subr.mxu0 0.0
        %697 = vmatpush1.msra.mxu0 0.0
        %698 = vmatprep.subr.mxu0 0.0
        %699 = vmatpush1.msra.mxu0 0.0
        %700 = vmatprep.subr.mxu0 0.0
        %701 = vmatpush1.msra.mxu0 0.0
        %702 = vmatprep.subr.mxu0 0.0
        %703 = vmatpush1.msra.mxu0 0.0
        %704 = vmatprep.subr.mxu0 0.0
        %705 = vmatpush1.msra.mxu0 0.0
        %706 = vmatprep.mubr.f32.mxu0 0.0
        %707 = vmatmul.mubr.f32.gmra.mrb[0].mxu0 %v640
        %v708 = vpop.f32.mrb[0].mxu0
        %v709 = vadd.f32 0.0, %v708
        %v710 = vpop.f32.mrb[0].mxu0
        %711 = vdwg.mxu0
        %v713 = vrot.slane %v709, 4
        %v715 = vsel %vm440, %v627, %v713
        %716 = vmatprep.subr.mxu0 0.0
        %717 = vmatpush1.msra.mxu0 %v715
        %718 = vmatprep.subr.mxu0 0.0
        %719 = vmatpush1.msra.mxu0 0.0
        %720 = vmatprep.subr.mxu0 0.0
        %721 = vmatpush1.msra.mxu0 0.0
        %722 = vmatprep.subr.mxu0 0.0
        %723 = vmatpush1.msra.mxu0 0.0
        %724 = vmatprep.subr.mxu0 0.0
        %725 = vmatpush1.msra.mxu0 0.0
        %726 = vmatprep.subr.mxu0 0.0
        %727 = vmatpush1.msra.mxu0 0.0
        %728 = vmatprep.subr.mxu0 0.0
        %729 = vmatpush1.msra.mxu0 0.0
        %730 = vmatprep.subr.mxu0 0.0
        %731 = vmatpush1.msra.mxu0 0.0
        %732 = vmatprep.subr.mxu0 0.0
        %733 = vmatpush1.msra.mxu0 0.0
        %734 = vmatprep.subr.mxu0 0.0
        %735 = vmatpush1.msra.mxu0 0.0
        %736 = vmatprep.subr.mxu0 0.0
        %737 = vmatpush1.msra.mxu0 0.0
        %738 = vmatprep.subr.mxu0 0.0
        %739 = vmatpush1.msra.mxu0 0.0
        %740 = vmatprep.subr.mxu0 0.0
        %741 = vmatpush1.msra.mxu0 0.0
        %742 = vmatprep.subr.mxu0 0.0
        %743 = vmatpush1.msra.mxu0 0.0
        %744 = vmatprep.subr.mxu0 0.0
        %745 = vmatpush1.msra.mxu0 0.0
        %746 = vmatprep.subr.mxu0 0.0
        %747 = vmatpush1.msra.mxu0 0.0
        %748 = vmatprep.subr.mxu0 0.0
        %749 = vmatpush1.msra.mxu0 0.0
        %750 = vmatprep.subr.mxu0 0.0
        %751 = vmatpush1.msra.mxu0 0.0
        %752 = vmatprep.subr.mxu0 0.0
        %753 = vmatpush1.msra.mxu0 0.0
        %754 = vmatprep.subr.mxu0 0.0
        %755 = vmatpush1.msra.mxu0 0.0
        %756 = vmatprep.subr.mxu0 0.0
        %757 = vmatpush1.msra.mxu0 0.0
        %758 = vmatprep.subr.mxu0 0.0
        %759 = vmatpush1.msra.mxu0 0.0
        %760 = vmatprep.subr.mxu0 0.0
        %761 = vmatpush1.msra.mxu0 0.0
        %762 = vmatprep.subr.mxu0 0.0
        %763 = vmatpush1.msra.mxu0 0.0
        %764 = vmatprep.subr.mxu0 0.0
        %765 = vmatpush1.msra.mxu0 0.0
        %766 = vmatprep.subr.mxu0 0.0
        %767 = vmatpush1.msra.mxu0 0.0
        %768 = vmatprep.subr.mxu0 0.0
        %769 = vmatpush1.msra.mxu0 0.0
        %770 = vmatprep.subr.mxu0 0.0
        %771 = vmatpush1.msra.mxu0 0.0
        %772 = vmatprep.subr.mxu0 0.0
        %773 = vmatpush1.msra.mxu0 0.0
        %774 = vmatprep.subr.mxu0 0.0
        %775 = vmatpush1.msra.mxu0 0.0
        %776 = vmatprep.subr.mxu0 0.0
        %777 = vmatpush1.msra.mxu0 0.0
        %778 = vmatprep.subr.mxu0 0.0
        %779 = vmatpush1.msra.mxu0 0.0
        %780 = vmatprep.mubr.f32.mxu0 0.0
        %781 = vmatmul.mubr.f32.gmra.mrb[0].mxu0 %v444
        %v782 = vpop.f32.mrb[0].mxu0
        %v783 = vadd.f32 0.0, %v782
        %v784 = vpop.f32.mrb[0].mxu0
        %785 = vdwg.mxu0
        %s786 = sadd.s32 %s516, 1
        %p787 = scmp.lt.s32.totalorder %s786, 8
        %v788 = vsel %vm442, %v783, 0.0
        %789 = vadd.xlane.f32.xlu0 %v788
        %v790 = vpop.xlane.xlu0 %789
        %s791 = scalar_select %p787, 1, 0
        %v792 = vstv %s791
        %vm793 = vcmp.eq.s32.totalorder %v792, 1
        %v794 = vsel %vm793, %v790, 0.0
        %v795 = vadd.f32 %v525, %v794
        %v796 = vmul.f32 %v783, %v783
        %v797 = vsel %vm442, %v796, 0.0
        %798 = vadd.xlane.f32.xlu0 %v797
        %v799 = vpop.xlane.xlu0 %798
        %v800 = vsel %vm793, %v799, 0.0
        %v801 = vadd.f32 %v531, %v800
        %v802 = vld [vmem:[%s186 + $0x4] sm:$0x1]
        %v803 = vld [vmem:[%s186 + $0x14] sm:$0x1]
        %v804 = vld [vmem:[%s186 + $0x24] sm:$0x1]
        %v805 = vld [vmem:[%s186 + $0x34] sm:$0x1]
        %v806 = vmax.f32 %v802, 0.0
        %v807 = vmax.f32 %v803, 0.0
        %v808 = vmax.f32 %v804, 0.0
        %v809 = vmax.f32 %v805, 0.0
        %v810 = vld [vmem:[%s186 + $0x5] sm:$0x1]
        %v811 = vld [vmem:[%s186 + $0x15] sm:$0x1]
        %v812 = vld [vmem:[%s186 + $0x25] sm:$0x1]
        %v813 = vld [vmem:[%s186 + $0x35] sm:$0x1]
        %v814 = vmax.f32 %v810, 0.0
        %v815 = vmax.f32 %v811, 0.0
        %v816 = vmax.f32 %v812, 0.0
        %v817 = vmax.f32 %v813, 0.0
        %v822 = vrot.slane %v807, 7
        %v823 = vsel %vm274, %v822, %v806
        %v824 = vrot.slane %v808, 6
        %v825 = vsel %vm277, %v824, %v823
        %v826 = vrot.slane %v809, 5
        %v827 = vsel %vm280, %v826, %v825
        %v828 = vsel %vm282, %v827, 0
        %830 = vmatprep.subr.mxu0 0.0
        %831 = vmatpush1.msra.mxu0 %v244
        %832 = vmatprep.subr.mxu0 0.0
        %833 = vmatpush1.msra.mxu0 %v245
        %834 = vmatprep.subr.mxu0 0.0
        %835 = vmatpush1.msra.mxu0 0.0
        %836 = vmatprep.subr.mxu0 0.0
        %837 = vmatpush1.msra.mxu0 0.0
        %838 = vmatprep.subr.mxu0 0.0
        %839 = vmatpush1.msra.mxu0 0.0
        %840 = vmatprep.subr.mxu0 0.0
        %841 = vmatpush1.msra.mxu0 0.0
        %842 = vmatprep.subr.mxu0 0.0
        %843 = vmatpush1.msra.mxu0 0.0
        %844 = vmatprep.subr.mxu0 0.0
        %845 = vmatpush1.msra.mxu0 0.0
        %846 = vmatprep.subr.mxu0 0.0
        %847 = vmatpush1.msra.mxu0 0.0
        %848 = vmatprep.subr.mxu0 0.0
        %849 = vmatpush1.msra.mxu0 0.0
        %850 = vmatprep.subr.mxu0 0.0
        %851 = vmatpush1.msra.mxu0 0.0
        %852 = vmatprep.subr.mxu0 0.0
        %853 = vmatpush1.msra.mxu0 0.0
        %854 = vmatprep.subr.mxu0 0.0
        %855 = vmatpush1.msra.mxu0 0.0
        %856 = vmatprep.subr.mxu0 0.0
        %857 = vmatpush1.msra.mxu0 0.0
        %858 = vmatprep.subr.mxu0 0.0
        %859 = vmatpush1.msra.mxu0 0.0
        %860 = vmatprep.subr.mxu0 0.0
        %861 = vmatpush1.msra.mxu0 0.0
        %862 = vmatprep.subr.mxu0 0.0
        %863 = vmatpush1.msra.mxu0 0.0
        %864 = vmatprep.subr.mxu0 0.0
        %865 = vmatpush1.msra.mxu0 0.0
        %866 = vmatprep.subr.mxu0 0.0
        %867 = vmatpush1.msra.mxu0 0.0
        %868 = vmatprep.subr.mxu0 0.0
        %869 = vmatpush1.msra.mxu0 0.0
        %870 = vmatprep.subr.mxu0 0.0
        %871 = vmatpush1.msra.mxu0 0.0
        %872 = vmatprep.subr.mxu0 0.0
        %873 = vmatpush1.msra.mxu0 0.0
        %874 = vmatprep.subr.mxu0 0.0
        %875 = vmatpush1.msra.mxu0 0.0
        %876 = vmatprep.subr.mxu0 0.0
        %877 = vmatpush1.msra.mxu0 0.0
        %878 = vmatprep.subr.mxu0 0.0
        %879 = vmatpush1.msra.mxu0 0.0
        %880 = vmatprep.subr.mxu0 0.0
        %881 = vmatpush1.msra.mxu0 0.0
        %882 = vmatprep.subr.mxu0 0.0
        %883 = vmatpush1.msra.mxu0 0.0
        %884 = vmatprep.subr.mxu0 0.0
        %885 = vmatpush1.msra.mxu0 0.0
        %886 = vmatprep.subr.mxu0 0.0
        %887 = vmatpush1.msra.mxu0 0.0
        %888 = vmatprep.subr.mxu0 0.0
        %889 = vmatpush1.msra.mxu0 0.0
        %890 = vmatprep.subr.mxu0 0.0
        %891 = vmatpush1.msra.mxu0 0.0
        %892 = vmatprep.subr.mxu0 0.0
        %893 = vmatpush1.msra.mxu0 0.0
        %894 = vmatprep.mubr.f32.mxu0 0.0
        %895 = vmatmul.mubr.f32.gmra.mrb[0].mxu0 %v828
        %v896 = vpop.f32.mrb[0].mxu0
        %v897 = vadd.f32 0.0, %v896
        %v898 = vpop.f32.mrb[0].mxu0
        %899 = vdwg.mxu0
        %v904 = vrot.slane %v815, 7
        %v905 = vsel %vm274, %v904, %v814
        %v906 = vrot.slane %v816, 6
        %v907 = vsel %vm277, %v906, %v905
        %v908 = vrot.slane %v817, 5
        %v909 = vsel %vm280, %v908, %v907
        %v910 = vsel %vm282, %v909, 0
        %912 = vmatprep.subr.mxu0 0.0
        %913 = vmatpush1.msra.mxu0 %v251
        %914 = vmatprep.subr.mxu0 0.0
        %915 = vmatpush1.msra.mxu0 %v252
        %916 = vmatprep.subr.mxu0 0.0
        %917 = vmatpush1.msra.mxu0 0.0
        %918 = vmatprep.subr.mxu0 0.0
        %919 = vmatpush1.msra.mxu0 0.0
        %920 = vmatprep.subr.mxu0 0.0
        %921 = vmatpush1.msra.mxu0 0.0
        %922 = vmatprep.subr.mxu0 0.0
        %923 = vmatpush1.msra.mxu0 0.0
        %924 = vmatprep.subr.mxu0 0.0
        %925 = vmatpush1.msra.mxu0 0.0
        %926 = vmatprep.subr.mxu0 0.0
        %927 = vmatpush1.msra.mxu0 0.0
        %928 = vmatprep.subr.mxu0 0.0
        %929 = vmatpush1.msra.mxu0 0.0
        %930 = vmatprep.subr.mxu0 0.0
        %931 = vmatpush1.msra.mxu0 0.0
        %932 = vmatprep.subr.mxu0 0.0
        %933 = vmatpush1.msra.mxu0 0.0
        %934 = vmatprep.subr.mxu0 0.0
        %935 = vmatpush1.msra.mxu0 0.0
        %936 = vmatprep.subr.mxu0 0.0
        %937 = vmatpush1.msra.mxu0 0.0
        %938 = vmatprep.subr.mxu0 0.0
        %939 = vmatpush1.msra.mxu0 0.0
        %940 = vmatprep.subr.mxu0 0.0
        %941 = vmatpush1.msra.mxu0 0.0
        %942 = vmatprep.subr.mxu0 0.0
        %943 = vmatpush1.msra.mxu0 0.0
        %944 = vmatprep.subr.mxu0 0.0
        %945 = vmatpush1.msra.mxu0 0.0
        %946 = vmatprep.subr.mxu0 0.0
        %947 = vmatpush1.msra.mxu0 0.0
        %948 = vmatprep.subr.mxu0 0.0
        %949 = vmatpush1.msra.mxu0 0.0
        %950 = vmatprep.subr.mxu0 0.0
        %951 = vmatpush1.msra.mxu0 0.0
        %952 = vmatprep.subr.mxu0 0.0
        %953 = vmatpush1.msra.mxu0 0.0
        %954 = vmatprep.subr.mxu0 0.0
        %955 = vmatpush1.msra.mxu0 0.0
        %956 = vmatprep.subr.mxu0 0.0
        %957 = vmatpush1.msra.mxu0 0.0
        %958 = vmatprep.subr.mxu0 0.0
        %959 = vmatpush1.msra.mxu0 0.0
        %960 = vmatprep.subr.mxu0 0.0
        %961 = vmatpush1.msra.mxu0 0.0
        %962 = vmatprep.subr.mxu0 0.0
        %963 = vmatpush1.msra.mxu0 0.0
        %964 = vmatprep.subr.mxu0 0.0
        %965 = vmatpush1.msra.mxu0 0.0
        %966 = vmatprep.subr.mxu0 0.0
        %967 = vmatpush1.msra.mxu0 0.0
        %968 = vmatprep.subr.mxu0 0.0
        %969 = vmatpush1.msra.mxu0 0.0
        %970 = vmatprep.subr.mxu0 0.0
        %971 = vmatpush1.msra.mxu0 0.0
        %972 = vmatprep.subr.mxu0 0.0
        %973 = vmatpush1.msra.mxu0 0.0
        %974 = vmatprep.subr.mxu0 0.0
        %975 = vmatpush1.msra.mxu0 0.0
        %976 = vmatprep.mubr.f32.mxu0 0.0
        %977 = vmatmul.mubr.f32.gmra.mrb[0].mxu0 %v910
        %v978 = vpop.f32.mrb[0].mxu0
        %v979 = vadd.f32 0.0, %v978
        %v980 = vpop.f32.mrb[0].mxu0
        %981 = vdwg.mxu0
        %v983 = vrot.slane %v979, 4
        %v985 = vsel %vm440, %v897, %v983
        %986 = vmatprep.subr.mxu0 0.0
        %987 = vmatpush1.msra.mxu0 %v985
        %988 = vmatprep.subr.mxu0 0.0
        %989 = vmatpush1.msra.mxu0 0.0
        %990 = vmatprep.subr.mxu0 0.0
        %991 = vmatpush1.msra.mxu0 0.0
        %992 = vmatprep.subr.mxu0 0.0
        %993 = vmatpush1.msra.mxu0 0.0
        %994 = vmatprep.subr.mxu0 0.0
        %995 = vmatpush1.msra.mxu0 0.0
        %996 = vmatprep.subr.mxu0 0.0
        %997 = vmatpush1.msra.mxu0 0.0
        %998 = vmatprep.subr.mxu0 0.0
        %999 = vmatpush1.msra.mxu0 0.0
        %1000 = vmatprep.subr.mxu0 0.0
        %1001 = vmatpush1.msra.mxu0 0.0
        %1002 = vmatprep.subr.mxu0 0.0
        %1003 = vmatpush1.msra.mxu0 0.0
        %1004 = vmatprep.subr.mxu0 0.0
        %1005 = vmatpush1.msra.mxu0 0.0
        %1006 = vmatprep.subr.mxu0 0.0
        %1007 = vmatpush1.msra.mxu0 0.0
        %1008 = vmatprep.subr.mxu0 0.0
        %1009 = vmatpush1.msra.mxu0 0.0
        %1010 = vmatprep.subr.mxu0 0.0
        %1011 = vmatpush1.msra.mxu0 0.0
        %1012 = vmatprep.subr.mxu0 0.0
        %1013 = vmatpush1.msra.mxu0 0.0
        %1014 = vmatprep.subr.mxu0 0.0
        %1015 = vmatpush1.msra.mxu0 0.0
        %1016 = vmatprep.subr.mxu0 0.0
        %1017 = vmatpush1.msra.mxu0 0.0
        %1018 = vmatprep.subr.mxu0 0.0
        %1019 = vmatpush1.msra.mxu0 0.0
        %1020 = vmatprep.subr.mxu0 0.0
        %1021 = vmatpush1.msra.mxu0 0.0
        %1022 = vmatprep.subr.mxu0 0.0
        %1023 = vmatpush1.msra.mxu0 0.0
        %1024 = vmatprep.subr.mxu0 0.0
        %1025 = vmatpush1.msra.mxu0 0.0
        %1026 = vmatprep.subr.mxu0 0.0
        %1027 = vmatpush1.msra.mxu0 0.0
        %1028 = vmatprep.subr.mxu0 0.0
        %1029 = vmatpush1.msra.mxu0 0.0
        %1030 = vmatprep.subr.mxu0 0.0
        %1031 = vmatpush1.msra.mxu0 0.0
        %1032 = vmatprep.subr.mxu0 0.0
        %1033 = vmatpush1.msra.mxu0 0.0
        %1034 = vmatprep.subr.mxu0 0.0
        %1035 = vmatpush1.msra.mxu0 0.0
        %1036 = vmatprep.subr.mxu0 0.0
        %1037 = vmatpush1.msra.mxu0 0.0
        %1038 = vmatprep.subr.mxu0 0.0
        %1039 = vmatpush1.msra.mxu0 0.0
        %1040 = vmatprep.subr.mxu0 0.0
        %1041 = vmatpush1.msra.mxu0 0.0
        %1042 = vmatprep.subr.mxu0 0.0
        %1043 = vmatpush1.msra.mxu0 0.0
        %1044 = vmatprep.subr.mxu0 0.0
        %1045 = vmatpush1.msra.mxu0 0.0
        %1046 = vmatprep.subr.mxu0 0.0
        %1047 = vmatpush1.msra.mxu0 0.0
        %1048 = vmatprep.subr.mxu0 0.0
        %1049 = vmatpush1.msra.mxu0 0.0
        %1050 = vmatprep.mubr.f32.mxu0 0.0
        %1051 = vmatmul.mubr.f32.gmra.mrb[0].mxu0 %v444
        %v1052 = vpop.f32.mrb[0].mxu0
        %v1053 = vadd.f32 0.0, %v1052
        %v1054 = vpop.f32.mrb[0].mxu0
        %1055 = vdwg.mxu0
        %s1056 = sadd.s32 %s516, 2
        %p1057 = scmp.lt.s32.totalorder %s1056, 8
        %v1058 = vsel %vm442, %v1053, 0.0
        %1059 = vadd.xlane.f32.xlu0 %v1058
        %v1060 = vpop.xlane.xlu0 %1059
        %s1061 = scalar_select %p1057, 1, 0
        %v1062 = vstv %s1061
        %vm1063 = vcmp.eq.s32.totalorder %v1062, 1
        %v1064 = vsel %vm1063, %v1060, 0.0
        %v1065 = vadd.f32 %v795, %v1064
        %v1066 = vmul.f32 %v1053, %v1053
        %v1067 = vsel %vm442, %v1066, 0.0
        %1068 = vadd.xlane.f32.xlu0 %v1067
        %v1069 = vpop.xlane.xlu0 %1068
        %v1070 = vsel %vm1063, %v1069, 0.0
        %v1071 = vadd.f32 %v801, %v1070
        %v1072 = vld [vmem:[%s186 + $0x6] sm:$0x1]
        %v1073 = vld [vmem:[%s186 + $0x16] sm:$0x1]
        %v1074 = vld [vmem:[%s186 + $0x26] sm:$0x1]
        %v1075 = vld [vmem:[%s186 + $0x36] sm:$0x1]
        %v1076 = vmax.f32 %v1072, 0.0
        %v1077 = vmax.f32 %v1073, 0.0
        %v1078 = vmax.f32 %v1074, 0.0
        %v1079 = vmax.f32 %v1075, 0.0
        %v1080 = vld [vmem:[%s186 + $0x7] sm:$0x1]
        %v1081 = vld [vmem:[%s186 + $0x17] sm:$0x1]
        %v1082 = vld [vmem:[%s186 + $0x27] sm:$0x1]
        %v1083 = vld [vmem:[%s186 + $0x37] sm:$0x1]
        %v1084 = vmax.f32 %v1080, 0.0
        %v1085 = vmax.f32 %v1081, 0.0
        %v1086 = vmax.f32 %v1082, 0.0
        %v1087 = vmax.f32 %v1083, 0.0
        %v1092 = vrot.slane %v1077, 7
        %v1093 = vsel %vm274, %v1092, %v1076
        %v1094 = vrot.slane %v1078, 6
        %v1095 = vsel %vm277, %v1094, %v1093
        %v1096 = vrot.slane %v1079, 5
        %v1097 = vsel %vm280, %v1096, %v1095
        %v1098 = vsel %vm282, %v1097, 0
        %1100 = vmatprep.subr.mxu0 0.0
        %1101 = vmatpush1.msra.mxu0 %v244
        %1102 = vmatprep.subr.mxu0 0.0
        %1103 = vmatpush1.msra.mxu0 %v245
        %1104 = vmatprep.subr.mxu0 0.0
        %1105 = vmatpush1.msra.mxu0 0.0
        %1106 = vmatprep.subr.mxu0 0.0
        %1107 = vmatpush1.msra.mxu0 0.0
        %1108 = vmatprep.subr.mxu0 0.0
        %1109 = vmatpush1.msra.mxu0 0.0
        %1110 = vmatprep.subr.mxu0 0.0
        %1111 = vmatpush1.msra.mxu0 0.0
        %1112 = vmatprep.subr.mxu0 0.0
        %1113 = vmatpush1.msra.mxu0 0.0
        %1114 = vmatprep.subr.mxu0 0.0
        %1115 = vmatpush1.msra.mxu0 0.0
        %1116 = vmatprep.subr.mxu0 0.0
        %1117 = vmatpush1.msra.mxu0 0.0
        %1118 = vmatprep.subr.mxu0 0.0
        %1119 = vmatpush1.msra.mxu0 0.0
        %1120 = vmatprep.subr.mxu0 0.0
        %1121 = vmatpush1.msra.mxu0 0.0
        %1122 = vmatprep.subr.mxu0 0.0
        %1123 = vmatpush1.msra.mxu0 0.0
        %1124 = vmatprep.subr.mxu0 0.0
        %1125 = vmatpush1.msra.mxu0 0.0
        %1126 = vmatprep.subr.mxu0 0.0
        %1127 = vmatpush1.msra.mxu0 0.0
        %1128 = vmatprep.subr.mxu0 0.0
        %1129 = vmatpush1.msra.mxu0 0.0
        %1130 = vmatprep.subr.mxu0 0.0
        %1131 = vmatpush1.msra.mxu0 0.0
        %1132 = vmatprep.subr.mxu0 0.0
        %1133 = vmatpush1.msra.mxu0 0.0
        %1134 = vmatprep.subr.mxu0 0.0
        %1135 = vmatpush1.msra.mxu0 0.0
        %1136 = vmatprep.subr.mxu0 0.0
        %1137 = vmatpush1.msra.mxu0 0.0
        %1138 = vmatprep.subr.mxu0 0.0
        %1139 = vmatpush1.msra.mxu0 0.0
        %1140 = vmatprep.subr.mxu0 0.0
        %1141 = vmatpush1.msra.mxu0 0.0
        %1142 = vmatprep.subr.mxu0 0.0
        %1143 = vmatpush1.msra.mxu0 0.0
        %1144 = vmatprep.subr.mxu0 0.0
        %1145 = vmatpush1.msra.mxu0 0.0
        %1146 = vmatprep.subr.mxu0 0.0
        %1147 = vmatpush1.msra.mxu0 0.0
        %1148 = vmatprep.subr.mxu0 0.0
        %1149 = vmatpush1.msra.mxu0 0.0
        %1150 = vmatprep.subr.mxu0 0.0
        %1151 = vmatpush1.msra.mxu0 0.0
        %1152 = vmatprep.subr.mxu0 0.0
        %1153 = vmatpush1.msra.mxu0 0.0
        %1154 = vmatprep.subr.mxu0 0.0
        %1155 = vmatpush1.msra.mxu0 0.0
        %1156 = vmatprep.subr.mxu0 0.0
        %1157 = vmatpush1.msra.mxu0 0.0
        %1158 = vmatprep.subr.mxu0 0.0
        %1159 = vmatpush1.msra.mxu0 0.0
        %1160 = vmatprep.subr.mxu0 0.0
        %1161 = vmatpush1.msra.mxu0 0.0
        %1162 = vmatprep.subr.mxu0 0.0
        %1163 = vmatpush1.msra.mxu0 0.0
        %1164 = vmatprep.mubr.f32.mxu0 0.0
        %1165 = vmatmul.mubr.f32.gmra.mrb[0].mxu0 %v1098
        %v1166 = vpop.f32.mrb[0].mxu0
        %v1167 = vadd.f32 0.0, %v1166
        %v1168 = vpop.f32.mrb[0].mxu0
        %1169 = vdwg.mxu0
        %v1174 = vrot.slane %v1085, 7
        %v1175 = vsel %vm274, %v1174, %v1084
        %v1176 = vrot.slane %v1086, 6
        %v1177 = vsel %vm277, %v1176, %v1175
        %v1178 = vrot.slane %v1087, 5
        %v1179 = vsel %vm280, %v1178, %v1177
        %v1180 = vsel %vm282, %v1179, 0
        %1182 = vmatprep.subr.mxu0 0.0
        %1183 = vmatpush1.msra.mxu0 %v251
        %1184 = vmatprep.subr.mxu0 0.0
        %1185 = vmatpush1.msra.mxu0 %v252
        %1186 = vmatprep.subr.mxu0 0.0
        %1187 = vmatpush1.msra.mxu0 0.0
        %1188 = vmatprep.subr.mxu0 0.0
        %1189 = vmatpush1.msra.mxu0 0.0
        %1190 = vmatprep.subr.mxu0 0.0
        %1191 = vmatpush1.msra.mxu0 0.0
        %1192 = vmatprep.subr.mxu0 0.0
        %1193 = vmatpush1.msra.mxu0 0.0
        %1194 = vmatprep.subr.mxu0 0.0
        %1195 = vmatpush1.msra.mxu0 0.0
        %1196 = vmatprep.subr.mxu0 0.0
        %1197 = vmatpush1.msra.mxu0 0.0
        %1198 = vmatprep.subr.mxu0 0.0
        %1199 = vmatpush1.msra.mxu0 0.0
        %1200 = vmatprep.subr.mxu0 0.0
        %1201 = vmatpush1.msra.mxu0 0.0
        %1202 = vmatprep.subr.mxu0 0.0
        %1203 = vmatpush1.msra.mxu0 0.0
        %1204 = vmatprep.subr.mxu0 0.0
        %1205 = vmatpush1.msra.mxu0 0.0
        %1206 = vmatprep.subr.mxu0 0.0
        %1207 = vmatpush1.msra.mxu0 0.0
        %1208 = vmatprep.subr.mxu0 0.0
        %1209 = vmatpush1.msra.mxu0 0.0
        %1210 = vmatprep.subr.mxu0 0.0
        %1211 = vmatpush1.msra.mxu0 0.0
        %1212 = vmatprep.subr.mxu0 0.0
        %1213 = vmatpush1.msra.mxu0 0.0
        %1214 = vmatprep.subr.mxu0 0.0
        %1215 = vmatpush1.msra.mxu0 0.0
        %1216 = vmatprep.subr.mxu0 0.0
        %1217 = vmatpush1.msra.mxu0 0.0
        %1218 = vmatprep.subr.mxu0 0.0
        %1219 = vmatpush1.msra.mxu0 0.0
        %1220 = vmatprep.subr.mxu0 0.0
        %1221 = vmatpush1.msra.mxu0 0.0
        %1222 = vmatprep.subr.mxu0 0.0
        %1223 = vmatpush1.msra.mxu0 0.0
        %1224 = vmatprep.subr.mxu0 0.0
        %1225 = vmatpush1.msra.mxu0 0.0
        %1226 = vmatprep.subr.mxu0 0.0
        %1227 = vmatpush1.msra.mxu0 0.0
        %1228 = vmatprep.subr.mxu0 0.0
        %1229 = vmatpush1.msra.mxu0 0.0
        %1230 = vmatprep.subr.mxu0 0.0
        %1231 = vmatpush1.msra.mxu0 0.0
        %1232 = vmatprep.subr.mxu0 0.0
        %1233 = vmatpush1.msra.mxu0 0.0
        %1234 = vmatprep.subr.mxu0 0.0
        %1235 = vmatpush1.msra.mxu0 0.0
        %1236 = vmatprep.subr.mxu0 0.0
        %1237 = vmatpush1.msra.mxu0 0.0
        %1238 = vmatprep.subr.mxu0 0.0
        %1239 = vmatpush1.msra.mxu0 0.0
        %1240 = vmatprep.subr.mxu0 0.0
        %1241 = vmatpush1.msra.mxu0 0.0
        %1242 = vmatprep.subr.mxu0 0.0
        %1243 = vmatpush1.msra.mxu0 0.0
        %1244 = vmatprep.subr.mxu0 0.0
        %1245 = vmatpush1.msra.mxu0 0.0
        %1246 = vmatprep.mubr.f32.mxu0 0.0
        %1247 = vmatmul.mubr.f32.gmra.mrb[0].mxu0 %v1180
        %v1248 = vpop.f32.mrb[0].mxu0
        %v1249 = vadd.f32 0.0, %v1248
        %v1250 = vpop.f32.mrb[0].mxu0
        %1251 = vdwg.mxu0
        %v1253 = vrot.slane %v1249, 4
        %v1255 = vsel %vm440, %v1167, %v1253
        %1256 = vmatprep.subr.mxu0 0.0
        %1257 = vmatpush1.msra.mxu0 %v1255
        %1258 = vmatprep.subr.mxu0 0.0
        %1259 = vmatpush1.msra.mxu0 0.0
        %1260 = vmatprep.subr.mxu0 0.0
        %1261 = vmatpush1.msra.mxu0 0.0
        %1262 = vmatprep.subr.mxu0 0.0
        %1263 = vmatpush1.msra.mxu0 0.0
        %1264 = vmatprep.subr.mxu0 0.0
        %1265 = vmatpush1.msra.mxu0 0.0
        %1266 = vmatprep.subr.mxu0 0.0
        %1267 = vmatpush1.msra.mxu0 0.0
        %1268 = vmatprep.subr.mxu0 0.0
        %1269 = vmatpush1.msra.mxu0 0.0
        %1270 = vmatprep.subr.mxu0 0.0
        %1271 = vmatpush1.msra.mxu0 0.0
        %1272 = vmatprep.subr.mxu0 0.0
        %1273 = vmatpush1.msra.mxu0 0.0
        %1274 = vmatprep.subr.mxu0 0.0
        %1275 = vmatpush1.msra.mxu0 0.0
        %1276 = vmatprep.subr.mxu0 0.0
        %1277 = vmatpush1.msra.mxu0 0.0
        %1278 = vmatprep.subr.mxu0 0.0
        %1279 = vmatpush1.msra.mxu0 0.0
        %1280 = vmatprep.subr.mxu0 0.0
        %1281 = vmatpush1.msra.mxu0 0.0
        %1282 = vmatprep.subr.mxu0 0.0
        %1283 = vmatpush1.msra.mxu0 0.0
        %1284 = vmatprep.subr.mxu0 0.0
        %1285 = vmatpush1.msra.mxu0 0.0
        %1286 = vmatprep.subr.mxu0 0.0
        %1287 = vmatpush1.msra.mxu0 0.0
        %1288 = vmatprep.subr.mxu0 0.0
        %1289 = vmatpush1.msra.mxu0 0.0
        %1290 = vmatprep.subr.mxu0 0.0
        %1291 = vmatpush1.msra.mxu0 0.0
        %1292 = vmatprep.subr.mxu0 0.0
        %1293 = vmatpush1.msra.mxu0 0.0
        %1294 = vmatprep.subr.mxu0 0.0
        %1295 = vmatpush1.msra.mxu0 0.0
        %1296 = vmatprep.subr.mxu0 0.0
        %1297 = vmatpush1.msra.mxu0 0.0
        %1298 = vmatprep.subr.mxu0 0.0
        %1299 = vmatpush1.msra.mxu0 0.0
        %1300 = vmatprep.subr.mxu0 0.0
        %1301 = vmatpush1.msra.mxu0 0.0
        %1302 = vmatprep.subr.mxu0 0.0
        %1303 = vmatpush1.msra.mxu0 0.0
        %1304 = vmatprep.subr.mxu0 0.0
        %1305 = vmatpush1.msra.mxu0 0.0
        %1306 = vmatprep.subr.mxu0 0.0
        %1307 = vmatpush1.msra.mxu0 0.0
        %1308 = vmatprep.subr.mxu0 0.0
        %1309 = vmatpush1.msra.mxu0 0.0
        %1310 = vmatprep.subr.mxu0 0.0
        %1311 = vmatpush1.msra.mxu0 0.0
        %1312 = vmatprep.subr.mxu0 0.0
        %1313 = vmatpush1.msra.mxu0 0.0
        %1314 = vmatprep.subr.mxu0 0.0
        %1315 = vmatpush1.msra.mxu0 0.0
        %1316 = vmatprep.subr.mxu0 0.0
        %1317 = vmatpush1.msra.mxu0 0.0
        %1318 = vmatprep.subr.mxu0 0.0
        %1319 = vmatpush1.msra.mxu0 0.0
        %1320 = vmatprep.mubr.f32.mxu0 0.0
        %1321 = vmatmul.mubr.f32.gmra.mrb[0].mxu0 %v444
        %v1322 = vpop.f32.mrb[0].mxu0
        %v1323 = vadd.f32 0.0, %v1322
        %v1324 = vpop.f32.mrb[0].mxu0
        %1325 = vdwg.mxu0
        %s1326 = sadd.s32 %s516, 3
        %p1327 = scmp.lt.s32.totalorder %s1326, 8
        %v1328 = vsel %vm442, %v1323, 0.0
        %1329 = vadd.xlane.f32.xlu0 %v1328
        %v1330 = vpop.xlane.xlu0 %1329
        %s1331 = scalar_select %p1327, 1, 0
        %v1332 = vstv %s1331
        %vm1333 = vcmp.eq.s32.totalorder %v1332, 1
        %v1334 = vsel %vm1333, %v1330, 0.0
        %v1335 = vadd.f32 %v1065, %v1334
        %v1336 = vmul.f32 %v1323, %v1323
        %v1337 = vsel %vm442, %v1336, 0.0
        %1338 = vadd.xlane.f32.xlu0 %v1337
        %v1339 = vpop.xlane.xlu0 %1338
        %v1340 = vsel %vm1333, %v1339, 0.0
        %v1341 = vadd.f32 %v1071, %v1340
        %v1342 = vld [vmem:[%s186 + $0x8] sm:$0x1]
        %v1343 = vld [vmem:[%s186 + $0x18] sm:$0x1]
        %v1344 = vld [vmem:[%s186 + $0x28] sm:$0x1]
        %v1345 = vld [vmem:[%s186 + $0x38] sm:$0x1]
        %v1346 = vmax.f32 %v1342, 0.0
        %v1347 = vmax.f32 %v1343, 0.0
        %v1348 = vmax.f32 %v1344, 0.0
        %v1349 = vmax.f32 %v1345, 0.0
        %v1350 = vld [vmem:[%s186 + $0x9] sm:$0x1]
        %v1351 = vld [vmem:[%s186 + $0x19] sm:$0x1]
        %v1352 = vld [vmem:[%s186 + $0x29] sm:$0x1]
        %v1353 = vld [vmem:[%s186 + $0x39] sm:$0x1]
        %v1354 = vmax.f32 %v1350, 0.0
        %v1355 = vmax.f32 %v1351, 0.0
        %v1356 = vmax.f32 %v1352, 0.0
        %v1357 = vmax.f32 %v1353, 0.0
        %v1362 = vrot.slane %v1347, 7
        %v1363 = vsel %vm274, %v1362, %v1346
        %v1364 = vrot.slane %v1348, 6
        %v1365 = vsel %vm277, %v1364, %v1363
        %v1366 = vrot.slane %v1349, 5
        %v1367 = vsel %vm280, %v1366, %v1365
        %v1368 = vsel %vm282, %v1367, 0
        %1370 = vmatprep.subr.mxu0 0.0
        %1371 = vmatpush1.msra.mxu0 %v244
        %1372 = vmatprep.subr.mxu0 0.0
        %1373 = vmatpush1.msra.mxu0 %v245
        %1374 = vmatprep.subr.mxu0 0.0
        %1375 = vmatpush1.msra.mxu0 0.0
        %1376 = vmatprep.subr.mxu0 0.0
        %1377 = vmatpush1.msra.mxu0 0.0
        %1378 = vmatprep.subr.mxu0 0.0
        %1379 = vmatpush1.msra.mxu0 0.0
        %1380 = vmatprep.subr.mxu0 0.0
        %1381 = vmatpush1.msra.mxu0 0.0
        %1382 = vmatprep.subr.mxu0 0.0
        %1383 = vmatpush1.msra.mxu0 0.0
        %1384 = vmatprep.subr.mxu0 0.0
        %1385 = vmatpush1.msra.mxu0 0.0
        %1386 = vmatprep.subr.mxu0 0.0
        %1387 = vmatpush1.msra.mxu0 0.0
        %1388 = vmatprep.subr.mxu0 0.0
        %1389 = vmatpush1.msra.mxu0 0.0
        %1390 = vmatprep.subr.mxu0 0.0
        %1391 = vmatpush1.msra.mxu0 0.0
        %1392 = vmatprep.subr.mxu0 0.0
        %1393 = vmatpush1.msra.mxu0 0.0
        %1394 = vmatprep.subr.mxu0 0.0
        %1395 = vmatpush1.msra.mxu0 0.0
        %1396 = vmatprep.subr.mxu0 0.0
        %1397 = vmatpush1.msra.mxu0 0.0
        %1398 = vmatprep.subr.mxu0 0.0
        %1399 = vmatpush1.msra.mxu0 0.0
        %1400 = vmatprep.subr.mxu0 0.0
        %1401 = vmatpush1.msra.mxu0 0.0
        %1402 = vmatprep.subr.mxu0 0.0
        %1403 = vmatpush1.msra.mxu0 0.0
        %1404 = vmatprep.subr.mxu0 0.0
        %1405 = vmatpush1.msra.mxu0 0.0
        %1406 = vmatprep.subr.mxu0 0.0
        %1407 = vmatpush1.msra.mxu0 0.0
        %1408 = vmatprep.subr.mxu0 0.0
        %1409 = vmatpush1.msra.mxu0 0.0
        %1410 = vmatprep.subr.mxu0 0.0
        %1411 = vmatpush1.msra.mxu0 0.0
        %1412 = vmatprep.subr.mxu0 0.0
        %1413 = vmatpush1.msra.mxu0 0.0
        %1414 = vmatprep.subr.mxu0 0.0
        %1415 = vmatpush1.msra.mxu0 0.0
        %1416 = vmatprep.subr.mxu0 0.0
        %1417 = vmatpush1.msra.mxu0 0.0
        %1418 = vmatprep.subr.mxu0 0.0
        %1419 = vmatpush1.msra.mxu0 0.0
        %1420 = vmatprep.subr.mxu0 0.0
        %1421 = vmatpush1.msra.mxu0 0.0
        %1422 = vmatprep.subr.mxu0 0.0
        %1423 = vmatpush1.msra.mxu0 0.0
        %1424 = vmatprep.subr.mxu0 0.0
        %1425 = vmatpush1.msra.mxu0 0.0
        %1426 = vmatprep.subr.mxu0 0.0
        %1427 = vmatpush1.msra.mxu0 0.0
        %1428 = vmatprep.subr.mxu0 0.0
        %1429 = vmatpush1.msra.mxu0 0.0
        %1430 = vmatprep.subr.mxu0 0.0
        %1431 = vmatpush1.msra.mxu0 0.0
        %1432 = vmatprep.subr.mxu0 0.0
        %1433 = vmatpush1.msra.mxu0 0.0
        %1434 = vmatprep.mubr.f32.mxu0 0.0
        %1435 = vmatmul.mubr.f32.gmra.mrb[0].mxu0 %v1368
        %v1436 = vpop.f32.mrb[0].mxu0
        %v1437 = vadd.f32 0.0, %v1436
        %v1438 = vpop.f32.mrb[0].mxu0
        %1439 = vdwg.mxu0
        %v1444 = vrot.slane %v1355, 7
        %v1445 = vsel %vm274, %v1444, %v1354
        %v1446 = vrot.slane %v1356, 6
        %v1447 = vsel %vm277, %v1446, %v1445
        %v1448 = vrot.slane %v1357, 5
        %v1449 = vsel %vm280, %v1448, %v1447
        %v1450 = vsel %vm282, %v1449, 0
        %1452 = vmatprep.subr.mxu0 0.0
        %1453 = vmatpush1.msra.mxu0 %v251
        %1454 = vmatprep.subr.mxu0 0.0
        %1455 = vmatpush1.msra.mxu0 %v252
        %1456 = vmatprep.subr.mxu0 0.0
        %1457 = vmatpush1.msra.mxu0 0.0
        %1458 = vmatprep.subr.mxu0 0.0
        %1459 = vmatpush1.msra.mxu0 0.0
        %1460 = vmatprep.subr.mxu0 0.0
        %1461 = vmatpush1.msra.mxu0 0.0
        %1462 = vmatprep.subr.mxu0 0.0
        %1463 = vmatpush1.msra.mxu0 0.0
        %1464 = vmatprep.subr.mxu0 0.0
        %1465 = vmatpush1.msra.mxu0 0.0
        %1466 = vmatprep.subr.mxu0 0.0
        %1467 = vmatpush1.msra.mxu0 0.0
        %1468 = vmatprep.subr.mxu0 0.0
        %1469 = vmatpush1.msra.mxu0 0.0
        %1470 = vmatprep.subr.mxu0 0.0
        %1471 = vmatpush1.msra.mxu0 0.0
        %1472 = vmatprep.subr.mxu0 0.0
        %1473 = vmatpush1.msra.mxu0 0.0
        %1474 = vmatprep.subr.mxu0 0.0
        %1475 = vmatpush1.msra.mxu0 0.0
        %1476 = vmatprep.subr.mxu0 0.0
        %1477 = vmatpush1.msra.mxu0 0.0
        %1478 = vmatprep.subr.mxu0 0.0
        %1479 = vmatpush1.msra.mxu0 0.0
        %1480 = vmatprep.subr.mxu0 0.0
        %1481 = vmatpush1.msra.mxu0 0.0
        %1482 = vmatprep.subr.mxu0 0.0
        %1483 = vmatpush1.msra.mxu0 0.0
        %1484 = vmatprep.subr.mxu0 0.0
        %1485 = vmatpush1.msra.mxu0 0.0
        %1486 = vmatprep.subr.mxu0 0.0
        %1487 = vmatpush1.msra.mxu0 0.0
        %1488 = vmatprep.subr.mxu0 0.0
        %1489 = vmatpush1.msra.mxu0 0.0
        %1490 = vmatprep.subr.mxu0 0.0
        %1491 = vmatpush1.msra.mxu0 0.0
        %1492 = vmatprep.subr.mxu0 0.0
        %1493 = vmatpush1.msra.mxu0 0.0
        %1494 = vmatprep.subr.mxu0 0.0
        %1495 = vmatpush1.msra.mxu0 0.0
        %1496 = vmatprep.subr.mxu0 0.0
        %1497 = vmatpush1.msra.mxu0 0.0
        %1498 = vmatprep.subr.mxu0 0.0
        %1499 = vmatpush1.msra.mxu0 0.0
        %1500 = vmatprep.subr.mxu0 0.0
        %1501 = vmatpush1.msra.mxu0 0.0
        %1502 = vmatprep.subr.mxu0 0.0
        %1503 = vmatpush1.msra.mxu0 0.0
        %1504 = vmatprep.subr.mxu0 0.0
        %1505 = vmatpush1.msra.mxu0 0.0
        %1506 = vmatprep.subr.mxu0 0.0
        %1507 = vmatpush1.msra.mxu0 0.0
        %1508 = vmatprep.subr.mxu0 0.0
        %1509 = vmatpush1.msra.mxu0 0.0
        %1510 = vmatprep.subr.mxu0 0.0
        %1511 = vmatpush1.msra.mxu0 0.0
        %1512 = vmatprep.subr.mxu0 0.0
        %1513 = vmatpush1.msra.mxu0 0.0
        %1514 = vmatprep.subr.mxu0 0.0
        %1515 = vmatpush1.msra.mxu0 0.0
        %1516 = vmatprep.mubr.f32.mxu0 0.0
        %1517 = vmatmul.mubr.f32.gmra.mrb[0].mxu0 %v1450
        %v1518 = vpop.f32.mrb[0].mxu0
        %v1519 = vadd.f32 0.0, %v1518
        %v1520 = vpop.f32.mrb[0].mxu0
        %1521 = vdwg.mxu0
        %v1523 = vrot.slane %v1519, 4
        %v1525 = vsel %vm440, %v1437, %v1523
        %1526 = vmatprep.subr.mxu0 0.0
        %1527 = vmatpush1.msra.mxu0 %v1525
        %1528 = vmatprep.subr.mxu0 0.0
        %1529 = vmatpush1.msra.mxu0 0.0
        %1530 = vmatprep.subr.mxu0 0.0
        %1531 = vmatpush1.msra.mxu0 0.0
        %1532 = vmatprep.subr.mxu0 0.0
        %1533 = vmatpush1.msra.mxu0 0.0
        %1534 = vmatprep.subr.mxu0 0.0
        %1535 = vmatpush1.msra.mxu0 0.0
        %1536 = vmatprep.subr.mxu0 0.0
        %1537 = vmatpush1.msra.mxu0 0.0
        %1538 = vmatprep.subr.mxu0 0.0
        %1539 = vmatpush1.msra.mxu0 0.0
        %1540 = vmatprep.subr.mxu0 0.0
        %1541 = vmatpush1.msra.mxu0 0.0
        %1542 = vmatprep.subr.mxu0 0.0
        %1543 = vmatpush1.msra.mxu0 0.0
        %1544 = vmatprep.subr.mxu0 0.0
        %1545 = vmatpush1.msra.mxu0 0.0
        %1546 = vmatprep.subr.mxu0 0.0
        %1547 = vmatpush1.msra.mxu0 0.0
        %1548 = vmatprep.subr.mxu0 0.0
        %1549 = vmatpush1.msra.mxu0 0.0
        %1550 = vmatprep.subr.mxu0 0.0
        %1551 = vmatpush1.msra.mxu0 0.0
        %1552 = vmatprep.subr.mxu0 0.0
        %1553 = vmatpush1.msra.mxu0 0.0
        %1554 = vmatprep.subr.mxu0 0.0
        %1555 = vmatpush1.msra.mxu0 0.0
        %1556 = vmatprep.subr.mxu0 0.0
        %1557 = vmatpush1.msra.mxu0 0.0
        %1558 = vmatprep.subr.mxu0 0.0
        %1559 = vmatpush1.msra.mxu0 0.0
        %1560 = vmatprep.subr.mxu0 0.0
        %1561 = vmatpush1.msra.mxu0 0.0
        %1562 = vmatprep.subr.mxu0 0.0
        %1563 = vmatpush1.msra.mxu0 0.0
        %1564 = vmatprep.subr.mxu0 0.0
        %1565 = vmatpush1.msra.mxu0 0.0
        %1566 = vmatprep.subr.mxu0 0.0
        %1567 = vmatpush1.msra.mxu0 0.0
        %1568 = vmatprep.subr.mxu0 0.0
        %1569 = vmatpush1.msra.mxu0 0.0
        %1570 = vmatprep.subr.mxu0 0.0
        %1571 = vmatpush1.msra.mxu0 0.0
        %1572 = vmatprep.subr.mxu0 0.0
        %1573 = vmatpush1.msra.mxu0 0.0
        %1574 = vmatprep.subr.mxu0 0.0
        %1575 = vmatpush1.msra.mxu0 0.0
        %1576 = vmatprep.subr.mxu0 0.0
        %1577 = vmatpush1.msra.mxu0 0.0
        %1578 = vmatprep.subr.mxu0 0.0
        %1579 = vmatpush1.msra.mxu0 0.0
        %1580 = vmatprep.subr.mxu0 0.0
        %1581 = vmatpush1.msra.mxu0 0.0
        %1582 = vmatprep.subr.mxu0 0.0
        %1583 = vmatpush1.msra.mxu0 0.0
        %1584 = vmatprep.subr.mxu0 0.0
        %1585 = vmatpush1.msra.mxu0 0.0
        %1586 = vmatprep.subr.mxu0 0.0
        %1587 = vmatpush1.msra.mxu0 0.0
        %1588 = vmatprep.subr.mxu0 0.0
        %1589 = vmatpush1.msra.mxu0 0.0
        %1590 = vmatprep.mubr.f32.mxu0 0.0
        %1591 = vmatmul.mubr.f32.gmra.mrb[0].mxu0 %v444
        %v1592 = vpop.f32.mrb[0].mxu0
        %v1593 = vadd.f32 0.0, %v1592
        %v1594 = vpop.f32.mrb[0].mxu0
        %1595 = vdwg.mxu0
        %s1596 = sadd.s32 %s516, 4
        %p1597 = scmp.lt.s32.totalorder %s1596, 8
        %v1598 = vsel %vm442, %v1593, 0.0
        %1599 = vadd.xlane.f32.xlu0 %v1598
        %v1600 = vpop.xlane.xlu0 %1599
        %s1601 = scalar_select %p1597, 1, 0
        %v1602 = vstv %s1601
        %vm1603 = vcmp.eq.s32.totalorder %v1602, 1
        %v1604 = vsel %vm1603, %v1600, 0.0
        %v1605 = vadd.f32 %v1335, %v1604
        %v1606 = vmul.f32 %v1593, %v1593
        %v1607 = vsel %vm442, %v1606, 0.0
        %1608 = vadd.xlane.f32.xlu0 %v1607
        %v1609 = vpop.xlane.xlu0 %1608
        %v1610 = vsel %vm1603, %v1609, 0.0
        %v1611 = vadd.f32 %v1341, %v1610
        %v1612 = vld [vmem:[%s186 + $0xa] sm:$0x1]
        %v1613 = vld [vmem:[%s186 + $0x1a] sm:$0x1]
        %v1614 = vld [vmem:[%s186 + $0x2a] sm:$0x1]
        %v1615 = vld [vmem:[%s186 + $0x3a] sm:$0x1]
        %v1616 = vmax.f32 %v1612, 0.0
        %v1617 = vmax.f32 %v1613, 0.0
        %v1618 = vmax.f32 %v1614, 0.0
        %v1619 = vmax.f32 %v1615, 0.0
        %v1620 = vld [vmem:[%s186 + $0xb] sm:$0x1]
        %v1621 = vld [vmem:[%s186 + $0x1b] sm:$0x1]
        %v1622 = vld [vmem:[%s186 + $0x2b] sm:$0x1]
        %v1623 = vld [vmem:[%s186 + $0x3b] sm:$0x1]
        %v1624 = vmax.f32 %v1620, 0.0
        %v1625 = vmax.f32 %v1621, 0.0
        %v1626 = vmax.f32 %v1622, 0.0
        %v1627 = vmax.f32 %v1623, 0.0
        %v1632 = vrot.slane %v1617, 7
        %v1633 = vsel %vm274, %v1632, %v1616
        %v1634 = vrot.slane %v1618, 6
        %v1635 = vsel %vm277, %v1634, %v1633
        %v1636 = vrot.slane %v1619, 5
        %v1637 = vsel %vm280, %v1636, %v1635
        %v1638 = vsel %vm282, %v1637, 0
        %1640 = vmatprep.subr.mxu0 0.0
        %1641 = vmatpush1.msra.mxu0 %v244
        %1642 = vmatprep.subr.mxu0 0.0
        %1643 = vmatpush1.msra.mxu0 %v245
        %1644 = vmatprep.subr.mxu0 0.0
        %1645 = vmatpush1.msra.mxu0 0.0
        %1646 = vmatprep.subr.mxu0 0.0
        %1647 = vmatpush1.msra.mxu0 0.0
        %1648 = vmatprep.subr.mxu0 0.0
        %1649 = vmatpush1.msra.mxu0 0.0
        %1650 = vmatprep.subr.mxu0 0.0
        %1651 = vmatpush1.msra.mxu0 0.0
        %1652 = vmatprep.subr.mxu0 0.0
        %1653 = vmatpush1.msra.mxu0 0.0
        %1654 = vmatprep.subr.mxu0 0.0
        %1655 = vmatpush1.msra.mxu0 0.0
        %1656 = vmatprep.subr.mxu0 0.0
        %1657 = vmatpush1.msra.mxu0 0.0
        %1658 = vmatprep.subr.mxu0 0.0
        %1659 = vmatpush1.msra.mxu0 0.0
        %1660 = vmatprep.subr.mxu0 0.0
        %1661 = vmatpush1.msra.mxu0 0.0
        %1662 = vmatprep.subr.mxu0 0.0
        %1663 = vmatpush1.msra.mxu0 0.0
        %1664 = vmatprep.subr.mxu0 0.0
        %1665 = vmatpush1.msra.mxu0 0.0
        %1666 = vmatprep.subr.mxu0 0.0
        %1667 = vmatpush1.msra.mxu0 0.0
        %1668 = vmatprep.subr.mxu0 0.0
        %1669 = vmatpush1.msra.mxu0 0.0
        %1670 = vmatprep.subr.mxu0 0.0
        %1671 = vmatpush1.msra.mxu0 0.0
        %1672 = vmatprep.subr.mxu0 0.0
        %1673 = vmatpush1.msra.mxu0 0.0
        %1674 = vmatprep.subr.mxu0 0.0
        %1675 = vmatpush1.msra.mxu0 0.0
        %1676 = vmatprep.subr.mxu0 0.0
        %1677 = vmatpush1.msra.mxu0 0.0
        %1678 = vmatprep.subr.mxu0 0.0
        %1679 = vmatpush1.msra.mxu0 0.0
        %1680 = vmatprep.subr.mxu0 0.0
        %1681 = vmatpush1.msra.mxu0 0.0
        %1682 = vmatprep.subr.mxu0 0.0
        %1683 = vmatpush1.msra.mxu0 0.0
        %1684 = vmatprep.subr.mxu0 0.0
        %1685 = vmatpush1.msra.mxu0 0.0
        %1686 = vmatprep.subr.mxu0 0.0
        %1687 = vmatpush1.msra.mxu0 0.0
        %1688 = vmatprep.subr.mxu0 0.0
        %1689 = vmatpush1.msra.mxu0 0.0
        %1690 = vmatprep.subr.mxu0 0.0
        %1691 = vmatpush1.msra.mxu0 0.0
        %1692 = vmatprep.subr.mxu0 0.0
        %1693 = vmatpush1.msra.mxu0 0.0
        %1694 = vmatprep.subr.mxu0 0.0
        %1695 = vmatpush1.msra.mxu0 0.0
        %1696 = vmatprep.subr.mxu0 0.0
        %1697 = vmatpush1.msra.mxu0 0.0
        %1698 = vmatprep.subr.mxu0 0.0
        %1699 = vmatpush1.msra.mxu0 0.0
        %1700 = vmatprep.subr.mxu0 0.0
        %1701 = vmatpush1.msra.mxu0 0.0
        %1702 = vmatprep.subr.mxu0 0.0
        %1703 = vmatpush1.msra.mxu0 0.0
        %1704 = vmatprep.mubr.f32.mxu0 0.0
        %1705 = vmatmul.mubr.f32.gmra.mrb[0].mxu0 %v1638
        %v1706 = vpop.f32.mrb[0].mxu0
        %v1707 = vadd.f32 0.0, %v1706
        %v1708 = vpop.f32.mrb[0].mxu0
        %1709 = vdwg.mxu0
        %v1714 = vrot.slane %v1625, 7
        %v1715 = vsel %vm274, %v1714, %v1624
        %v1716 = vrot.slane %v1626, 6
        %v1717 = vsel %vm277, %v1716, %v1715
        %v1718 = vrot.slane %v1627, 5
        %v1719 = vsel %vm280, %v1718, %v1717
        %v1720 = vsel %vm282, %v1719, 0
        %1722 = vmatprep.subr.mxu0 0.0
        %1723 = vmatpush1.msra.mxu0 %v251
        %1724 = vmatprep.subr.mxu0 0.0
        %1725 = vmatpush1.msra.mxu0 %v252
        %1726 = vmatprep.subr.mxu0 0.0
        %1727 = vmatpush1.msra.mxu0 0.0
        %1728 = vmatprep.subr.mxu0 0.0
        %1729 = vmatpush1.msra.mxu0 0.0
        %1730 = vmatprep.subr.mxu0 0.0
        %1731 = vmatpush1.msra.mxu0 0.0
        %1732 = vmatprep.subr.mxu0 0.0
        %1733 = vmatpush1.msra.mxu0 0.0
        %1734 = vmatprep.subr.mxu0 0.0
        %1735 = vmatpush1.msra.mxu0 0.0
        %1736 = vmatprep.subr.mxu0 0.0
        %1737 = vmatpush1.msra.mxu0 0.0
        %1738 = vmatprep.subr.mxu0 0.0
        %1739 = vmatpush1.msra.mxu0 0.0
        %1740 = vmatprep.subr.mxu0 0.0
        %1741 = vmatpush1.msra.mxu0 0.0
        %1742 = vmatprep.subr.mxu0 0.0
        %1743 = vmatpush1.msra.mxu0 0.0
        %1744 = vmatprep.subr.mxu0 0.0
        %1745 = vmatpush1.msra.mxu0 0.0
        %1746 = vmatprep.subr.mxu0 0.0
        %1747 = vmatpush1.msra.mxu0 0.0
        %1748 = vmatprep.subr.mxu0 0.0
        %1749 = vmatpush1.msra.mxu0 0.0
        %1750 = vmatprep.subr.mxu0 0.0
        %1751 = vmatpush1.msra.mxu0 0.0
        %1752 = vmatprep.subr.mxu0 0.0
        %1753 = vmatpush1.msra.mxu0 0.0
        %1754 = vmatprep.subr.mxu0 0.0
        %1755 = vmatpush1.msra.mxu0 0.0
        %1756 = vmatprep.subr.mxu0 0.0
        %1757 = vmatpush1.msra.mxu0 0.0
        %1758 = vmatprep.subr.mxu0 0.0
        %1759 = vmatpush1.msra.mxu0 0.0
        %1760 = vmatprep.subr.mxu0 0.0
        %1761 = vmatpush1.msra.mxu0 0.0
        %1762 = vmatprep.subr.mxu0 0.0
        %1763 = vmatpush1.msra.mxu0 0.0
        %1764 = vmatprep.subr.mxu0 0.0
        %1765 = vmatpush1.msra.mxu0 0.0
        %1766 = vmatprep.subr.mxu0 0.0
        %1767 = vmatpush1.msra.mxu0 0.0
        %1768 = vmatprep.subr.mxu0 0.0
        %1769 = vmatpush1.msra.mxu0 0.0
        %1770 = vmatprep.subr.mxu0 0.0
        %1771 = vmatpush1.msra.mxu0 0.0
        %1772 = vmatprep.subr.mxu0 0.0
        %1773 = vmatpush1.msra.mxu0 0.0
        %1774 = vmatprep.subr.mxu0 0.0
        %1775 = vmatpush1.msra.mxu0 0.0
        %1776 = vmatprep.subr.mxu0 0.0
        %1777 = vmatpush1.msra.mxu0 0.0
        %1778 = vmatprep.subr.mxu0 0.0
        %1779 = vmatpush1.msra.mxu0 0.0
        %1780 = vmatprep.subr.mxu0 0.0
        %1781 = vmatpush1.msra.mxu0 0.0
        %1782 = vmatprep.subr.mxu0 0.0
        %1783 = vmatpush1.msra.mxu0 0.0
        %1784 = vmatprep.subr.mxu0 0.0
        %1785 = vmatpush1.msra.mxu0 0.0
        %1786 = vmatprep.mubr.f32.mxu0 0.0
        %1787 = vmatmul.mubr.f32.gmra.mrb[0].mxu0 %v1720
        %v1788 = vpop.f32.mrb[0].mxu0
        %v1789 = vadd.f32 0.0, %v1788
        %v1790 = vpop.f32.mrb[0].mxu0
        %1791 = vdwg.mxu0
        %v1793 = vrot.slane %v1789, 4
        %v1795 = vsel %vm440, %v1707, %v1793
        %1796 = vmatprep.subr.mxu0 0.0
        %1797 = vmatpush1.msra.mxu0 %v1795
        %1798 = vmatprep.subr.mxu0 0.0
        %1799 = vmatpush1.msra.mxu0 0.0
        %1800 = vmatprep.subr.mxu0 0.0
        %1801 = vmatpush1.msra.mxu0 0.0
        %1802 = vmatprep.subr.mxu0 0.0
        %1803 = vmatpush1.msra.mxu0 0.0
        %1804 = vmatprep.subr.mxu0 0.0
        %1805 = vmatpush1.msra.mxu0 0.0
        %1806 = vmatprep.subr.mxu0 0.0
        %1807 = vmatpush1.msra.mxu0 0.0
        %1808 = vmatprep.subr.mxu0 0.0
        %1809 = vmatpush1.msra.mxu0 0.0
        %1810 = vmatprep.subr.mxu0 0.0
        %1811 = vmatpush1.msra.mxu0 0.0
        %1812 = vmatprep.subr.mxu0 0.0
        %1813 = vmatpush1.msra.mxu0 0.0
        %1814 = vmatprep.subr.mxu0 0.0
        %1815 = vmatpush1.msra.mxu0 0.0
        %1816 = vmatprep.subr.mxu0 0.0
        %1817 = vmatpush1.msra.mxu0 0.0
        %1818 = vmatprep.subr.mxu0 0.0
        %1819 = vmatpush1.msra.mxu0 0.0
        %1820 = vmatprep.subr.mxu0 0.0
        %1821 = vmatpush1.msra.mxu0 0.0
        %1822 = vmatprep.subr.mxu0 0.0
        %1823 = vmatpush1.msra.mxu0 0.0
        %1824 = vmatprep.subr.mxu0 0.0
        %1825 = vmatpush1.msra.mxu0 0.0
        %1826 = vmatprep.subr.mxu0 0.0
        %1827 = vmatpush1.msra.mxu0 0.0
        %1828 = vmatprep.subr.mxu0 0.0
        %1829 = vmatpush1.msra.mxu0 0.0
        %1830 = vmatprep.subr.mxu0 0.0
        %1831 = vmatpush1.msra.mxu0 0.0
        %1832 = vmatprep.subr.mxu0 0.0
        %1833 = vmatpush1.msra.mxu0 0.0
        %1834 = vmatprep.subr.mxu0 0.0
        %1835 = vmatpush1.msra.mxu0 0.0
        %1836 = vmatprep.subr.mxu0 0.0
        %1837 = vmatpush1.msra.mxu0 0.0
        %1838 = vmatprep.subr.mxu0 0.0
        %1839 = vmatpush1.msra.mxu0 0.0
        %1840 = vmatprep.subr.mxu0 0.0
        %1841 = vmatpush1.msra.mxu0 0.0
        %1842 = vmatprep.subr.mxu0 0.0
        %1843 = vmatpush1.msra.mxu0 0.0
        %1844 = vmatprep.subr.mxu0 0.0
        %1845 = vmatpush1.msra.mxu0 0.0
        %1846 = vmatprep.subr.mxu0 0.0
        %1847 = vmatpush1.msra.mxu0 0.0
        %1848 = vmatprep.subr.mxu0 0.0
        %1849 = vmatpush1.msra.mxu0 0.0
        %1850 = vmatprep.subr.mxu0 0.0
        %1851 = vmatpush1.msra.mxu0 0.0
        %1852 = vmatprep.subr.mxu0 0.0
        %1853 = vmatpush1.msra.mxu0 0.0
        %1854 = vmatprep.subr.mxu0 0.0
        %1855 = vmatpush1.msra.mxu0 0.0
        %1856 = vmatprep.subr.mxu0 0.0
        %1857 = vmatpush1.msra.mxu0 0.0
        %1858 = vmatprep.subr.mxu0 0.0
        %1859 = vmatpush1.msra.mxu0 0.0
        %1860 = vmatprep.mubr.f32.mxu0 0.0
        %1861 = vmatmul.mubr.f32.gmra.mrb[0].mxu0 %v444
        %v1862 = vpop.f32.mrb[0].mxu0
        %v1863 = vadd.f32 0.0, %v1862
        %v1864 = vpop.f32.mrb[0].mxu0
        %1865 = vdwg.mxu0
        %s1866 = sadd.s32 %s516, 5
        %p1867 = scmp.lt.s32.totalorder %s1866, 8
        %v1868 = vsel %vm442, %v1863, 0.0
        %1869 = vadd.xlane.f32.xlu0 %v1868
        %v1870 = vpop.xlane.xlu0 %1869
        %s1871 = scalar_select %p1867, 1, 0
        %v1872 = vstv %s1871
        %vm1873 = vcmp.eq.s32.totalorder %v1872, 1
        %v1874 = vsel %vm1873, %v1870, 0.0
        %v1875 = vadd.f32 %v1605, %v1874
        %v1876 = vmul.f32 %v1863, %v1863
        %v1877 = vsel %vm442, %v1876, 0.0
        %1878 = vadd.xlane.f32.xlu0 %v1877
        %v1879 = vpop.xlane.xlu0 %1878
        %v1880 = vsel %vm1873, %v1879, 0.0
        %v1881 = vadd.f32 %v1611, %v1880
        %v1882 = vld [vmem:[%s186 + $0xc] sm:$0x1]
        %v1883 = vld [vmem:[%s186 + $0x1c] sm:$0x1]
        %v1884 = vld [vmem:[%s186 + $0x2c] sm:$0x1]
        %v1885 = vld [vmem:[%s186 + $0x3c] sm:$0x1]
        %v1886 = vmax.f32 %v1882, 0.0
        %v1887 = vmax.f32 %v1883, 0.0
        %v1888 = vmax.f32 %v1884, 0.0
        %v1889 = vmax.f32 %v1885, 0.0
        %v1890 = vld [vmem:[%s186 + $0xd] sm:$0x1]
        %v1891 = vld [vmem:[%s186 + $0x1d] sm:$0x1]
        %v1892 = vld [vmem:[%s186 + $0x2d] sm:$0x1]
        %v1893 = vld [vmem:[%s186 + $0x3d] sm:$0x1]
        %v1894 = vmax.f32 %v1890, 0.0
        %v1895 = vmax.f32 %v1891, 0.0
        %v1896 = vmax.f32 %v1892, 0.0
        %v1897 = vmax.f32 %v1893, 0.0
        %v1902 = vrot.slane %v1887, 7
        %v1903 = vsel %vm274, %v1902, %v1886
        %v1904 = vrot.slane %v1888, 6
        %v1905 = vsel %vm277, %v1904, %v1903
        %v1906 = vrot.slane %v1889, 5
        %v1907 = vsel %vm280, %v1906, %v1905
        %v1908 = vsel %vm282, %v1907, 0
        %1910 = vmatprep.subr.mxu0 0.0
        %1911 = vmatpush1.msra.mxu0 %v244
        %1912 = vmatprep.subr.mxu0 0.0
        %1913 = vmatpush1.msra.mxu0 %v245
        %1914 = vmatprep.subr.mxu0 0.0
        %1915 = vmatpush1.msra.mxu0 0.0
        %1916 = vmatprep.subr.mxu0 0.0
        %1917 = vmatpush1.msra.mxu0 0.0
        %1918 = vmatprep.subr.mxu0 0.0
        %1919 = vmatpush1.msra.mxu0 0.0
        %1920 = vmatprep.subr.mxu0 0.0
        %1921 = vmatpush1.msra.mxu0 0.0
        %1922 = vmatprep.subr.mxu0 0.0
        %1923 = vmatpush1.msra.mxu0 0.0
        %1924 = vmatprep.subr.mxu0 0.0
        %1925 = vmatpush1.msra.mxu0 0.0
        %1926 = vmatprep.subr.mxu0 0.0
        %1927 = vmatpush1.msra.mxu0 0.0
        %1928 = vmatprep.subr.mxu0 0.0
        %1929 = vmatpush1.msra.mxu0 0.0
        %1930 = vmatprep.subr.mxu0 0.0
        %1931 = vmatpush1.msra.mxu0 0.0
        %1932 = vmatprep.subr.mxu0 0.0
        %1933 = vmatpush1.msra.mxu0 0.0
        %1934 = vmatprep.subr.mxu0 0.0
        %1935 = vmatpush1.msra.mxu0 0.0
        %1936 = vmatprep.subr.mxu0 0.0
        %1937 = vmatpush1.msra.mxu0 0.0
        %1938 = vmatprep.subr.mxu0 0.0
        %1939 = vmatpush1.msra.mxu0 0.0
        %1940 = vmatprep.subr.mxu0 0.0
        %1941 = vmatpush1.msra.mxu0 0.0
        %1942 = vmatprep.subr.mxu0 0.0
        %1943 = vmatpush1.msra.mxu0 0.0
        %1944 = vmatprep.subr.mxu0 0.0
        %1945 = vmatpush1.msra.mxu0 0.0
        %1946 = vmatprep.subr.mxu0 0.0
        %1947 = vmatpush1.msra.mxu0 0.0
        %1948 = vmatprep.subr.mxu0 0.0
        %1949 = vmatpush1.msra.mxu0 0.0
        %1950 = vmatprep.subr.mxu0 0.0
        %1951 = vmatpush1.msra.mxu0 0.0
        %1952 = vmatprep.subr.mxu0 0.0
        %1953 = vmatpush1.msra.mxu0 0.0
        %1954 = vmatprep.subr.mxu0 0.0
        %1955 = vmatpush1.msra.mxu0 0.0
        %1956 = vmatprep.subr.mxu0 0.0
        %1957 = vmatpush1.msra.mxu0 0.0
        %1958 = vmatprep.subr.mxu0 0.0
        %1959 = vmatpush1.msra.mxu0 0.0
        %1960 = vmatprep.subr.mxu0 0.0
        %1961 = vmatpush1.msra.mxu0 0.0
        %1962 = vmatprep.subr.mxu0 0.0
        %1963 = vmatpush1.msra.mxu0 0.0
        %1964 = vmatprep.subr.mxu0 0.0
        %1965 = vmatpush1.msra.mxu0 0.0
        %1966 = vmatprep.subr.mxu0 0.0
        %1967 = vmatpush1.msra.mxu0 0.0
        %1968 = vmatprep.subr.mxu0 0.0
        %1969 = vmatpush1.msra.mxu0 0.0
        %1970 = vmatprep.subr.mxu0 0.0
        %1971 = vmatpush1.msra.mxu0 0.0
        %1972 = vmatprep.subr.mxu0 0.0
        %1973 = vmatpush1.msra.mxu0 0.0
        %1974 = vmatprep.mubr.f32.mxu0 0.0
        %1975 = vmatmul.mubr.f32.gmra.mrb[0].mxu0 %v1908
        %v1976 = vpop.f32.mrb[0].mxu0
        %v1977 = vadd.f32 0.0, %v1976
        %v1978 = vpop.f32.mrb[0].mxu0
        %1979 = vdwg.mxu0
        %v1984 = vrot.slane %v1895, 7
        %v1985 = vsel %vm274, %v1984, %v1894
        %v1986 = vrot.slane %v1896, 6
        %v1987 = vsel %vm277, %v1986, %v1985
        %v1988 = vrot.slane %v1897, 5
        %v1989 = vsel %vm280, %v1988, %v1987
        %v1990 = vsel %vm282, %v1989, 0
        %1992 = vmatprep.subr.mxu0 0.0
        %1993 = vmatpush1.msra.mxu0 %v251
        %1994 = vmatprep.subr.mxu0 0.0
        %1995 = vmatpush1.msra.mxu0 %v252
        %1996 = vmatprep.subr.mxu0 0.0
        %1997 = vmatpush1.msra.mxu0 0.0
        %1998 = vmatprep.subr.mxu0 0.0
        %1999 = vmatpush1.msra.mxu0 0.0
        %2000 = vmatprep.subr.mxu0 0.0
        %2001 = vmatpush1.msra.mxu0 0.0
        %2002 = vmatprep.subr.mxu0 0.0
        %2003 = vmatpush1.msra.mxu0 0.0
        %2004 = vmatprep.subr.mxu0 0.0
        %2005 = vmatpush1.msra.mxu0 0.0
        %2006 = vmatprep.subr.mxu0 0.0
        %2007 = vmatpush1.msra.mxu0 0.0
        %2008 = vmatprep.subr.mxu0 0.0
        %2009 = vmatpush1.msra.mxu0 0.0
        %2010 = vmatprep.subr.mxu0 0.0
        %2011 = vmatpush1.msra.mxu0 0.0
        %2012 = vmatprep.subr.mxu0 0.0
        %2013 = vmatpush1.msra.mxu0 0.0
        %2014 = vmatprep.subr.mxu0 0.0
        %2015 = vmatpush1.msra.mxu0 0.0
        %2016 = vmatprep.subr.mxu0 0.0
        %2017 = vmatpush1.msra.mxu0 0.0
        %2018 = vmatprep.subr.mxu0 0.0
        %2019 = vmatpush1.msra.mxu0 0.0
        %2020 = vmatprep.subr.mxu0 0.0
        %2021 = vmatpush1.msra.mxu0 0.0
        %2022 = vmatprep.subr.mxu0 0.0
        %2023 = vmatpush1.msra.mxu0 0.0
        %2024 = vmatprep.subr.mxu0 0.0
        %2025 = vmatpush1.msra.mxu0 0.0
        %2026 = vmatprep.subr.mxu0 0.0
        %2027 = vmatpush1.msra.mxu0 0.0
        %2028 = vmatprep.subr.mxu0 0.0
        %2029 = vmatpush1.msra.mxu0 0.0
        %2030 = vmatprep.subr.mxu0 0.0
        %2031 = vmatpush1.msra.mxu0 0.0
        %2032 = vmatprep.subr.mxu0 0.0
        %2033 = vmatpush1.msra.mxu0 0.0
        %2034 = vmatprep.subr.mxu0 0.0
        %2035 = vmatpush1.msra.mxu0 0.0
        %2036 = vmatprep.subr.mxu0 0.0
        %2037 = vmatpush1.msra.mxu0 0.0
        %2038 = vmatprep.subr.mxu0 0.0
        %2039 = vmatpush1.msra.mxu0 0.0
        %2040 = vmatprep.subr.mxu0 0.0
        %2041 = vmatpush1.msra.mxu0 0.0
        %2042 = vmatprep.subr.mxu0 0.0
        %2043 = vmatpush1.msra.mxu0 0.0
        %2044 = vmatprep.subr.mxu0 0.0
        %2045 = vmatpush1.msra.mxu0 0.0
        %2046 = vmatprep.subr.mxu0 0.0
        %2047 = vmatpush1.msra.mxu0 0.0
        %2048 = vmatprep.subr.mxu0 0.0
        %2049 = vmatpush1.msra.mxu0 0.0
        %2050 = vmatprep.subr.mxu0 0.0
        %2051 = vmatpush1.msra.mxu0 0.0
        %2052 = vmatprep.subr.mxu0 0.0
        %2053 = vmatpush1.msra.mxu0 0.0
        %2054 = vmatprep.subr.mxu0 0.0
        %2055 = vmatpush1.msra.mxu0 0.0
        %2056 = vmatprep.mubr.f32.mxu0 0.0
        %2057 = vmatmul.mubr.f32.gmra.mrb[0].mxu0 %v1990
        %v2058 = vpop.f32.mrb[0].mxu0
        %v2059 = vadd.f32 0.0, %v2058
        %v2060 = vpop.f32.mrb[0].mxu0
        %2061 = vdwg.mxu0
        %v2063 = vrot.slane %v2059, 4
        %v2065 = vsel %vm440, %v1977, %v2063
        %2066 = vmatprep.subr.mxu0 0.0
        %2067 = vmatpush1.msra.mxu0 %v2065
        %2068 = vmatprep.subr.mxu0 0.0
        %2069 = vmatpush1.msra.mxu0 0.0
        %2070 = vmatprep.subr.mxu0 0.0
        %2071 = vmatpush1.msra.mxu0 0.0
        %2072 = vmatprep.subr.mxu0 0.0
        %2073 = vmatpush1.msra.mxu0 0.0
        %2074 = vmatprep.subr.mxu0 0.0
        %2075 = vmatpush1.msra.mxu0 0.0
        %2076 = vmatprep.subr.mxu0 0.0
        %2077 = vmatpush1.msra.mxu0 0.0
        %2078 = vmatprep.subr.mxu0 0.0
        %2079 = vmatpush1.msra.mxu0 0.0
        %2080 = vmatprep.subr.mxu0 0.0
        %2081 = vmatpush1.msra.mxu0 0.0
        %2082 = vmatprep.subr.mxu0 0.0
        %2083 = vmatpush1.msra.mxu0 0.0
        %2084 = vmatprep.subr.mxu0 0.0
        %2085 = vmatpush1.msra.mxu0 0.0
        %2086 = vmatprep.subr.mxu0 0.0
        %2087 = vmatpush1.msra.mxu0 0.0
        %2088 = vmatprep.subr.mxu0 0.0
        %2089 = vmatpush1.msra.mxu0 0.0
        %2090 = vmatprep.subr.mxu0 0.0
        %2091 = vmatpush1.msra.mxu0 0.0
        %2092 = vmatprep.subr.mxu0 0.0
        %2093 = vmatpush1.msra.mxu0 0.0
        %2094 = vmatprep.subr.mxu0 0.0
        %2095 = vmatpush1.msra.mxu0 0.0
        %2096 = vmatprep.subr.mxu0 0.0
        %2097 = vmatpush1.msra.mxu0 0.0
        %2098 = vmatprep.subr.mxu0 0.0
        %2099 = vmatpush1.msra.mxu0 0.0
        %2100 = vmatprep.subr.mxu0 0.0
        %2101 = vmatpush1.msra.mxu0 0.0
        %2102 = vmatprep.subr.mxu0 0.0
        %2103 = vmatpush1.msra.mxu0 0.0
        %2104 = vmatprep.subr.mxu0 0.0
        %2105 = vmatpush1.msra.mxu0 0.0
        %2106 = vmatprep.subr.mxu0 0.0
        %2107 = vmatpush1.msra.mxu0 0.0
        %2108 = vmatprep.subr.mxu0 0.0
        %2109 = vmatpush1.msra.mxu0 0.0
        %2110 = vmatprep.subr.mxu0 0.0
        %2111 = vmatpush1.msra.mxu0 0.0
        %2112 = vmatprep.subr.mxu0 0.0
        %2113 = vmatpush1.msra.mxu0 0.0
        %2114 = vmatprep.subr.mxu0 0.0
        %2115 = vmatpush1.msra.mxu0 0.0
        %2116 = vmatprep.subr.mxu0 0.0
        %2117 = vmatpush1.msra.mxu0 0.0
        %2118 = vmatprep.subr.mxu0 0.0
        %2119 = vmatpush1.msra.mxu0 0.0
        %2120 = vmatprep.subr.mxu0 0.0
        %2121 = vmatpush1.msra.mxu0 0.0
        %2122 = vmatprep.subr.mxu0 0.0
        %2123 = vmatpush1.msra.mxu0 0.0
        %2124 = vmatprep.subr.mxu0 0.0
        %2125 = vmatpush1.msra.mxu0 0.0
        %2126 = vmatprep.subr.mxu0 0.0
        %2127 = vmatpush1.msra.mxu0 0.0
        %2128 = vmatprep.subr.mxu0 0.0
        %2129 = vmatpush1.msra.mxu0 0.0
        %2130 = vmatprep.mubr.f32.mxu0 0.0
        %2131 = vmatmul.mubr.f32.gmra.mrb[0].mxu0 %v444
        %v2132 = vpop.f32.mrb[0].mxu0
        %v2133 = vadd.f32 0.0, %v2132
        %v2134 = vpop.f32.mrb[0].mxu0
        %2135 = vdwg.mxu0
        %s2136 = sadd.s32 %s516, 6
        %p2137 = scmp.lt.s32.totalorder %s2136, 8
        %v2138 = vsel %vm442, %v2133, 0.0
        %2139 = vadd.xlane.f32.xlu0 %v2138
        %v2140 = vpop.xlane.xlu0 %2139
        %s2141 = scalar_select %p2137, 1, 0
        %v2142 = vstv %s2141
        %vm2143 = vcmp.eq.s32.totalorder %v2142, 1
        %v2144 = vsel %vm2143, %v2140, 0.0
        %v2145 = vadd.f32 %v1875, %v2144
        %v2146 = vmul.f32 %v2133, %v2133
        %v2147 = vsel %vm442, %v2146, 0.0
        %2148 = vadd.xlane.f32.xlu0 %v2147
        %v2149 = vpop.xlane.xlu0 %2148
        %v2150 = vsel %vm2143, %v2149, 0.0
        %v2151 = vadd.f32 %v1881, %v2150
        %v2152 = vld [vmem:[%s186 + $0xe] sm:$0x1]
        %v2153 = vld [vmem:[%s186 + $0x1e] sm:$0x1]
        %v2154 = vld [vmem:[%s186 + $0x2e] sm:$0x1]
        %v2155 = vld [vmem:[%s186 + $0x3e] sm:$0x1]
        %v2156 = vmax.f32 %v2152, 0.0
        %v2157 = vmax.f32 %v2153, 0.0
        %v2158 = vmax.f32 %v2154, 0.0
        %v2159 = vmax.f32 %v2155, 0.0
        %v2160 = vld [vmem:[%s186 + $0xf] sm:$0x1]
        %v2161 = vld [vmem:[%s186 + $0x1f] sm:$0x1]
        %v2162 = vld [vmem:[%s186 + $0x2f] sm:$0x1]
        %v2163 = vld [vmem:[%s186 + $0x3f] sm:$0x1]
        %v2164 = vmax.f32 %v2160, 0.0
        %v2165 = vmax.f32 %v2161, 0.0
        %v2166 = vmax.f32 %v2162, 0.0
        %v2167 = vmax.f32 %v2163, 0.0
        %v2172 = vrot.slane %v2157, 7
        %v2173 = vsel %vm274, %v2172, %v2156
        %v2174 = vrot.slane %v2158, 6
        %v2175 = vsel %vm277, %v2174, %v2173
        %v2176 = vrot.slane %v2159, 5
        %v2177 = vsel %vm280, %v2176, %v2175
        %v2178 = vsel %vm282, %v2177, 0
        %2180 = vmatprep.subr.mxu0 0.0
        %2181 = vmatpush1.msra.mxu0 %v244
        %2182 = vmatprep.subr.mxu0 0.0
        %2183 = vmatpush1.msra.mxu0 %v245
        %2184 = vmatprep.subr.mxu0 0.0
        %2185 = vmatpush1.msra.mxu0 0.0
        %2186 = vmatprep.subr.mxu0 0.0
        %2187 = vmatpush1.msra.mxu0 0.0
        %2188 = vmatprep.subr.mxu0 0.0
        %2189 = vmatpush1.msra.mxu0 0.0
        %2190 = vmatprep.subr.mxu0 0.0
        %2191 = vmatpush1.msra.mxu0 0.0
        %2192 = vmatprep.subr.mxu0 0.0
        %2193 = vmatpush1.msra.mxu0 0.0
        %2194 = vmatprep.subr.mxu0 0.0
        %2195 = vmatpush1.msra.mxu0 0.0
        %2196 = vmatprep.subr.mxu0 0.0
        %2197 = vmatpush1.msra.mxu0 0.0
        %2198 = vmatprep.subr.mxu0 0.0
        %2199 = vmatpush1.msra.mxu0 0.0
        %2200 = vmatprep.subr.mxu0 0.0
        %2201 = vmatpush1.msra.mxu0 0.0
        %2202 = vmatprep.subr.mxu0 0.0
        %2203 = vmatpush1.msra.mxu0 0.0
        %2204 = vmatprep.subr.mxu0 0.0
        %2205 = vmatpush1.msra.mxu0 0.0
        %2206 = vmatprep.subr.mxu0 0.0
        %2207 = vmatpush1.msra.mxu0 0.0
        %2208 = vmatprep.subr.mxu0 0.0
        %2209 = vmatpush1.msra.mxu0 0.0
        %2210 = vmatprep.subr.mxu0 0.0
        %2211 = vmatpush1.msra.mxu0 0.0
        %2212 = vmatprep.subr.mxu0 0.0
        %2213 = vmatpush1.msra.mxu0 0.0
        %2214 = vmatprep.subr.mxu0 0.0
        %2215 = vmatpush1.msra.mxu0 0.0
        %2216 = vmatprep.subr.mxu0 0.0
        %2217 = vmatpush1.msra.mxu0 0.0
        %2218 = vmatprep.subr.mxu0 0.0
        %2219 = vmatpush1.msra.mxu0 0.0
        %2220 = vmatprep.subr.mxu0 0.0
        %2221 = vmatpush1.msra.mxu0 0.0
        %2222 = vmatprep.subr.mxu0 0.0
        %2223 = vmatpush1.msra.mxu0 0.0
        %2224 = vmatprep.subr.mxu0 0.0
        %2225 = vmatpush1.msra.mxu0 0.0
        %2226 = vmatprep.subr.mxu0 0.0
        %2227 = vmatpush1.msra.mxu0 0.0
        %2228 = vmatprep.subr.mxu0 0.0
        %2229 = vmatpush1.msra.mxu0 0.0
        %2230 = vmatprep.subr.mxu0 0.0
        %2231 = vmatpush1.msra.mxu0 0.0
        %2232 = vmatprep.subr.mxu0 0.0
        %2233 = vmatpush1.msra.mxu0 0.0
        %2234 = vmatprep.subr.mxu0 0.0
        %2235 = vmatpush1.msra.mxu0 0.0
        %2236 = vmatprep.subr.mxu0 0.0
        %2237 = vmatpush1.msra.mxu0 0.0
        %2238 = vmatprep.subr.mxu0 0.0
        %2239 = vmatpush1.msra.mxu0 0.0
        %2240 = vmatprep.subr.mxu0 0.0
        %2241 = vmatpush1.msra.mxu0 0.0
        %2242 = vmatprep.subr.mxu0 0.0
        %2243 = vmatpush1.msra.mxu0 0.0
        %2244 = vmatprep.mubr.f32.mxu0 0.0
        %2245 = vmatmul.mubr.f32.gmra.mrb[0].mxu0 %v2178
        %v2246 = vpop.f32.mrb[0].mxu0
        %v2247 = vadd.f32 0.0, %v2246
        %v2248 = vpop.f32.mrb[0].mxu0
        %2249 = vdwg.mxu0
        %v2254 = vrot.slane %v2165, 7
        %v2255 = vsel %vm274, %v2254, %v2164
        %v2256 = vrot.slane %v2166, 6
        %v2257 = vsel %vm277, %v2256, %v2255
        %v2258 = vrot.slane %v2167, 5
        %v2259 = vsel %vm280, %v2258, %v2257
        %v2260 = vsel %vm282, %v2259, 0
        %2262 = vmatprep.subr.mxu0 0.0
        %2263 = vmatpush1.msra.mxu0 %v251
        %2264 = vmatprep.subr.mxu0 0.0
        %2265 = vmatpush1.msra.mxu0 %v252
        %2266 = vmatprep.subr.mxu0 0.0
        %2267 = vmatpush1.msra.mxu0 0.0
        %2268 = vmatprep.subr.mxu0 0.0
        %2269 = vmatpush1.msra.mxu0 0.0
        %2270 = vmatprep.subr.mxu0 0.0
        %2271 = vmatpush1.msra.mxu0 0.0
        %2272 = vmatprep.subr.mxu0 0.0
        %2273 = vmatpush1.msra.mxu0 0.0
        %2274 = vmatprep.subr.mxu0 0.0
        %2275 = vmatpush1.msra.mxu0 0.0
        %2276 = vmatprep.subr.mxu0 0.0
        %2277 = vmatpush1.msra.mxu0 0.0
        %2278 = vmatprep.subr.mxu0 0.0
        %2279 = vmatpush1.msra.mxu0 0.0
        %2280 = vmatprep.subr.mxu0 0.0
        %2281 = vmatpush1.msra.mxu0 0.0
        %2282 = vmatprep.subr.mxu0 0.0
        %2283 = vmatpush1.msra.mxu0 0.0
        %2284 = vmatprep.subr.mxu0 0.0
        %2285 = vmatpush1.msra.mxu0 0.0
        %2286 = vmatprep.subr.mxu0 0.0
        %2287 = vmatpush1.msra.mxu0 0.0
        %2288 = vmatprep.subr.mxu0 0.0
        %2289 = vmatpush1.msra.mxu0 0.0
        %2290 = vmatprep.subr.mxu0 0.0
        %2291 = vmatpush1.msra.mxu0 0.0
        %2292 = vmatprep.subr.mxu0 0.0
        %2293 = vmatpush1.msra.mxu0 0.0
        %2294 = vmatprep.subr.mxu0 0.0
        %2295 = vmatpush1.msra.mxu0 0.0
        %2296 = vmatprep.subr.mxu0 0.0
        %2297 = vmatpush1.msra.mxu0 0.0
        %2298 = vmatprep.subr.mxu0 0.0
        %2299 = vmatpush1.msra.mxu0 0.0
        %2300 = vmatprep.subr.mxu0 0.0
        %2301 = vmatpush1.msra.mxu0 0.0
        %2302 = vmatprep.subr.mxu0 0.0
        %2303 = vmatpush1.msra.mxu0 0.0
        %2304 = vmatprep.subr.mxu0 0.0
        %2305 = vmatpush1.msra.mxu0 0.0
        %2306 = vmatprep.subr.mxu0 0.0
        %2307 = vmatpush1.msra.mxu0 0.0
        %2308 = vmatprep.subr.mxu0 0.0
        %2309 = vmatpush1.msra.mxu0 0.0
        %2310 = vmatprep.subr.mxu0 0.0
        %2311 = vmatpush1.msra.mxu0 0.0
        %2312 = vmatprep.subr.mxu0 0.0
        %2313 = vmatpush1.msra.mxu0 0.0
        %2314 = vmatprep.subr.mxu0 0.0
        %2315 = vmatpush1.msra.mxu0 0.0
        %2316 = vmatprep.subr.mxu0 0.0
        %2317 = vmatpush1.msra.mxu0 0.0
        %2318 = vmatprep.subr.mxu0 0.0
        %2319 = vmatpush1.msra.mxu0 0.0
        %2320 = vmatprep.subr.mxu0 0.0
        %2321 = vmatpush1.msra.mxu0 0.0
        %2322 = vmatprep.subr.mxu0 0.0
        %2323 = vmatpush1.msra.mxu0 0.0
        %2324 = vmatprep.subr.mxu0 0.0
        %2325 = vmatpush1.msra.mxu0 0.0
        %2326 = vmatprep.mubr.f32.mxu0 0.0
        %2327 = vmatmul.mubr.f32.gmra.mrb[0].mxu0 %v2260
        %v2328 = vpop.f32.mrb[0].mxu0
        %v2329 = vadd.f32 0.0, %v2328
        %v2330 = vpop.f32.mrb[0].mxu0
        %2331 = vdwg.mxu0
        %v2333 = vrot.slane %v2329, 4
        %v2335 = vsel %vm440, %v2247, %v2333
        %2336 = vmatprep.subr.mxu0 0.0
        %2337 = vmatpush1.msra.mxu0 %v2335
        %2338 = vmatprep.subr.mxu0 0.0
        %2339 = vmatpush1.msra.mxu0 0.0
        %2340 = vmatprep.subr.mxu0 0.0
        %2341 = vmatpush1.msra.mxu0 0.0
        %2342 = vmatprep.subr.mxu0 0.0
        %2343 = vmatpush1.msra.mxu0 0.0
        %2344 = vmatprep.subr.mxu0 0.0
        %2345 = vmatpush1.msra.mxu0 0.0
        %2346 = vmatprep.subr.mxu0 0.0
        %2347 = vmatpush1.msra.mxu0 0.0
        %2348 = vmatprep.subr.mxu0 0.0
        %2349 = vmatpush1.msra.mxu0 0.0
        %2350 = vmatprep.subr.mxu0 0.0
        %2351 = vmatpush1.msra.mxu0 0.0
        %2352 = vmatprep.subr.mxu0 0.0
        %2353 = vmatpush1.msra.mxu0 0.0
        %2354 = vmatprep.subr.mxu0 0.0
        %2355 = vmatpush1.msra.mxu0 0.0
        %2356 = vmatprep.subr.mxu0 0.0
        %2357 = vmatpush1.msra.mxu0 0.0
        %2358 = vmatprep.subr.mxu0 0.0
        %2359 = vmatpush1.msra.mxu0 0.0
        %2360 = vmatprep.subr.mxu0 0.0
        %2361 = vmatpush1.msra.mxu0 0.0
        %2362 = vmatprep.subr.mxu0 0.0
        %2363 = vmatpush1.msra.mxu0 0.0
        %2364 = vmatprep.subr.mxu0 0.0
        %2365 = vmatpush1.msra.mxu0 0.0
        %2366 = vmatprep.subr.mxu0 0.0
        %2367 = vmatpush1.msra.mxu0 0.0
        %2368 = vmatprep.subr.mxu0 0.0
        %2369 = vmatpush1.msra.mxu0 0.0
        %2370 = vmatprep.subr.mxu0 0.0
        %2371 = vmatpush1.msra.mxu0 0.0
        %2372 = vmatprep.subr.mxu0 0.0
        %2373 = vmatpush1.msra.mxu0 0.0
        %2374 = vmatprep.subr.mxu0 0.0
        %2375 = vmatpush1.msra.mxu0 0.0
        %2376 = vmatprep.subr.mxu0 0.0
        %2377 = vmatpush1.msra.mxu0 0.0
        %2378 = vmatprep.subr.mxu0 0.0
        %2379 = vmatpush1.msra.mxu0 0.0
        %2380 = vmatprep.subr.mxu0 0.0
        %2381 = vmatpush1.msra.mxu0 0.0
        %2382 = vmatprep.subr.mxu0 0.0
        %2383 = vmatpush1.msra.mxu0 0.0
        %2384 = vmatprep.subr.mxu0 0.0
        %2385 = vmatpush1.msra.mxu0 0.0
        %2386 = vmatprep.subr.mxu0 0.0
        %2387 = vmatpush1.msra.mxu0 0.0
        %2388 = vmatprep.subr.mxu0 0.0
        %2389 = vmatpush1.msra.mxu0 0.0
        %2390 = vmatprep.subr.mxu0 0.0
        %2391 = vmatpush1.msra.mxu0 0.0
        %2392 = vmatprep.subr.mxu0 0.0
        %2393 = vmatpush1.msra.mxu0 0.0
        %2394 = vmatprep.subr.mxu0 0.0
        %2395 = vmatpush1.msra.mxu0 0.0
        %2396 = vmatprep.subr.mxu0 0.0
        %2397 = vmatpush1.msra.mxu0 0.0
        %2398 = vmatprep.subr.mxu0 0.0
        %2399 = vmatpush1.msra.mxu0 0.0
        %2400 = vmatprep.mubr.f32.mxu0 0.0
        %2401 = vmatmul.mubr.f32.gmra.mrb[0].mxu0 %v444
        %v2402 = vpop.f32.mrb[0].mxu0
        %v2403 = vadd.f32 0.0, %v2402
        %v2404 = vpop.f32.mrb[0].mxu0
        %2405 = vdwg.mxu0
        %s2406 = sadd.s32 %s516, 7
        %p2407 = scmp.lt.s32.totalorder %s2406, 8
        %v2408 = vsel %vm442, %v2403, 0.0
        %2409 = vadd.xlane.f32.xlu0 %v2408
        %v2410 = vpop.xlane.xlu0 %2409
        %s2411 = scalar_select %p2407, 1, 0
        %v2412 = vstv %s2411
        %vm2413 = vcmp.eq.s32.totalorder %v2412, 1
        %v2414 = vsel %vm2413, %v2410, 0.0
        %v2415 = vadd.f32 %v2145, %v2414
        %v2416 = vmul.f32 %v2403, %v2403
        %v2417 = vsel %vm442, %v2416, 0.0
        %2418 = vadd.xlane.f32.xlu0 %v2417
        %v2419 = vpop.xlane.xlu0 %2418
        %v2420 = vsel %vm2413, %v2419, 0.0
        %v2421 = vadd.f32 %v2151, %v2420
        %vm2422 = vcmask 7168
        %2423 = vst.msk [vmem:[%s225] sm:$0xff] %vm2422, %v2415
        %2424 = vst.msk [vmem:[%s232] sm:$0xff] %vm2422, %v2421
        %p2425 = scmp.lt.s32.totalorder %s22, 1
        %s2426 = scalar_select %p2425, %s22, 1
        %p2427 = scmp.lt.s32.totalorder %s23, 0
        %s2428 = scalar_select %p2427, %s23, 0
        %s2429 = sadd.s32 %s2428, %s2426
        %s2430 = smul.addr %s2429, 8
        %s2431 = scalar_lea.vmem %s2, %s2430
        %p2432 = scmp.lt.s32.totalorder %s22, 1
        %s2433 = scalar_select %p2432, %s22, 1
        %p2434 = scmp.lt.s32.totalorder %s23, 0
        %s2435 = scalar_select %p2434, %s23, 0
        %s2436 = sadd.s32 %s2435, %s2433
        %s2437 = smul.addr %s2436, 8
        %s2438 = scalar_lea.vmem %s3, %s2437
        // Predicated region
        $region33: #{factorized_reduce.2} parent=27 // pred_check
          %p2439 = pneg %p99
        $region34: #{factorized_reduce.2} parent=27 // pred_check_branch
          %2441 = sbr.rel (%p2439) target = $region36
        $region35: #{factorized_reduce.2} parent=27 // pred_region
          _
        $region36: #{factorized_reduce.2} parent=27 // pred_fallthru
          _
        // Predicated region
        $region37: #{factorized_reduce.2} parent=27 // pred_check
          %p2442 = pneg %p127
        $region38: #{factorized_reduce.2} parent=27 // pred_check_branch
          %2444 = sbr.rel (%p2442) target = $region40
        $region39: #{factorized_reduce.2} parent=27 // pred_region
          _
        $region40: #{factorized_reduce.2} parent=27 // pred_fallthru
          _
      $region28: #{factorized_reduce.2} parent=5 // pred_fallthru
        _
      %p2445 = scmp.le.s32.totalorder 2, %s13
      // Predicated region
      $region41: #{factorized_reduce.2} parent=5 // pred_check
        %p2446 = pneg %p2445
      $region42: #{factorized_reduce.2} parent=5 // pred_check_branch
        %2448 = sbr.rel (%p2446) target = $region44
      $region43: #{factorized_reduce.2} parent=5 // pred_region
        %s2449 = ssub.s32 %s13, 2
        // Predicated region
        $region45: #{factorized_reduce.2} parent=43 // pred_check
          %p2450 = pneg %p105
        $region46: #{factorized_reduce.2} parent=43 // pred_check_branch
          %2452 = sbr.rel (%p2450) target = $region48
        $region47: #{factorized_reduce.2} parent=43 // pred_region
          %p2453 = scmp.lt.s32.totalorder %s24, 1
          %s2454 = scalar_select %p2453, %s24, 1
          %p2455 = scmp.lt.s32.totalorder %s25, 0
          %s2456 = scalar_select %p2455, %s25, 0
          %s2457 = sadd.s32 %s2456, %s2454
          %s2458 = smul.addr %s2457, 8
          %s2459 = scalar_lea.vmem %s2, %s2458
        $region48: #{factorized_reduce.2} parent=43 // pred_fallthru
          _
        // Predicated region
        $region49: #{factorized_reduce.2} parent=43 // pred_check
          %p2460 = pneg %p133
        $region50: #{factorized_reduce.2} parent=43 // pred_check_branch
          %2462 = sbr.rel (%p2460) target = $region52
        $region51: #{factorized_reduce.2} parent=43 // pred_region
          %p2463 = scmp.lt.s32.totalorder %s24, 1
          %s2464 = scalar_select %p2463, %s24, 1
          %p2465 = scmp.lt.s32.totalorder %s25, 0
          %s2466 = scalar_select %p2465, %s25, 0
          %s2467 = sadd.s32 %s2466, %s2464
          %s2468 = smul.addr %s2467, 8
          %s2469 = scalar_lea.vmem %s3, %s2468
        $region52: #{factorized_reduce.2} parent=43 // pred_fallthru
          _
      $region44: #{factorized_reduce.2} parent=5 // pred_fallthru
        _
    $region6: #{factorized_reduce.2} parent=1 // loop_footer
      %s17 = sadd.s32 1, %s13
    $region7: #{factorized_reduce.2} parent=1 // loop_footer_branch
      %12 = sbr.rel target = $region3
    $region8: #{factorized_reduce.2} parent=1 // loop_exit
      _
    %2470 = vsyncpa [#allocation3], 1
    %s2471 = scalar_lea.sflag [#allocation3], 1
    %2472 = vsyncpa %s2471, 1

// kernel: factorized_reduce.3
$region0: #{factorized_reduce.3}
  #allocation0 [shape = 'u32[]', space=smem, size = 0x4, offset = 0x4, fixed_abs, tag = 'smem constant byte address 0x4 - core index']
  #allocation1 [shape = 'u32[144,128]{1,0:T(1,128)}', space=vmem, size = 0x12000, scoped, tag = 'internal scratch']
  %s0 = inlined_call_operand.vmem [shape: f32[2,4,16,16], index: 0, kind: input, shape index: {}]
  %s1 = inlined_call_operand.vmem [shape: f32[8,8], index: 1, kind: input, shape index: {}]
  %s2 = inlined_call_operand.vmem [shape: f32[8,1], index: 2, kind: input, shape index: {}]
  %s3 = inlined_call_operand.vmem [shape: f32[8,1], index: 3, kind: input, shape index: {}]
  %s4 = inlined_call_operand.hbm [shape: f32[2,8,8,8], index: 4, kind: output, shape index: {}]
  %s5 = sld [smem:[#allocation0]]
  $region49: #{factorized_reduce.3} parent=0
    _
  %s7 = ssub.s32 1, %s5
  %s8 = scalar_select 0, %s7, %s5
  $region1: #{factorized_reduce.3} parent=0
    #allocation2 [shape = 'u8[65536]{0}', space=vmem, size = 0x10000, scoped, tag = 'output window, operand 0']
    #allocation3 [shape = 's32[2]{0}', space=sflag, size = 0x8, scoped, tag = 'scoped memory for factorized_reduce.3']
    %9 = vsyncpa [#allocation3], 0
    %s10 = scalar_lea.sflag [#allocation3], 1
    %11 = vsyncpa %s10, 0
    loop: start=0, step=1, limit=4
    $region2: #{factorized_reduce.3} parent=1 // loop_pre_header
      _
    $region3: #{factorized_reduce.3} parent=1 // loop_header
      %s13 = sphi 0, %s17
      %p14 = scmp.ge.s32.totalorder %s13, 4
      %s20 = sphi 0, %s32
      %s21 = sphi 0, %s28
      %s22 = sphi 0, %s20
      %s23 = sphi 0, %s21
      %s24 = sphi 0, %s22
      %s25 = sphi 0, %s23
      %s37 = sphi 0, %s39
      %s40 = sphi 0, %s37
      %s41 = sphi 0, %s40
      %s57 = sphi 0, %s41
      %s61 = sphi 0, %s61
      %s63 = sphi 0, %s61
      %s64 = sphi 0, %s63
      %s78 = sphi 0, %s64
      %s82 = sphi 0, %s82
      %s84 = sphi 0, %s82
      %s85 = sphi 0, %s84
      %s99 = sphi 0, %s85
      %s103 = sphi 0, %s103
      %s105 = sphi 0, %s103
      %s106 = sphi 0, %s105
      %s120 = sphi 0, %s106
      %s128 = sphi 0, %s130
      %s131 = sphi 0, %s128
      %s132 = sphi 0, %s131
      %s148 = sphi 0, %s132
    $region4: #{factorized_reduce.3} parent=1 // loop_header_branch
      %16 = sbr.rel (%p14) target = $region8
    $region5: #{factorized_reduce.3} parent=1 // loop_body
      %s18 = ssub.s32 %s13, 1
      %s19 = ssub.s32 %s13, 2
      %s26 = sadd.s32 1, %s21
      %p27 = scmp.ge.s32.totalorder %s26, 1
      %s28 = scalar_select %p27, 0, %s26
      %s29 = sadd.s32 1, %s20
      %s30 = scalar_select %p27, %s29, %s20
      %p31 = scmp.ge.s32.totalorder %s30, 2
      %s32 = scalar_select %p31, 0, %s30
      %s33 = ssub.s32 %s20, %s32
      %s34 = ssub.s32 %s21, %s28
      %s35 = sor.u32 %s33, %s34
      %p36 = scmp.eq.s32.totalorder %s35, 0
      %s38 = sadd.s32 %s37, 1
      %s39 = scalar_select %p36, %s37, %s38
      %p42 = pneg %p36
      %p43 = scmp.eq.s32.totalorder %s13, 1
      %p44 = por %p42, %p43
      %p45 = scmp.ne.s32.totalorder %s37, %s40
      %p46 = scmp.eq.s32.totalorder %s13, 0
      %p47 = por %p45, %p46
      %p48 = scmp.ne.s32.totalorder %s37, %s40
      %p49 = scmp.eq.s32.totalorder %s18, 1
      %p50 = por %p48, %p49
      %p51 = scmp.ne.s32.totalorder %s40, %s41
      %p52 = scmp.eq.s32.totalorder %s18, 0
      %p53 = por %p51, %p52
      %p54 = scmp.ne.s32.totalorder %s40, %s41
      %p55 = scmp.eq.s32.totalorder %s19, 1
      %p56 = por %p54, %p55
      %p58 = scmp.ne.s32.totalorder %s41, %s57
      %p59 = scmp.eq.s32.totalorder %s19, 0
      %p60 = por %p58, %p59
      %s62 = sadd.s32 %s61, 1
      %p65 = scmp.eq.s32.totalorder %s13, 1
      %p66 = scmp.ne.s32.totalorder %s61, %s63
      %p67 = scmp.eq.s32.totalorder %s13, 0
      %p68 = por %p66, %p67
      %p69 = scmp.ne.s32.totalorder %s61, %s63
      %p70 = scmp.eq.s32.totalorder %s18, 1
      %p71 = por %p69, %p70
      %p72 = scmp.ne.s32.totalorder %s63, %s64
      %p73 = scmp.eq.s32.totalorder %s18, 0
      %p74 = por %p72, %p73
      %p75 = scmp.ne.s32.totalorder %s63, %s64
      %p76 = scmp.eq.s32.totalorder %s19, 1
      %p77 = por %p75, %p76
      %p79 = scmp.ne.s32.totalorder %s64, %s78
      %p80 = scmp.eq.s32.totalorder %s19, 0
      %p81 = por %p79, %p80
      %s83 = sadd.s32 %s82, 1
      %p86 = scmp.eq.s32.totalorder %s13, 1
      %p87 = scmp.ne.s32.totalorder %s82, %s84
      %p88 = scmp.eq.s32.totalorder %s13, 0
      %p89 = por %p87, %p88
      %p90 = scmp.ne.s32.totalorder %s82, %s84
      %p91 = scmp.eq.s32.totalorder %s18, 1
      %p92 = por %p90, %p91
      %p93 = scmp.ne.s32.totalorder %s84, %s85
      %p94 = scmp.eq.s32.totalorder %s18, 0
      %p95 = por %p93, %p94
      %p96 = scmp.ne.s32.totalorder %s84, %s85
      %p97 = scmp.eq.s32.totalorder %s19, 1
      %p98 = por %p96, %p97
      %p100 = scmp.ne.s32.totalorder %s85, %s99
      %p101 = scmp.eq.s32.totalorder %s19, 0
      %p102 = por %p100, %p101
      %s104 = sadd.s32 %s103, 1
      %p107 = scmp.eq.s32.totalorder %s13, 1
      %p108 = scmp.ne.s32.totalorder %s103, %s105
      %p109 = scmp.eq.s32.totalorder %s13, 0
      %p110 = por %p108, %p109
      %p111 = scmp.ne.s32.totalorder %s103, %s105
      %p112 = scmp.eq.s32.totalorder %s18, 1
      %p113 = por %p111, %p112
      %p114 = scmp.ne.s32.totalorder %s105, %s106
      %p115 = scmp.eq.s32.totalorder %s18, 0
      %p116 = por %p114, %p115
      %p117 = scmp.ne.s32.totalorder %s105, %s106
      %p118 = scmp.eq.s32.totalorder %s19, 1
      %p119 = por %p117, %p118
      %p121 = scmp.ne.s32.totalorder %s106, %s120
      %p122 = scmp.eq.s32.totalorder %s19, 0
      %p123 = por %p121, %p122
      %s124 = ssub.s32 %s20, %s32
      %s125 = ssub.s32 %s21, %s28
      %s126 = sor.u32 %s124, %s125
      %p127 = scmp.eq.s32.totalorder %s126, 0
      %s129 = sadd.s32 %s128, 1
      %s130 = scalar_select %p127, %s128, %s129
      %p133 = pneg %p127
      %p134 = scmp.eq.s32.totalorder %s13, 1
      %p135 = por %p133, %p134
      %p136 = scmp.ne.s32.totalorder %s128, %s131
      %p137 = scmp.eq.s32.totalorder %s13, 0
      %p138 = por %p136, %p137
      %p139 = scmp.ne.s32.totalorder %s128, %s131
      %p140 = scmp.eq.s32.totalorder %s18, 1
      %p141 = por %p139, %p140
      %p142 = scmp.ne.s32.totalorder %s131, %s132
      %p143 = scmp.eq.s32.totalorder %s18, 0
      %p144 = por %p142, %p143
      %p145 = scmp.ne.s32.totalorder %s131, %s132
      %p146 = scmp.eq.s32.totalorder %s19, 1
      %p147 = por %p145, %p146
      %p149 = scmp.ne.s32.totalorder %s132, %s148
      %p150 = scmp.eq.s32.totalorder %s19, 0
      %p151 = por %p149, %p150
      %p152 = scmp.le.s32.totalorder 1, %s13
      %p153 = scmp.lt.s32.totalorder %s13, 3
      %p154 = pnand %p152, %p153
      %p155 = pneg %p154
      // Predicated region
      $region9: #{factorized_reduce.3} parent=5 // pred_check
        _
      $region10: #{factorized_reduce.3} parent=5 // pred_check_branch
        %157 = sbr.rel (%p154) target = $region12
      $region11: #{factorized_reduce.3} parent=5 // pred_region
        %s158 = ssub.s32 %s13, 1
        // Predicated region
        $region13: #{factorized_reduce.3} parent=11 // pred_check
          %p159 = pneg %p74
        $region14: #{factorized_reduce.3} parent=11 // pred_check_branch
          %161 = sbr.rel (%p159) target = $region16
        $region15: #{factorized_reduce.3} parent=11 // pred_region
          _
        $region16: #{factorized_reduce.3} parent=11 // pred_fallthru
          _
        // Predicated region
        $region17: #{factorized_reduce.3} parent=11 // pred_check
          %p162 = pneg %p95
        $region18: #{factorized_reduce.3} parent=11 // pred_check_branch
          %164 = sbr.rel (%p162) target = $region20
        $region19: #{factorized_reduce.3} parent=11 // pred_region
          _
        $region20: #{factorized_reduce.3} parent=11 // pred_fallthru
          _
        // Predicated region
        $region21: #{factorized_reduce.3} parent=11 // pred_check
          %p165 = pneg %p116
        $region22: #{factorized_reduce.3} parent=11 // pred_check_branch
          %167 = sbr.rel (%p165) target = $region24
        $region23: #{factorized_reduce.3} parent=11 // pred_region
          _
        $region24: #{factorized_reduce.3} parent=11 // pred_fallthru
          _
      $region12: #{factorized_reduce.3} parent=5 // pred_fallthru
        _
      %p168 = scmp.lt.s32.totalorder %s13, 2
      // Predicated region
      $region25: #{factorized_reduce.3} parent=5 // pred_check
        %p169 = pneg %p168
      $region26: #{factorized_reduce.3} parent=5 // pred_check_branch
        %171 = sbr.rel (%p169) target = $region28
      $region27: #{factorized_reduce.3} parent=5 // pred_region
        // Predicated region
        $region29: #{factorized_reduce.3} parent=27 // pred_check
          %p172 = pneg %p47
        $region30: #{factorized_reduce.3} parent=27 // pred_check_branch
          %174 = sbr.rel (%p172) target = $region32
        $region31: #{factorized_reduce.3} parent=27 // pred_region
          %s175 = smul.u32 2, %s21
          %p176 = scmp.lt.s32.totalorder %s20, 1
          %s177 = scalar_select %p176, %s20, 1
          %p178 = scmp.lt.s32.totalorder %s175, 1
          %s179 = scalar_select %p178, %s175, 1
          %s180 = smul.addr %s177, 8
          %s181 = sadd.s32 %s179, %s180
          %s182 = smul.addr %s181, 8
          %s183 = scalar_lea.vmem %s0, %s182
          %s184 = smul.u32 2, %s21
        $region32: #{factorized_reduce.3} parent=27 // pred_fallthru
          _
      $region28: #{factorized_reduce.3} parent=5 // pred_fallthru
        _
      %p185 = scmp.le.s32.totalorder 1, %s13
      %p186 = scmp.lt.s32.totalorder %s13, 3
      %p187 = pnand %p185, %p186
      %p188 = pneg %p187
      // Predicated region
      $region33: #{factorized_reduce.3} parent=5 // pred_check
        _
      $region34: #{factorized_reduce.3} parent=5 // pred_check_branch
        %190 = sbr.rel (%p187) target = $region36
      $region35: #{factorized_reduce.3} parent=5 // pred_region
        %s191 = ssub.s32 %s13, 1
        %s192 = smul.u32 2, %s23
        %p193 = scmp.lt.s32.totalorder %s22, 1
        %s194 = scalar_select %p193, %s22, 1
        %p195 = scmp.lt.s32.totalorder %s192, 1
        %s196 = scalar_select %p195, %s192, 1
        %s197 = smul.addr %s194, 8
        %s198 = sadd.s32 %s196, %s197
        %s199 = smul.addr %s198, 8
        %s200 = scalar_lea.vmem %s0, %s199
        %p201 = pneg %p53
        %p202 = pneg %p50
        %p203 = pneg %p74
        %p204 = pneg %p71
        %p205 = pneg %p95
        %p206 = pneg %p92
        %p207 = pneg %p116
        %p208 = pneg %p113
        %p209 = pneg %p144
        %p210 = pneg %p141
        %s211 = sand.u32 %s131, 1
        %s212 = scalar_lea.sflag [#allocation3], %s211
        %s213 = sand.u32 %s131, 1
        %s214 = smul.addr %s213, 64
        %s215 = scalar_lea.vmem [#allocation2], %s214
        %s216 = smul.u32 2, %s23
        %p217 = scmp.lt.s32.totalorder %s22, 1
        %s218 = scalar_select %p217, %s22, 1
        %p219 = scmp.lt.s32.totalorder %s216, 1
        %s220 = scalar_select %p219, %s216, 1
        %s221 = smul.addr %s218, 8
        %s222 = sadd.s32 %s220, %s221
        %s223 = smul.addr %s222, 8
        %s224 = scalar_lea.vmem %s0, %s223
        %s225 = smul.u32 2, %s23
        %v226 = vld [vmem:[%s1] sm:$0xff]
        %v227 = vld [vmem:[%s2] sm:$0xff]
        %v228 = vld [vmem:[%s3] sm:$0xff]
        %v229 = vlaneseq
        %v230 = vshrl.u32 %v229, 7
        %v231 = vadd.s32 %v230, 8
        %v232 = vlaneseq
        %v233 = vand.u32 %v232, 127
        %v234 = vmul.u32 %v233, 2
        %vm235 = vcmp.eq.s32.totalorder %v230, %v234
        %vm236 = vcmp.eq.s32.totalorder %v231, %v234
        %v237 = vsel %vm235, 1, 0
        %v238 = vsel %vm236, 1, 0
        %v239 = vcvt.s32.f32 %v237
        %v240 = vcvt.s32.f32 %v238
        %v241 = vadd.s32 %v234, 1
        %vm242 = vcmp.eq.s32.totalorder %v230, %v241
        %vm243 = vcmp.eq.s32.totalorder %v231, %v241
        %v244 = vsel %vm242, 1, 0
        %v245 = vsel %vm243, 1, 0
        %v246 = vcvt.s32.f32 %v244
        %v247 = vcvt.s32.f32 %v245
        %v248 = vld [vmem:[%s224] sm:$0x1]
        %v249 = vld [vmem:[%s224 + $0x10] sm:$0x1]
        %v250 = vld [vmem:[%s224 + $0x20] sm:$0x1]
        %v251 = vld [vmem:[%s224 + $0x30] sm:$0x1]
        %v252 = vmax.f32 %v248, 0.0
        %v253 = vmax.f32 %v249, 0.0
        %v254 = vmax.f32 %v250, 0.0
        %v255 = vmax.f32 %v251, 0.0
        %v256 = vld [vmem:[%s224 + $0x1] sm:$0x1]
        %v257 = vld [vmem:[%s224 + $0x11] sm:$0x1]
        %v258 = vld [vmem:[%s224 + $0x21] sm:$0x1]
        %v259 = vld [vmem:[%s224 + $0x31] sm:$0x1]
        %v260 = vmax.f32 %v256, 0.0
        %v261 = vmax.f32 %v257, 0.0
        %v262 = vmax.f32 %v258, 0.0
        %v263 = vmax.f32 %v259, 0.0
        %v268 = vrot.slane %v253, 7
        %vm269 = vcmask 1041409
        %v270 = vsel %vm269, %v268, %v252
        %v271 = vrot.slane %v254, 6
        %vm272 = vcmask 1042434
        %v273 = vsel %vm272, %v271, %v270
        %v274 = vrot.slane %v255, 5
        %vm275 = vcmask 1043459
        %v276 = vsel %vm275, %v274, %v273
        %vm277 = vcmask 130048
        %v278 = vsel %vm277, %v276, 0
        %280 = vmatprep.subr.mxu0 0.0
        %281 = vmatpush1.msra.mxu0 %v239
        %282 = vmatprep.subr.mxu0 0.0
        %283 = vmatpush1.msra.mxu0 %v240
        %284 = vmatprep.subr.mxu0 0.0
        %285 = vmatpush1.msra.mxu0 0.0
        %286 = vmatprep.subr.mxu0 0.0
        %287 = vmatpush1.msra.mxu0 0.0
        %288 = vmatprep.subr.mxu0 0.0
        %289 = vmatpush1.msra.mxu0 0.0
        %290 = vmatprep.subr.mxu0 0.0
        %291 = vmatpush1.msra.mxu0 0.0
        %292 = vmatprep.subr.mxu0 0.0
        %293 = vmatpush1.msra.mxu0 0.0
        %294 = vmatprep.subr.mxu0 0.0
        %295 = vmatpush1.msra.mxu0 0.0
        %296 = vmatprep.subr.mxu0 0.0
        %297 = vmatpush1.msra.mxu0 0.0
        %298 = vmatprep.subr.mxu0 0.0
        %299 = vmatpush1.msra.mxu0 0.0
        %300 = vmatprep.subr.mxu0 0.0
        %301 = vmatpush1.msra.mxu0 0.0
        %302 = vmatprep.subr.mxu0 0.0
        %303 = vmatpush1.msra.mxu0 0.0
        %304 = vmatprep.subr.mxu0 0.0
        %305 = vmatpush1.msra.mxu0 0.0
        %306 = vmatprep.subr.mxu0 0.0
        %307 = vmatpush1.msra.mxu0 0.0
        %308 = vmatprep.subr.mxu0 0.0
        %309 = vmatpush1.msra.mxu0 0.0
        %310 = vmatprep.subr.mxu0 0.0
        %311 = vmatpush1.msra.mxu0 0.0
        %312 = vmatprep.subr.mxu0 0.0
        %313 = vmatpush1.msra.mxu0 0.0
        %314 = vmatprep.subr.mxu0 0.0
        %315 = vmatpush1.msra.mxu0 0.0
        %316 = vmatprep.subr.mxu0 0.0
        %317 = vmatpush1.msra.mxu0 0.0
        %318 = vmatprep.subr.mxu0 0.0
        %319 = vmatpush1.msra.mxu0 0.0
        %320 = vmatprep.subr.mxu0 0.0
        %321 = vmatpush1.msra.mxu0 0.0
        %322 = vmatprep.subr.mxu0 0.0
        %323 = vmatpush1.msra.mxu0 0.0
        %324 = vmatprep.subr.mxu0 0.0
        %325 = vmatpush1.msra.mxu0 0.0
        %326 = vmatprep.subr.mxu0 0.0
        %327 = vmatpush1.msra.mxu0 0.0
        %328 = vmatprep.subr.mxu0 0.0
        %329 = vmatpush1.msra.mxu0 0.0
        %330 = vmatprep.subr.mxu0 0.0
        %331 = vmatpush1.msra.mxu0 0.0
        %332 = vmatprep.subr.mxu0 0.0
        %333 = vmatpush1.msra.mxu0 0.0
        %334 = vmatprep.subr.mxu0 0.0
        %335 = vmatpush1.msra.mxu0 0.0
        %336 = vmatprep.subr.mxu0 0.0
        %337 = vmatpush1.msra.mxu0 0.0
        %338 = vmatprep.subr.mxu0 0.0
        %339 = vmatpush1.msra.mxu0 0.0
        %340 = vmatprep.subr.mxu0 0.0
        %341 = vmatpush1.msra.mxu0 0.0
        %342 = vmatprep.subr.mxu0 0.0
        %343 = vmatpush1.msra.mxu0 0.0
        %344 = vmatprep.mubr.f32.mxu0 0.0
        %345 = vmatmul.mubr.f32.gmra.mrb[0].mxu0 %v278
        %v346 = vpop.f32.mrb[0].mxu0
        %v347 = vadd.f32 0.0, %v346
        %v348 = vpop.f32.mrb[0].mxu0
        %349 = vdwg.mxu0
        %v354 = vrot.slane %v261, 7
        %v355 = vsel %vm269, %v354, %v260
        %v356 = vrot.slane %v262, 6
        %v357 = vsel %vm272, %v356, %v355
        %v358 = vrot.slane %v263, 5
        %v359 = vsel %vm275, %v358, %v357
        %v360 = vsel %vm277, %v359, 0
        %362 = vmatprep.subr.mxu0 0.0
        %363 = vmatpush1.msra.mxu0 %v246
        %364 = vmatprep.subr.mxu0 0.0
        %365 = vmatpush1.msra.mxu0 %v247
        %366 = vmatprep.subr.mxu0 0.0
        %367 = vmatpush1.msra.mxu0 0.0
        %368 = vmatprep.subr.mxu0 0.0
        %369 = vmatpush1.msra.mxu0 0.0
        %370 = vmatprep.subr.mxu0 0.0
        %371 = vmatpush1.msra.mxu0 0.0
        %372 = vmatprep.subr.mxu0 0.0
        %373 = vmatpush1.msra.mxu0 0.0
        %374 = vmatprep.subr.mxu0 0.0
        %375 = vmatpush1.msra.mxu0 0.0
        %376 = vmatprep.subr.mxu0 0.0
        %377 = vmatpush1.msra.mxu0 0.0
        %378 = vmatprep.subr.mxu0 0.0
        %379 = vmatpush1.msra.mxu0 0.0
        %380 = vmatprep.subr.mxu0 0.0
        %381 = vmatpush1.msra.mxu0 0.0
        %382 = vmatprep.subr.mxu0 0.0
        %383 = vmatpush1.msra.mxu0 0.0
        %384 = vmatprep.subr.mxu0 0.0
        %385 = vmatpush1.msra.mxu0 0.0
        %386 = vmatprep.subr.mxu0 0.0
        %387 = vmatpush1.msra.mxu0 0.0
        %388 = vmatprep.subr.mxu0 0.0
        %389 = vmatpush1.msra.mxu0 0.0
        %390 = vmatprep.subr.mxu0 0.0
        %391 = vmatpush1.msra.mxu0 0.0
        %392 = vmatprep.subr.mxu0 0.0
        %393 = vmatpush1.msra.mxu0 0.0
        %394 = vmatprep.subr.mxu0 0.0
        %395 = vmatpush1.msra.mxu0 0.0
        %396 = vmatprep.subr.mxu0 0.0
        %397 = vmatpush1.msra.mxu0 0.0
        %398 = vmatprep.subr.mxu0 0.0
        %399 = vmatpush1.msra.mxu0 0.0
        %400 = vmatprep.subr.mxu0 0.0
        %401 = vmatpush1.msra.mxu0 0.0
        %402 = vmatprep.subr.mxu0 0.0
        %403 = vmatpush1.msra.mxu0 0.0
        %404 = vmatprep.subr.mxu0 0.0
        %405 = vmatpush1.msra.mxu0 0.0
        %406 = vmatprep.subr.mxu0 0.0
        %407 = vmatpush1.msra.mxu0 0.0
        %408 = vmatprep.subr.mxu0 0.0
        %409 = vmatpush1.msra.mxu0 0.0
        %410 = vmatprep.subr.mxu0 0.0
        %411 = vmatpush1.msra.mxu0 0.0
        %412 = vmatprep.subr.mxu0 0.0
        %413 = vmatpush1.msra.mxu0 0.0
        %414 = vmatprep.subr.mxu0 0.0
        %415 = vmatpush1.msra.mxu0 0.0
        %416 = vmatprep.subr.mxu0 0.0
        %417 = vmatpush1.msra.mxu0 0.0
        %418 = vmatprep.subr.mxu0 0.0
        %419 = vmatpush1.msra.mxu0 0.0
        %420 = vmatprep.subr.mxu0 0.0
        %421 = vmatpush1.msra.mxu0 0.0
        %422 = vmatprep.subr.mxu0 0.0
        %423 = vmatpush1.msra.mxu0 0.0
        %424 = vmatprep.subr.mxu0 0.0
        %425 = vmatpush1.msra.mxu0 0.0
        %426 = vmatprep.mubr.f32.mxu0 0.0
        %427 = vmatmul.mubr.f32.gmra.mrb[0].mxu0 %v360
        %v428 = vpop.f32.mrb[0].mxu0
        %v429 = vadd.f32 0.0, %v428
        %v430 = vpop.f32.mrb[0].mxu0
        %431 = vdwg.mxu0
        %v433 = vrot.slane %v429, 4
        %vm435 = vcmask 1043456
        %v436 = vsel %vm435, %v347, %v433
        %vm437 = vcmask 64512
        %v439 = vsel %vm437, %v226, 0
        %441 = vmatprep.subr.mxu0 0.0
        %442 = vmatpush1.msra.mxu0 %v436
        %443 = vmatprep.subr.mxu0 0.0
        %444 = vmatpush1.msra.mxu0 0.0
        %445 = vmatprep.subr.mxu0 0.0
        %446 = vmatpush1.msra.mxu0 0.0
        %447 = vmatprep.subr.mxu0 0.0
        %448 = vmatpush1.msra.mxu0 0.0
        %449 = vmatprep.subr.mxu0 0.0
        %450 = vmatpush1.msra.mxu0 0.0
        %451 = vmatprep.subr.mxu0 0.0
        %452 = vmatpush1.msra.mxu0 0.0
        %453 = vmatprep.subr.mxu0 0.0
        %454 = vmatpush1.msra.mxu0 0.0
        %455 = vmatprep.subr.mxu0 0.0
        %456 = vmatpush1.msra.mxu0 0.0
        %457 = vmatprep.subr.mxu0 0.0
        %458 = vmatpush1.msra.mxu0 0.0
        %459 = vmatprep.subr.mxu0 0.0
        %460 = vmatpush1.msra.mxu0 0.0
        %461 = vmatprep.subr.mxu0 0.0
        %462 = vmatpush1.msra.mxu0 0.0
        %463 = vmatprep.subr.mxu0 0.0
        %464 = vmatpush1.msra.mxu0 0.0
        %465 = vmatprep.subr.mxu0 0.0
        %466 = vmatpush1.msra.mxu0 0.0
        %467 = vmatprep.subr.mxu0 0.0
        %468 = vmatpush1.msra.mxu0 0.0
        %469 = vmatprep.subr.mxu0 0.0
        %470 = vmatpush1.msra.mxu0 0.0
        %471 = vmatprep.subr.mxu0 0.0
        %472 = vmatpush1.msra.mxu0 0.0
        %473 = vmatprep.subr.mxu0 0.0
        %474 = vmatpush1.msra.mxu0 0.0
        %475 = vmatprep.subr.mxu0 0.0
        %476 = vmatpush1.msra.mxu0 0.0
        %477 = vmatprep.subr.mxu0 0.0
        %478 = vmatpush1.msra.mxu0 0.0
        %479 = vmatprep.subr.mxu0 0.0
        %480 = vmatpush1.msra.mxu0 0.0
        %481 = vmatprep.subr.mxu0 0.0
        %482 = vmatpush1.msra.mxu0 0.0
        %483 = vmatprep.subr.mxu0 0.0
        %484 = vmatpush1.msra.mxu0 0.0
        %485 = vmatprep.subr.mxu0 0.0
        %486 = vmatpush1.msra.mxu0 0.0
        %487 = vmatprep.subr.mxu0 0.0
        %488 = vmatpush1.msra.mxu0 0.0
        %489 = vmatprep.subr.mxu0 0.0
        %490 = vmatpush1.msra.mxu0 0.0
        %491 = vmatprep.subr.mxu0 0.0
        %492 = vmatpush1.msra.mxu0 0.0
        %493 = vmatprep.subr.mxu0 0.0
        %494 = vmatpush1.msra.mxu0 0.0
        %495 = vmatprep.subr.mxu0 0.0
        %496 = vmatpush1.msra.mxu0 0.0
        %497 = vmatprep.subr.mxu0 0.0
        %498 = vmatpush1.msra.mxu0 0.0
        %499 = vmatprep.subr.mxu0 0.0
        %500 = vmatpush1.msra.mxu0 0.0
        %501 = vmatprep.subr.mxu0 0.0
        %502 = vmatpush1.msra.mxu0 0.0
        %503 = vmatprep.subr.mxu0 0.0
        %504 = vmatpush1.msra.mxu0 0.0
        %505 = vmatprep.mubr.f32.mxu0 0.0
        %506 = vmatmul.mubr.f32.gmra.mrb[0].mxu0 %v439
        %v507 = vpop.f32.mrb[0].mxu0
        %v508 = vadd.f32 0.0, %v507
        %v509 = vpop.f32.mrb[0].mxu0
        %510 = vdwg.mxu0
        %512 = vset.pattern.permute.xlu0 0
        %513 = vperm.xlu0 %512, %v227
        %v514 = vpop.permute.xlu0 %513
        %v516 = vmul.f32 %v508, %v514
        %518 = vset.pattern.permute.xlu0 0
        %519 = vperm.xlu0 %518, %v228
        %v520 = vpop.permute.xlu0 %519
        %v522 = vadd.f32 %v516, %v520
        %v524 = vcombine.high %v522, %v522
        %v526 = vunpack.c.l.s4 1966171168
        %v527 = vunpack.c.0.s8 %v526
        %v528 = vlaneseq
        %v529 = vshrl.u32 %v528, 7
        %v530 = vsub.s32 %v527, %v529
        %v531 = vrot.slane %v522, %v530
        %v533 = vunpack.c.l.s4 1966171168
        %v534 = vunpack.c.0.s8 %v533
        %v535 = vlaneseq
        %v536 = vshrl.u32 %v535, 7
        %v537 = vsub.s32 %v534, %v536
        %v538 = vrot.slane %v524, %v537
        %v539 = vcombine.high %v531, %v531
        %v540 = vcombine.high %v538, %v538
        %v542 = vunpack.c.l.s4 1966171168
        %v543 = vunpack.c.0.s8 %v542
        %v544 = vlaneseq
        %v545 = vshrl.u32 %v544, 7
        %v546 = vsub.s32 %v543, %v545
        %v547 = vrot.slane %v531, %v546
        %v549 = vunpack.c.l.s4 1966171168
        %v550 = vunpack.c.0.s8 %v549
        %v551 = vlaneseq
        %v552 = vshrl.u32 %v551, 7
        %v553 = vsub.s32 %v550, %v552
        %v554 = vrot.slane %v538, %v553
        %v556 = vunpack.c.l.s4 1966171168
        %v557 = vunpack.c.0.s8 %v556
        %v558 = vlaneseq
        %v559 = vshrl.u32 %v558, 7
        %v560 = vsub.s32 %v557, %v559
        %v561 = vrot.slane %v539, %v560
        %v563 = vunpack.c.l.s4 1966171168
        %v564 = vunpack.c.0.s8 %v563
        %v565 = vlaneseq
        %v566 = vshrl.u32 %v565, 7
        %v567 = vsub.s32 %v564, %v566
        %v568 = vrot.slane %v540, %v567
        %v569 = vcombine.high %v547, %v547
        %v570 = vcombine.high %v554, %v554
        %v571 = vcombine.high %v561, %v561
        %v572 = vcombine.high %v568, %v568
        %vm581 = vcmask 57344
        %582 = vst.msk [vmem:[%s215] sm:$0x1] %vm581, %v547
        %583 = vst.msk [vmem:[%s215 + $0x8] sm:$0x1] %vm581, %v561
        %584 = vst.msk [vmem:[%s215 + $0x10] sm:$0x1] %vm581, %v569
        %585 = vst.msk [vmem:[%s215 + $0x18] sm:$0x1] %vm581, %v571
        %586 = vst.msk [vmem:[%s215 + $0x20] sm:$0x1] %vm581, %v554
        %587 = vst.msk [vmem:[%s215 + $0x28] sm:$0x1] %vm581, %v568
        %588 = vst.msk [vmem:[%s215 + $0x30] sm:$0x1] %vm581, %v570
        %589 = vst.msk [vmem:[%s215 + $0x38] sm:$0x1] %vm581, %v572
        %v590 = vld [vmem:[%s224 + $0x2] sm:$0x1]
        %v591 = vld [vmem:[%s224 + $0x12] sm:$0x1]
        %v592 = vld [vmem:[%s224 + $0x22] sm:$0x1]
        %v593 = vld [vmem:[%s224 + $0x32] sm:$0x1]
        %v594 = vmax.f32 %v590, 0.0
        %v595 = vmax.f32 %v591, 0.0
        %v596 = vmax.f32 %v592, 0.0
        %v597 = vmax.f32 %v593, 0.0
        %v598 = vld [vmem:[%s224 + $0x3] sm:$0x1]
        %v599 = vld [vmem:[%s224 + $0x13] sm:$0x1]
        %v600 = vld [vmem:[%s224 + $0x23] sm:$0x1]
        %v601 = vld [vmem:[%s224 + $0x33] sm:$0x1]
        %v602 = vmax.f32 %v598, 0.0
        %v603 = vmax.f32 %v599, 0.0
        %v604 = vmax.f32 %v600, 0.0
        %v605 = vmax.f32 %v601, 0.0
        %v610 = vrot.slane %v595, 7
        %v611 = vsel %vm269, %v610, %v594
        %v612 = vrot.slane %v596, 6
        %v613 = vsel %vm272, %v612, %v611
        %v614 = vrot.slane %v597, 5
        %v615 = vsel %vm275, %v614, %v613
        %v616 = vsel %vm277, %v615, 0
        %618 = vmatprep.subr.mxu0 0.0
        %619 = vmatpush1.msra.mxu0 %v239
        %620 = vmatprep.subr.mxu0 0.0
        %621 = vmatpush1.msra.mxu0 %v240
        %622 = vmatprep.subr.mxu0 0.0
        %623 = vmatpush1.msra.mxu0 0.0
        %624 = vmatprep.subr.mxu0 0.0
        %625 = vmatpush1.msra.mxu0 0.0
        %626 = vmatprep.subr.mxu0 0.0
        %627 = vmatpush1.msra.mxu0 0.0
        %628 = vmatprep.subr.mxu0 0.0
        %629 = vmatpush1.msra.mxu0 0.0
        %630 = vmatprep.subr.mxu0 0.0
        %631 = vmatpush1.msra.mxu0 0.0
        %632 = vmatprep.subr.mxu0 0.0
        %633 = vmatpush1.msra.mxu0 0.0
        %634 = vmatprep.subr.mxu0 0.0
        %635 = vmatpush1.msra.mxu0 0.0
        %636 = vmatprep.subr.mxu0 0.0
        %637 = vmatpush1.msra.mxu0 0.0
        %638 = vmatprep.subr.mxu0 0.0
        %639 = vmatpush1.msra.mxu0 0.0
        %640 = vmatprep.subr.mxu0 0.0
        %641 = vmatpush1.msra.mxu0 0.0
        %642 = vmatprep.subr.mxu0 0.0
        %643 = vmatpush1.msra.mxu0 0.0
        %644 = vmatprep.subr.mxu0 0.0
        %645 = vmatpush1.msra.mxu0 0.0
        %646 = vmatprep.subr.mxu0 0.0
        %647 = vmatpush1.msra.mxu0 0.0
        %648 = vmatprep.subr.mxu0 0.0
        %649 = vmatpush1.msra.mxu0 0.0
        %650 = vmatprep.subr.mxu0 0.0
        %651 = vmatpush1.msra.mxu0 0.0
        %652 = vmatprep.subr.mxu0 0.0
        %653 = vmatpush1.msra.mxu0 0.0
        %654 = vmatprep.subr.mxu0 0.0
        %655 = vmatpush1.msra.mxu0 0.0
        %656 = vmatprep.subr.mxu0 0.0
        %657 = vmatpush1.msra.mxu0 0.0
        %658 = vmatprep.subr.mxu0 0.0
        %659 = vmatpush1.msra.mxu0 0.0
        %660 = vmatprep.subr.mxu0 0.0
        %661 = vmatpush1.msra.mxu0 0.0
        %662 = vmatprep.subr.mxu0 0.0
        %663 = vmatpush1.msra.mxu0 0.0
        %664 = vmatprep.subr.mxu0 0.0
        %665 = vmatpush1.msra.mxu0 0.0
        %666 = vmatprep.subr.mxu0 0.0
        %667 = vmatpush1.msra.mxu0 0.0
        %668 = vmatprep.subr.mxu0 0.0
        %669 = vmatpush1.msra.mxu0 0.0
        %670 = vmatprep.subr.mxu0 0.0
        %671 = vmatpush1.msra.mxu0 0.0
        %672 = vmatprep.subr.mxu0 0.0
        %673 = vmatpush1.msra.mxu0 0.0
        %674 = vmatprep.subr.mxu0 0.0
        %675 = vmatpush1.msra.mxu0 0.0
        %676 = vmatprep.subr.mxu0 0.0
        %677 = vmatpush1.msra.mxu0 0.0
        %678 = vmatprep.subr.mxu0 0.0
        %679 = vmatpush1.msra.mxu0 0.0
        %680 = vmatprep.subr.mxu0 0.0
        %681 = vmatpush1.msra.mxu0 0.0
        %682 = vmatprep.mubr.f32.mxu0 0.0
        %683 = vmatmul.mubr.f32.gmra.mrb[0].mxu0 %v616
        %v684 = vpop.f32.mrb[0].mxu0
        %v685 = vadd.f32 0.0, %v684
        %v686 = vpop.f32.mrb[0].mxu0
        %687 = vdwg.mxu0
        %v692 = vrot.slane %v603, 7
        %v693 = vsel %vm269, %v692, %v602
        %v694 = vrot.slane %v604, 6
        %v695 = vsel %vm272, %v694, %v693
        %v696 = vrot.slane %v605, 5
        %v697 = vsel %vm275, %v696, %v695
        %v698 = vsel %vm277, %v697, 0
        %700 = vmatprep.subr.mxu0 0.0
        %701 = vmatpush1.msra.mxu0 %v246
        %702 = vmatprep.subr.mxu0 0.0
        %703 = vmatpush1.msra.mxu0 %v247
        %704 = vmatprep.subr.mxu0 0.0
        %705 = vmatpush1.msra.mxu0 0.0
        %706 = vmatprep.subr.mxu0 0.0
        %707 = vmatpush1.msra.mxu0 0.0
        %708 = vmatprep.subr.mxu0 0.0
        %709 = vmatpush1.msra.mxu0 0.0
        %710 = vmatprep.subr.mxu0 0.0
        %711 = vmatpush1.msra.mxu0 0.0
        %712 = vmatprep.subr.mxu0 0.0
        %713 = vmatpush1.msra.mxu0 0.0
        %714 = vmatprep.subr.mxu0 0.0
        %715 = vmatpush1.msra.mxu0 0.0
        %716 = vmatprep.subr.mxu0 0.0
        %717 = vmatpush1.msra.mxu0 0.0
        %718 = vmatprep.subr.mxu0 0.0
        %719 = vmatpush1.msra.mxu0 0.0
        %720 = vmatprep.subr.mxu0 0.0
        %721 = vmatpush1.msra.mxu0 0.0
        %722 = vmatprep.subr.mxu0 0.0
        %723 = vmatpush1.msra.mxu0 0.0
        %724 = vmatprep.subr.mxu0 0.0
        %725 = vmatpush1.msra.mxu0 0.0
        %726 = vmatprep.subr.mxu0 0.0
        %727 = vmatpush1.msra.mxu0 0.0
        %728 = vmatprep.subr.mxu0 0.0
        %729 = vmatpush1.msra.mxu0 0.0
        %730 = vmatprep.subr.mxu0 0.0
        %731 = vmatpush1.msra.mxu0 0.0
        %732 = vmatprep.subr.mxu0 0.0
        %733 = vmatpush1.msra.mxu0 0.0
        %734 = vmatprep.subr.mxu0 0.0
        %735 = vmatpush1.msra.mxu0 0.0
        %736 = vmatprep.subr.mxu0 0.0
        %737 = vmatpush1.msra.mxu0 0.0
        %738 = vmatprep.subr.mxu0 0.0
        %739 = vmatpush1.msra.mxu0 0.0
        %740 = vmatprep.subr.mxu0 0.0
        %741 = vmatpush1.msra.mxu0 0.0
        %742 = vmatprep.subr.mxu0 0.0
        %743 = vmatpush1.msra.mxu0 0.0
        %744 = vmatprep.subr.mxu0 0.0
        %745 = vmatpush1.msra.mxu0 0.0
        %746 = vmatprep.subr.mxu0 0.0
        %747 = vmatpush1.msra.mxu0 0.0
        %748 = vmatprep.subr.mxu0 0.0
        %749 = vmatpush1.msra.mxu0 0.0
        %750 = vmatprep.subr.mxu0 0.0
        %751 = vmatpush1.msra.mxu0 0.0
        %752 = vmatprep.subr.mxu0 0.0
        %753 = vmatpush1.msra.mxu0 0.0
        %754 = vmatprep.subr.mxu0 0.0
        %755 = vmatpush1.msra.mxu0 0.0
        %756 = vmatprep.subr.mxu0 0.0
        %757 = vmatpush1.msra.mxu0 0.0
        %758 = vmatprep.subr.mxu0 0.0
        %759 = vmatpush1.msra.mxu0 0.0
        %760 = vmatprep.subr.mxu0 0.0
        %761 = vmatpush1.msra.mxu0 0.0
        %762 = vmatprep.subr.mxu0 0.0
        %763 = vmatpush1.msra.mxu0 0.0
        %764 = vmatprep.mubr.f32.mxu0 0.0
        %765 = vmatmul.mubr.f32.gmra.mrb[0].mxu0 %v698
        %v766 = vpop.f32.mrb[0].mxu0
        %v767 = vadd.f32 0.0, %v766
        %v768 = vpop.f32.mrb[0].mxu0
        %769 = vdwg.mxu0
        %v771 = vrot.slane %v767, 4
        %v773 = vsel %vm435, %v685, %v771
        %774 = vmatprep.subr.mxu0 0.0
        %775 = vmatpush1.msra.mxu0 %v773
        %776 = vmatprep.subr.mxu0 0.0
        %777 = vmatpush1.msra.mxu0 0.0
        %778 = vmatprep.subr.mxu0 0.0
        %779 = vmatpush1.msra.mxu0 0.0
        %780 = vmatprep.subr.mxu0 0.0
        %781 = vmatpush1.msra.mxu0 0.0
        %782 = vmatprep.subr.mxu0 0.0
        %783 = vmatpush1.msra.mxu0 0.0
        %784 = vmatprep.subr.mxu0 0.0
        %785 = vmatpush1.msra.mxu0 0.0
        %786 = vmatprep.subr.mxu0 0.0
        %787 = vmatpush1.msra.mxu0 0.0
        %788 = vmatprep.subr.mxu0 0.0
        %789 = vmatpush1.msra.mxu0 0.0
        %790 = vmatprep.subr.mxu0 0.0
        %791 = vmatpush1.msra.mxu0 0.0
        %792 = vmatprep.subr.mxu0 0.0
        %793 = vmatpush1.msra.mxu0 0.0
        %794 = vmatprep.subr.mxu0 0.0
        %795 = vmatpush1.msra.mxu0 0.0
        %796 = vmatprep.subr.mxu0 0.0
        %797 = vmatpush1.msra.mxu0 0.0
        %798 = vmatprep.subr.mxu0 0.0
        %799 = vmatpush1.msra.mxu0 0.0
        %800 = vmatprep.subr.mxu0 0.0
        %801 = vmatpush1.msra.mxu0 0.0
        %802 = vmatprep.subr.mxu0 0.0
        %803 = vmatpush1.msra.mxu0 0.0
        %804 = vmatprep.subr.mxu0 0.0
        %805 = vmatpush1.msra.mxu0 0.0
        %806 = vmatprep.subr.mxu0 0.0
        %807 = vmatpush1.msra.mxu0 0.0
        %808 = vmatprep.subr.mxu0 0.0
        %809 = vmatpush1.msra.mxu0 0.0
        %810 = vmatprep.subr.mxu0 0.0
        %811 = vmatpush1.msra.mxu0 0.0
        %812 = vmatprep.subr.mxu0 0.0
        %813 = vmatpush1.msra.mxu0 0.0
        %814 = vmatprep.subr.mxu0 0.0
        %815 = vmatpush1.msra.mxu0 0.0
        %816 = vmatprep.subr.mxu0 0.0
        %817 = vmatpush1.msra.mxu0 0.0
        %818 = vmatprep.subr.mxu0 0.0
        %819 = vmatpush1.msra.mxu0 0.0
        %820 = vmatprep.subr.mxu0 0.0
        %821 = vmatpush1.msra.mxu0 0.0
        %822 = vmatprep.subr.mxu0 0.0
        %823 = vmatpush1.msra.mxu0 0.0
        %824 = vmatprep.subr.mxu0 0.0
        %825 = vmatpush1.msra.mxu0 0.0
        %826 = vmatprep.subr.mxu0 0.0
        %827 = vmatpush1.msra.mxu0 0.0
        %828 = vmatprep.subr.mxu0 0.0
        %829 = vmatpush1.msra.mxu0 0.0
        %830 = vmatprep.subr.mxu0 0.0
        %831 = vmatpush1.msra.mxu0 0.0
        %832 = vmatprep.subr.mxu0 0.0
        %833 = vmatpush1.msra.mxu0 0.0
        %834 = vmatprep.subr.mxu0 0.0
        %835 = vmatpush1.msra.mxu0 0.0
        %836 = vmatprep.subr.mxu0 0.0
        %837 = vmatpush1.msra.mxu0 0.0
        %838 = vmatprep.mubr.f32.mxu0 0.0
        %839 = vmatmul.mubr.f32.gmra.mrb[0].mxu0 %v439
        %v840 = vpop.f32.mrb[0].mxu0
        %v841 = vadd.f32 0.0, %v840
        %v842 = vpop.f32.mrb[0].mxu0
        %843 = vdwg.mxu0
        %v844 = vmul.f32 %v841, %v514
        %v845 = vadd.f32 %v844, %v520
        %v847 = vcombine.high %v845, %v845
        %v849 = vunpack.c.l.s4 1966171168
        %v850 = vunpack.c.0.s8 %v849
        %v851 = vlaneseq
        %v852 = vshrl.u32 %v851, 7
        %v853 = vsub.s32 %v850, %v852
        %v854 = vrot.slane %v845, %v853
        %v856 = vunpack.c.l.s4 1966171168
        %v857 = vunpack.c.0.s8 %v856
        %v858 = vlaneseq
        %v859 = vshrl.u32 %v858, 7
        %v860 = vsub.s32 %v857, %v859
        %v861 = vrot.slane %v847, %v860
        %v862 = vcombine.high %v854, %v854
        %v863 = vcombine.high %v861, %v861
        %v865 = vunpack.c.l.s4 1966171168
        %v866 = vunpack.c.0.s8 %v865
        %v867 = vlaneseq
        %v868 = vshrl.u32 %v867, 7
        %v869 = vsub.s32 %v866, %v868
        %v870 = vrot.slane %v854, %v869
        %v872 = vunpack.c.l.s4 1966171168
        %v873 = vunpack.c.0.s8 %v872
        %v874 = vlaneseq
        %v875 = vshrl.u32 %v874, 7
        %v876 = vsub.s32 %v873, %v875
        %v877 = vrot.slane %v861, %v876
        %v879 = vunpack.c.l.s4 1966171168
        %v880 = vunpack.c.0.s8 %v879
        %v881 = vlaneseq
        %v882 = vshrl.u32 %v881, 7
        %v883 = vsub.s32 %v880, %v882
        %v884 = vrot.slane %v862, %v883
        %v886 = vunpack.c.l.s4 1966171168
        %v887 = vunpack.c.0.s8 %v886
        %v888 = vlaneseq
        %v889 = vshrl.u32 %v888, 7
        %v890 = vsub.s32 %v887, %v889
        %v891 = vrot.slane %v863, %v890
        %v892 = vcombine.high %v870, %v870
        %v893 = vcombine.high %v877, %v877
        %v894 = vcombine.high %v884, %v884
        %v895 = vcombine.high %v891, %v891
        %904 = vst.msk [vmem:[%s215 + $0x1] sm:$0x1] %vm581, %v870
        %905 = vst.msk [vmem:[%s215 + $0x9] sm:$0x1] %vm581, %v884
        %906 = vst.msk [vmem:[%s215 + $0x11] sm:$0x1] %vm581, %v892
        %907 = vst.msk [vmem:[%s215 + $0x19] sm:$0x1] %vm581, %v894
        %908 = vst.msk [vmem:[%s215 + $0x21] sm:$0x1] %vm581, %v877
        %909 = vst.msk [vmem:[%s215 + $0x29] sm:$0x1] %vm581, %v891
        %910 = vst.msk [vmem:[%s215 + $0x31] sm:$0x1] %vm581, %v893
        %911 = vst.msk [vmem:[%s215 + $0x39] sm:$0x1] %vm581, %v895
        %v912 = vld [vmem:[%s224 + $0x4] sm:$0x1]
        %v913 = vld [vmem:[%s224 + $0x14] sm:$0x1]
        %v914 = vld [vmem:[%s224 + $0x24] sm:$0x1]
        %v915 = vld [vmem:[%s224 + $0x34] sm:$0x1]
        %v916 = vmax.f32 %v912, 0.0
        %v917 = vmax.f32 %v913, 0.0
        %v918 = vmax.f32 %v914, 0.0
        %v919 = vmax.f32 %v915, 0.0
        %v920 = vld [vmem:[%s224 + $0x5] sm:$0x1]
        %v921 = vld [vmem:[%s224 + $0x15] sm:$0x1]
        %v922 = vld [vmem:[%s224 + $0x25] sm:$0x1]
        %v923 = vld [vmem:[%s224 + $0x35] sm:$0x1]
        %v924 = vmax.f32 %v920, 0.0
        %v925 = vmax.f32 %v921, 0.0
        %v926 = vmax.f32 %v922, 0.0
        %v927 = vmax.f32 %v923, 0.0
        %v932 = vrot.slane %v917, 7
        %v933 = vsel %vm269, %v932, %v916
        %v934 = vrot.slane %v918, 6
        %v935 = vsel %vm272, %v934, %v933
        %v936 = vrot.slane %v919, 5
        %v937 = vsel %vm275, %v936, %v935
        %v938 = vsel %vm277, %v937, 0
        %940 = vmatprep.subr.mxu0 0.0
        %941 = vmatpush1.msra.mxu0 %v239
        %942 = vmatprep.subr.mxu0 0.0
        %943 = vmatpush1.msra.mxu0 %v240
        %944 = vmatprep.subr.mxu0 0.0
        %945 = vmatpush1.msra.mxu0 0.0
        %946 = vmatprep.subr.mxu0 0.0
        %947 = vmatpush1.msra.mxu0 0.0
        %948 = vmatprep.subr.mxu0 0.0
        %949 = vmatpush1.msra.mxu0 0.0
        %950 = vmatprep.subr.mxu0 0.0
        %951 = vmatpush1.msra.mxu0 0.0
        %952 = vmatprep.subr.mxu0 0.0
        %953 = vmatpush1.msra.mxu0 0.0
        %954 = vmatprep.subr.mxu0 0.0
        %955 = vmatpush1.msra.mxu0 0.0
        %956 = vmatprep.subr.mxu0 0.0
        %957 = vmatpush1.msra.mxu0 0.0
        %958 = vmatprep.subr.mxu0 0.0
        %959 = vmatpush1.msra.mxu0 0.0
        %960 = vmatprep.subr.mxu0 0.0
        %961 = vmatpush1.msra.mxu0 0.0
        %962 = vmatprep.subr.mxu0 0.0
        %963 = vmatpush1.msra.mxu0 0.0
        %964 = vmatprep.subr.mxu0 0.0
        %965 = vmatpush1.msra.mxu0 0.0
        %966 = vmatprep.subr.mxu0 0.0
        %967 = vmatpush1.msra.mxu0 0.0
        %968 = vmatprep.subr.mxu0 0.0
        %969 = vmatpush1.msra.mxu0 0.0
        %970 = vmatprep.subr.mxu0 0.0
        %971 = vmatpush1.msra.mxu0 0.0
        %972 = vmatprep.subr.mxu0 0.0
        %973 = vmatpush1.msra.mxu0 0.0
        %974 = vmatprep.subr.mxu0 0.0
        %975 = vmatpush1.msra.mxu0 0.0
        %976 = vmatprep.subr.mxu0 0.0
        %977 = vmatpush1.msra.mxu0 0.0
        %978 = vmatprep.subr.mxu0 0.0
        %979 = vmatpush1.msra.mxu0 0.0
        %980 = vmatprep.subr.mxu0 0.0
        %981 = vmatpush1.msra.mxu0 0.0
        %982 = vmatprep.subr.mxu0 0.0
        %983 = vmatpush1.msra.mxu0 0.0
        %984 = vmatprep.subr.mxu0 0.0
        %985 = vmatpush1.msra.mxu0 0.0
        %986 = vmatprep.subr.mxu0 0.0
        %987 = vmatpush1.msra.mxu0 0.0
        %988 = vmatprep.subr.mxu0 0.0
        %989 = vmatpush1.msra.mxu0 0.0
        %990 = vmatprep.subr.mxu0 0.0
        %991 = vmatpush1.msra.mxu0 0.0
        %992 = vmatprep.subr.mxu0 0.0
        %993 = vmatpush1.msra.mxu0 0.0
        %994 = vmatprep.subr.mxu0 0.0
        %995 = vmatpush1.msra.mxu0 0.0
        %996 = vmatprep.subr.mxu0 0.0
        %997 = vmatpush1.msra.mxu0 0.0
        %998 = vmatprep.subr.mxu0 0.0
        %999 = vmatpush1.msra.mxu0 0.0
        %1000 = vmatprep.subr.mxu0 0.0
        %1001 = vmatpush1.msra.mxu0 0.0
        %1002 = vmatprep.subr.mxu0 0.0
        %1003 = vmatpush1.msra.mxu0 0.0
        %1004 = vmatprep.mubr.f32.mxu0 0.0
        %1005 = vmatmul.mubr.f32.gmra.mrb[0].mxu0 %v938
        %v1006 = vpop.f32.mrb[0].mxu0
        %v1007 = vadd.f32 0.0, %v1006
        %v1008 = vpop.f32.mrb[0].mxu0
        %1009 = vdwg.mxu0
        %v1014 = vrot.slane %v925, 7
        %v1015 = vsel %vm269, %v1014, %v924
        %v1016 = vrot.slane %v926, 6
        %v1017 = vsel %vm272, %v1016, %v1015
        %v1018 = vrot.slane %v927, 5
        %v1019 = vsel %vm275, %v1018, %v1017
        %v1020 = vsel %vm277, %v1019, 0
        %1022 = vmatprep.subr.mxu0 0.0
        %1023 = vmatpush1.msra.mxu0 %v246
        %1024 = vmatprep.subr.mxu0 0.0
        %1025 = vmatpush1.msra.mxu0 %v247
        %1026 = vmatprep.subr.mxu0 0.0
        %1027 = vmatpush1.msra.mxu0 0.0
        %1028 = vmatprep.subr.mxu0 0.0
        %1029 = vmatpush1.msra.mxu0 0.0
        %1030 = vmatprep.subr.mxu0 0.0
        %1031 = vmatpush1.msra.mxu0 0.0
        %1032 = vmatprep.subr.mxu0 0.0
        %1033 = vmatpush1.msra.mxu0 0.0
        %1034 = vmatprep.subr.mxu0 0.0
        %1035 = vmatpush1.msra.mxu0 0.0
        %1036 = vmatprep.subr.mxu0 0.0
        %1037 = vmatpush1.msra.mxu0 0.0
        %1038 = vmatprep.subr.mxu0 0.0
        %1039 = vmatpush1.msra.mxu0 0.0
        %1040 = vmatprep.subr.mxu0 0.0
        %1041 = vmatpush1.msra.mxu0 0.0
        %1042 = vmatprep.subr.mxu0 0.0
        %1043 = vmatpush1.msra.mxu0 0.0
        %1044 = vmatprep.subr.mxu0 0.0
        %1045 = vmatpush1.msra.mxu0 0.0
        %1046 = vmatprep.subr.mxu0 0.0
        %1047 = vmatpush1.msra.mxu0 0.0
        %1048 = vmatprep.subr.mxu0 0.0
        %1049 = vmatpush1.msra.mxu0 0.0
        %1050 = vmatprep.subr.mxu0 0.0
        %1051 = vmatpush1.msra.mxu0 0.0
        %1052 = vmatprep.subr.mxu0 0.0
        %1053 = vmatpush1.msra.mxu0 0.0
        %1054 = vmatprep.subr.mxu0 0.0
        %1055 = vmatpush1.msra.mxu0 0.0
        %1056 = vmatprep.subr.mxu0 0.0
        %1057 = vmatpush1.msra.mxu0 0.0
        %1058 = vmatprep.subr.mxu0 0.0
        %1059 = vmatpush1.msra.mxu0 0.0
        %1060 = vmatprep.subr.mxu0 0.0
        %1061 = vmatpush1.msra.mxu0 0.0
        %1062 = vmatprep.subr.mxu0 0.0
        %1063 = vmatpush1.msra.mxu0 0.0
        %1064 = vmatprep.subr.mxu0 0.0
        %1065 = vmatpush1.msra.mxu0 0.0
        %1066 = vmatprep.subr.mxu0 0.0
        %1067 = vmatpush1.msra.mxu0 0.0
        %1068 = vmatprep.subr.mxu0 0.0
        %1069 = vmatpush1.msra.mxu0 0.0
        %1070 = vmatprep.subr.mxu0 0.0
        %1071 = vmatpush1.msra.mxu0 0.0
        %1072 = vmatprep.subr.mxu0 0.0
        %1073 = vmatpush1.msra.mxu0 0.0
        %1074 = vmatprep.subr.mxu0 0.0
        %1075 = vmatpush1.msra.mxu0 0.0
        %1076 = vmatprep.subr.mxu0 0.0
        %1077 = vmatpush1.msra.mxu0 0.0
        %1078 = vmatprep.subr.mxu0 0.0
        %1079 = vmatpush1.msra.mxu0 0.0
        %1080 = vmatprep.subr.mxu0 0.0
        %1081 = vmatpush1.msra.mxu0 0.0
        %1082 = vmatprep.subr.mxu0 0.0
        %1083 = vmatpush1.msra.mxu0 0.0
        %1084 = vmatprep.subr.mxu0 0.0
        %1085 = vmatpush1.msra.mxu0 0.0
        %1086 = vmatprep.mubr.f32.mxu0 0.0
        %1087 = vmatmul.mubr.f32.gmra.mrb[0].mxu0 %v1020
        %v1088 = vpop.f32.mrb[0].mxu0
        %v1089 = vadd.f32 0.0, %v1088
        %v1090 = vpop.f32.mrb[0].mxu0
        %1091 = vdwg.mxu0
        %v1093 = vrot.slane %v1089, 4
        %v1095 = vsel %vm435, %v1007, %v1093
        %1096 = vmatprep.subr.mxu0 0.0
        %1097 = vmatpush1.msra.mxu0 %v1095
        %1098 = vmatprep.subr.mxu0 0.0
        %1099 = vmatpush1.msra.mxu0 0.0
        %1100 = vmatprep.subr.mxu0 0.0
        %1101 = vmatpush1.msra.mxu0 0.0
        %1102 = vmatprep.subr.mxu0 0.0
        %1103 = vmatpush1.msra.mxu0 0.0
        %1104 = vmatprep.subr.mxu0 0.0
        %1105 = vmatpush1.msra.mxu0 0.0
        %1106 = vmatprep.subr.mxu0 0.0
        %1107 = vmatpush1.msra.mxu0 0.0
        %1108 = vmatprep.subr.mxu0 0.0
        %1109 = vmatpush1.msra.mxu0 0.0
        %1110 = vmatprep.subr.mxu0 0.0
        %1111 = vmatpush1.msra.mxu0 0.0
        %1112 = vmatprep.subr.mxu0 0.0
        %1113 = vmatpush1.msra.mxu0 0.0
        %1114 = vmatprep.subr.mxu0 0.0
        %1115 = vmatpush1.msra.mxu0 0.0
        %1116 = vmatprep.subr.mxu0 0.0
        %1117 = vmatpush1.msra.mxu0 0.0
        %1118 = vmatprep.subr.mxu0 0.0
        %1119 = vmatpush1.msra.mxu0 0.0
        %1120 = vmatprep.subr.mxu0 0.0
        %1121 = vmatpush1.msra.mxu0 0.0
        %1122 = vmatprep.subr.mxu0 0.0
        %1123 = vmatpush1.msra.mxu0 0.0
        %1124 = vmatprep.subr.mxu0 0.0
        %1125 = vmatpush1.msra.mxu0 0.0
        %1126 = vmatprep.subr.mxu0 0.0
        %1127 = vmatpush1.msra.mxu0 0.0
        %1128 = vmatprep.subr.mxu0 0.0
        %1129 = vmatpush1.msra.mxu0 0.0
        %1130 = vmatprep.subr.mxu0 0.0
        %1131 = vmatpush1.msra.mxu0 0.0
        %1132 = vmatprep.subr.mxu0 0.0
        %1133 = vmatpush1.msra.mxu0 0.0
        %1134 = vmatprep.subr.mxu0 0.0
        %1135 = vmatpush1.msra.mxu0 0.0
        %1136 = vmatprep.subr.mxu0 0.0
        %1137 = vmatpush1.msra.mxu0 0.0
        %1138 = vmatprep.subr.mxu0 0.0
        %1139 = vmatpush1.msra.mxu0 0.0
        %1140 = vmatprep.subr.mxu0 0.0
        %1141 = vmatpush1.msra.mxu0 0.0
        %1142 = vmatprep.subr.mxu0 0.0
        %1143 = vmatpush1.msra.mxu0 0.0
        %1144 = vmatprep.subr.mxu0 0.0
        %1145 = vmatpush1.msra.mxu0 0.0
        %1146 = vmatprep.subr.mxu0 0.0
        %1147 = vmatpush1.msra.mxu0 0.0
        %1148 = vmatprep.subr.mxu0 0.0
        %1149 = vmatpush1.msra.mxu0 0.0
        %1150 = vmatprep.subr.mxu0 0.0
        %1151 = vmatpush1.msra.mxu0 0.0
        %1152 = vmatprep.subr.mxu0 0.0
        %1153 = vmatpush1.msra.mxu0 0.0
        %1154 = vmatprep.subr.mxu0 0.0
        %1155 = vmatpush1.msra.mxu0 0.0
        %1156 = vmatprep.subr.mxu0 0.0
        %1157 = vmatpush1.msra.mxu0 0.0
        %1158 = vmatprep.subr.mxu0 0.0
        %1159 = vmatpush1.msra.mxu0 0.0
        %1160 = vmatprep.mubr.f32.mxu0 0.0
        %1161 = vmatmul.mubr.f32.gmra.mrb[0].mxu0 %v439
        %v1162 = vpop.f32.mrb[0].mxu0
        %v1163 = vadd.f32 0.0, %v1162
        %v1164 = vpop.f32.mrb[0].mxu0
        %1165 = vdwg.mxu0
        %v1166 = vmul.f32 %v1163, %v514
        %v1167 = vadd.f32 %v1166, %v520
        %v1169 = vcombine.high %v1167, %v1167
        %v1171 = vunpack.c.l.s4 1966171168
        %v1172 = vunpack.c.0.s8 %v1171
        %v1173 = vlaneseq
        %v1174 = vshrl.u32 %v1173, 7
        %v1175 = vsub.s32 %v1172, %v1174
        %v1176 = vrot.slane %v1167, %v1175
        %v1178 = vunpack.c.l.s4 1966171168
        %v1179 = vunpack.c.0.s8 %v1178
        %v1180 = vlaneseq
        %v1181 = vshrl.u32 %v1180, 7
        %v1182 = vsub.s32 %v1179, %v1181
        %v1183 = vrot.slane %v1169, %v1182
        %v1184 = vcombine.high %v1176, %v1176
        %v1185 = vcombine.high %v1183, %v1183
        %v1187 = vunpack.c.l.s4 1966171168
        %v1188 = vunpack.c.0.s8 %v1187
        %v1189 = vlaneseq
        %v1190 = vshrl.u32 %v1189, 7
        %v1191 = vsub.s32 %v1188, %v1190
        %v1192 = vrot.slane %v1176, %v1191
        %v1194 = vunpack.c.l.s4 1966171168
        %v1195 = vunpack.c.0.s8 %v1194
        %v1196 = vlaneseq
        %v1197 = vshrl.u32 %v1196, 7
        %v1198 = vsub.s32 %v1195, %v1197
        %v1199 = vrot.slane %v1183, %v1198
        %v1201 = vunpack.c.l.s4 1966171168
        %v1202 = vunpack.c.0.s8 %v1201
        %v1203 = vlaneseq
        %v1204 = vshrl.u32 %v1203, 7
        %v1205 = vsub.s32 %v1202, %v1204
        %v1206 = vrot.slane %v1184, %v1205
        %v1208 = vunpack.c.l.s4 1966171168
        %v1209 = vunpack.c.0.s8 %v1208
        %v1210 = vlaneseq
        %v1211 = vshrl.u32 %v1210, 7
        %v1212 = vsub.s32 %v1209, %v1211
        %v1213 = vrot.slane %v1185, %v1212
        %v1214 = vcombine.high %v1192, %v1192
        %v1215 = vcombine.high %v1199, %v1199
        %v1216 = vcombine.high %v1206, %v1206
        %v1217 = vcombine.high %v1213, %v1213
        %1226 = vst.msk [vmem:[%s215 + $0x2] sm:$0x1] %vm581, %v1192
        %1227 = vst.msk [vmem:[%s215 + $0xa] sm:$0x1] %vm581, %v1206
        %1228 = vst.msk [vmem:[%s215 + $0x12] sm:$0x1] %vm581, %v1214
        %1229 = vst.msk [vmem:[%s215 + $0x1a] sm:$0x1] %vm581, %v1216
        %1230 = vst.msk [vmem:[%s215 + $0x22] sm:$0x1] %vm581, %v1199
        %1231 = vst.msk [vmem:[%s215 + $0x2a] sm:$0x1] %vm581, %v1213
        %1232 = vst.msk [vmem:[%s215 + $0x32] sm:$0x1] %vm581, %v1215
        %1233 = vst.msk [vmem:[%s215 + $0x3a] sm:$0x1] %vm581, %v1217
        %v1234 = vld [vmem:[%s224 + $0x6] sm:$0x1]
        %v1235 = vld [vmem:[%s224 + $0x16] sm:$0x1]
        %v1236 = vld [vmem:[%s224 + $0x26] sm:$0x1]
        %v1237 = vld [vmem:[%s224 + $0x36] sm:$0x1]
        %v1238 = vmax.f32 %v1234, 0.0
        %v1239 = vmax.f32 %v1235, 0.0
        %v1240 = vmax.f32 %v1236, 0.0
        %v1241 = vmax.f32 %v1237, 0.0
        %v1242 = vld [vmem:[%s224 + $0x7] sm:$0x1]
        %v1243 = vld [vmem:[%s224 + $0x17] sm:$0x1]
        %v1244 = vld [vmem:[%s224 + $0x27] sm:$0x1]
        %v1245 = vld [vmem:[%s224 + $0x37] sm:$0x1]
        %v1246 = vmax.f32 %v1242, 0.0
        %v1247 = vmax.f32 %v1243, 0.0
        %v1248 = vmax.f32 %v1244, 0.0
        %v1249 = vmax.f32 %v1245, 0.0
        %v1254 = vrot.slane %v1239, 7
        %v1255 = vsel %vm269, %v1254, %v1238
        %v1256 = vrot.slane %v1240, 6
        %v1257 = vsel %vm272, %v1256, %v1255
        %v1258 = vrot.slane %v1241, 5
        %v1259 = vsel %vm275, %v1258, %v1257
        %v1260 = vsel %vm277, %v1259, 0
        %1262 = vmatprep.subr.mxu0 0.0
        %1263 = vmatpush1.msra.mxu0 %v239
        %1264 = vmatprep.subr.mxu0 0.0
        %1265 = vmatpush1.msra.mxu0 %v240
        %1266 = vmatprep.subr.mxu0 0.0
        %1267 = vmatpush1.msra.mxu0 0.0
        %1268 = vmatprep.subr.mxu0 0.0
        %1269 = vmatpush1.msra.mxu0 0.0
        %1270 = vmatprep.subr.mxu0 0.0
        %1271 = vmatpush1.msra.mxu0 0.0
        %1272 = vmatprep.subr.mxu0 0.0
        %1273 = vmatpush1.msra.mxu0 0.0
        %1274 = vmatprep.subr.mxu0 0.0
        %1275 = vmatpush1.msra.mxu0 0.0
        %1276 = vmatprep.subr.mxu0 0.0
        %1277 = vmatpush1.msra.mxu0 0.0
        %1278 = vmatprep.subr.mxu0 0.0
        %1279 = vmatpush1.msra.mxu0 0.0
        %1280 = vmatprep.subr.mxu0 0.0
        %1281 = vmatpush1.msra.mxu0 0.0
        %1282 = vmatprep.subr.mxu0 0.0
        %1283 = vmatpush1.msra.mxu0 0.0
        %1284 = vmatprep.subr.mxu0 0.0
        %1285 = vmatpush1.msra.mxu0 0.0
        %1286 = vmatprep.subr.mxu0 0.0
        %1287 = vmatpush1.msra.mxu0 0.0
        %1288 = vmatprep.subr.mxu0 0.0
        %1289 = vmatpush1.msra.mxu0 0.0
        %1290 = vmatprep.subr.mxu0 0.0
        %1291 = vmatpush1.msra.mxu0 0.0
        %1292 = vmatprep.subr.mxu0 0.0
        %1293 = vmatpush1.msra.mxu0 0.0
        %1294 = vmatprep.subr.mxu0 0.0
        %1295 = vmatpush1.msra.mxu0 0.0
        %1296 = vmatprep.subr.mxu0 0.0
        %1297 = vmatpush1.msra.mxu0 0.0
        %1298 = vmatprep.subr.mxu0 0.0
        %1299 = vmatpush1.msra.mxu0 0.0
        %1300 = vmatprep.subr.mxu0 0.0
        %1301 = vmatpush1.msra.mxu0 0.0
        %1302 = vmatprep.subr.mxu0 0.0
        %1303 = vmatpush1.msra.mxu0 0.0
        %1304 = vmatprep.subr.mxu0 0.0
        %1305 = vmatpush1.msra.mxu0 0.0
        %1306 = vmatprep.subr.mxu0 0.0
        %1307 = vmatpush1.msra.mxu0 0.0
        %1308 = vmatprep.subr.mxu0 0.0
        %1309 = vmatpush1.msra.mxu0 0.0
        %1310 = vmatprep.subr.mxu0 0.0
        %1311 = vmatpush1.msra.mxu0 0.0
        %1312 = vmatprep.subr.mxu0 0.0
        %1313 = vmatpush1.msra.mxu0 0.0
        %1314 = vmatprep.subr.mxu0 0.0
        %1315 = vmatpush1.msra.mxu0 0.0
        %1316 = vmatprep.subr.mxu0 0.0
        %1317 = vmatpush1.msra.mxu0 0.0
        %1318 = vmatprep.subr.mxu0 0.0
        %1319 = vmatpush1.msra.mxu0 0.0
        %1320 = vmatprep.subr.mxu0 0.0
        %1321 = vmatpush1.msra.mxu0 0.0
        %1322 = vmatprep.subr.mxu0 0.0
        %1323 = vmatpush1.msra.mxu0 0.0
        %1324 = vmatprep.subr.mxu0 0.0
        %1325 = vmatpush1.msra.mxu0 0.0
        %1326 = vmatprep.mubr.f32.mxu0 0.0
        %1327 = vmatmul.mubr.f32.gmra.mrb[0].mxu0 %v1260
        %v1328 = vpop.f32.mrb[0].mxu0
        %v1329 = vadd.f32 0.0, %v1328
        %v1330 = vpop.f32.mrb[0].mxu0
        %1331 = vdwg.mxu0
        %v1336 = vrot.slane %v1247, 7
        %v1337 = vsel %vm269, %v1336, %v1246
        %v1338 = vrot.slane %v1248, 6
        %v1339 = vsel %vm272, %v1338, %v1337
        %v1340 = vrot.slane %v1249, 5
        %v1341 = vsel %vm275, %v1340, %v1339
        %v1342 = vsel %vm277, %v1341, 0
        %1344 = vmatprep.subr.mxu0 0.0
        %1345 = vmatpush1.msra.mxu0 %v246
        %1346 = vmatprep.subr.mxu0 0.0
        %1347 = vmatpush1.msra.mxu0 %v247
        %1348 = vmatprep.subr.mxu0 0.0
        %1349 = vmatpush1.msra.mxu0 0.0
        %1350 = vmatprep.subr.mxu0 0.0
        %1351 = vmatpush1.msra.mxu0 0.0
        %1352 = vmatprep.subr.mxu0 0.0
        %1353 = vmatpush1.msra.mxu0 0.0
        %1354 = vmatprep.subr.mxu0 0.0
        %1355 = vmatpush1.msra.mxu0 0.0
        %1356 = vmatprep.subr.mxu0 0.0
        %1357 = vmatpush1.msra.mxu0 0.0
        %1358 = vmatprep.subr.mxu0 0.0
        %1359 = vmatpush1.msra.mxu0 0.0
        %1360 = vmatprep.subr.mxu0 0.0
        %1361 = vmatpush1.msra.mxu0 0.0
        %1362 = vmatprep.subr.mxu0 0.0
        %1363 = vmatpush1.msra.mxu0 0.0
        %1364 = vmatprep.subr.mxu0 0.0
        %1365 = vmatpush1.msra.mxu0 0.0
        %1366 = vmatprep.subr.mxu0 0.0
        %1367 = vmatpush1.msra.mxu0 0.0
        %1368 = vmatprep.subr.mxu0 0.0
        %1369 = vmatpush1.msra.mxu0 0.0
        %1370 = vmatprep.subr.mxu0 0.0
        %1371 = vmatpush1.msra.mxu0 0.0
        %1372 = vmatprep.subr.mxu0 0.0
        %1373 = vmatpush1.msra.mxu0 0.0
        %1374 = vmatprep.subr.mxu0 0.0
        %1375 = vmatpush1.msra.mxu0 0.0
        %1376 = vmatprep.subr.mxu0 0.0
        %1377 = vmatpush1.msra.mxu0 0.0
        %1378 = vmatprep.subr.mxu0 0.0
        %1379 = vmatpush1.msra.mxu0 0.0
        %1380 = vmatprep.subr.mxu0 0.0
        %1381 = vmatpush1.msra.mxu0 0.0
        %1382 = vmatprep.subr.mxu0 0.0
        %1383 = vmatpush1.msra.mxu0 0.0
        %1384 = vmatprep.subr.mxu0 0.0
        %1385 = vmatpush1.msra.mxu0 0.0
        %1386 = vmatprep.subr.mxu0 0.0
        %1387 = vmatpush1.msra.mxu0 0.0
        %1388 = vmatprep.subr.mxu0 0.0
        %1389 = vmatpush1.msra.mxu0 0.0
        %1390 = vmatprep.subr.mxu0 0.0
        %1391 = vmatpush1.msra.mxu0 0.0
        %1392 = vmatprep.subr.mxu0 0.0
        %1393 = vmatpush1.msra.mxu0 0.0
        %1394 = vmatprep.subr.mxu0 0.0
        %1395 = vmatpush1.msra.mxu0 0.0
        %1396 = vmatprep.subr.mxu0 0.0
        %1397 = vmatpush1.msra.mxu0 0.0
        %1398 = vmatprep.subr.mxu0 0.0
        %1399 = vmatpush1.msra.mxu0 0.0
        %1400 = vmatprep.subr.mxu0 0.0
        %1401 = vmatpush1.msra.mxu0 0.0
        %1402 = vmatprep.subr.mxu0 0.0
        %1403 = vmatpush1.msra.mxu0 0.0
        %1404 = vmatprep.subr.mxu0 0.0
        %1405 = vmatpush1.msra.mxu0 0.0
        %1406 = vmatprep.subr.mxu0 0.0
        %1407 = vmatpush1.msra.mxu0 0.0
        %1408 = vmatprep.mubr.f32.mxu0 0.0
        %1409 = vmatmul.mubr.f32.gmra.mrb[0].mxu0 %v1342
        %v1410 = vpop.f32.mrb[0].mxu0
        %v1411 = vadd.f32 0.0, %v1410
        %v1412 = vpop.f32.mrb[0].mxu0
        %1413 = vdwg.mxu0
        %v1415 = vrot.slane %v1411, 4
        %v1417 = vsel %vm435, %v1329, %v1415
        %1418 = vmatprep.subr.mxu0 0.0
        %1419 = vmatpush1.msra.mxu0 %v1417
        %1420 = vmatprep.subr.mxu0 0.0
        %1421 = vmatpush1.msra.mxu0 0.0
        %1422 = vmatprep.subr.mxu0 0.0
        %1423 = vmatpush1.msra.mxu0 0.0
        %1424 = vmatprep.subr.mxu0 0.0
        %1425 = vmatpush1.msra.mxu0 0.0
        %1426 = vmatprep.subr.mxu0 0.0
        %1427 = vmatpush1.msra.mxu0 0.0
        %1428 = vmatprep.subr.mxu0 0.0
        %1429 = vmatpush1.msra.mxu0 0.0
        %1430 = vmatprep.subr.mxu0 0.0
        %1431 = vmatpush1.msra.mxu0 0.0
        %1432 = vmatprep.subr.mxu0 0.0
        %1433 = vmatpush1.msra.mxu0 0.0
        %1434 = vmatprep.subr.mxu0 0.0
        %1435 = vmatpush1.msra.mxu0 0.0
        %1436 = vmatprep.subr.mxu0 0.0
        %1437 = vmatpush1.msra.mxu0 0.0
        %1438 = vmatprep.subr.mxu0 0.0
        %1439 = vmatpush1.msra.mxu0 0.0
        %1440 = vmatprep.subr.mxu0 0.0
        %1441 = vmatpush1.msra.mxu0 0.0
        %1442 = vmatprep.subr.mxu0 0.0
        %1443 = vmatpush1.msra.mxu0 0.0
        %1444 = vmatprep.subr.mxu0 0.0
        %1445 = vmatpush1.msra.mxu0 0.0
        %1446 = vmatprep.subr.mxu0 0.0
        %1447 = vmatpush1.msra.mxu0 0.0
        %1448 = vmatprep.subr.mxu0 0.0
        %1449 = vmatpush1.msra.mxu0 0.0
        %1450 = vmatprep.subr.mxu0 0.0
        %1451 = vmatpush1.msra.mxu0 0.0
        %1452 = vmatprep.subr.mxu0 0.0
        %1453 = vmatpush1.msra.mxu0 0.0
        %1454 = vmatprep.subr.mxu0 0.0
        %1455 = vmatpush1.msra.mxu0 0.0
        %1456 = vmatprep.subr.mxu0 0.0
        %1457 = vmatpush1.msra.mxu0 0.0
        %1458 = vmatprep.subr.mxu0 0.0
        %1459 = vmatpush1.msra.mxu0 0.0
        %1460 = vmatprep.subr.mxu0 0.0
        %1461 = vmatpush1.msra.mxu0 0.0
        %1462 = vmatprep.subr.mxu0 0.0
        %1463 = vmatpush1.msra.mxu0 0.0
        %1464 = vmatprep.subr.mxu0 0.0
        %1465 = vmatpush1.msra.mxu0 0.0
        %1466 = vmatprep.subr.mxu0 0.0
        %1467 = vmatpush1.msra.mxu0 0.0
        %1468 = vmatprep.subr.mxu0 0.0
        %1469 = vmatpush1.msra.mxu0 0.0
        %1470 = vmatprep.subr.mxu0 0.0
        %1471 = vmatpush1.msra.mxu0 0.0
        %1472 = vmatprep.subr.mxu0 0.0
        %1473 = vmatpush1.msra.mxu0 0.0
        %1474 = vmatprep.subr.mxu0 0.0
        %1475 = vmatpush1.msra.mxu0 0.0
        %1476 = vmatprep.subr.mxu0 0.0
        %1477 = vmatpush1.msra.mxu0 0.0
        %1478 = vmatprep.subr.mxu0 0.0
        %1479 = vmatpush1.msra.mxu0 0.0
        %1480 = vmatprep.subr.mxu0 0.0
        %1481 = vmatpush1.msra.mxu0 0.0
        %1482 = vmatprep.mubr.f32.mxu0 0.0
        %1483 = vmatmul.mubr.f32.gmra.mrb[0].mxu0 %v439
        %v1484 = vpop.f32.mrb[0].mxu0
        %v1485 = vadd.f32 0.0, %v1484
        %v1486 = vpop.f32.mrb[0].mxu0
        %1487 = vdwg.mxu0
        %v1488 = vmul.f32 %v1485, %v514
        %v1489 = vadd.f32 %v1488, %v520
        %v1491 = vcombine.high %v1489, %v1489
        %v1493 = vunpack.c.l.s4 1966171168
        %v1494 = vunpack.c.0.s8 %v1493
        %v1495 = vlaneseq
        %v1496 = vshrl.u32 %v1495, 7
        %v1497 = vsub.s32 %v1494, %v1496
        %v1498 = vrot.slane %v1489, %v1497
        %v1500 = vunpack.c.l.s4 1966171168
        %v1501 = vunpack.c.0.s8 %v1500
        %v1502 = vlaneseq
        %v1503 = vshrl.u32 %v1502, 7
        %v1504 = vsub.s32 %v1501, %v1503
        %v1505 = vrot.slane %v1491, %v1504
        %v1506 = vcombine.high %v1498, %v1498
        %v1507 = vcombine.high %v1505, %v1505
        %v1509 = vunpack.c.l.s4 1966171168
        %v1510 = vunpack.c.0.s8 %v1509
        %v1511 = vlaneseq
        %v1512 = vshrl.u32 %v1511, 7
        %v1513 = vsub.s32 %v1510, %v1512
        %v1514 = vrot.slane %v1498, %v1513
        %v1516 = vunpack.c.l.s4 1966171168
        %v1517 = vunpack.c.0.s8 %v1516
        %v1518 = vlaneseq
        %v1519 = vshrl.u32 %v1518, 7
        %v1520 = vsub.s32 %v1517, %v1519
        %v1521 = vrot.slane %v1505, %v1520
        %v1523 = vunpack.c.l.s4 1966171168
        %v1524 = vunpack.c.0.s8 %v1523
        %v1525 = vlaneseq
        %v1526 = vshrl.u32 %v1525, 7
        %v1527 = vsub.s32 %v1524, %v1526
        %v1528 = vrot.slane %v1506, %v1527
        %v1530 = vunpack.c.l.s4 1966171168
        %v1531 = vunpack.c.0.s8 %v1530
        %v1532 = vlaneseq
        %v1533 = vshrl.u32 %v1532, 7
        %v1534 = vsub.s32 %v1531, %v1533
        %v1535 = vrot.slane %v1507, %v1534
        %v1536 = vcombine.high %v1514, %v1514
        %v1537 = vcombine.high %v1521, %v1521
        %v1538 = vcombine.high %v1528, %v1528
        %v1539 = vcombine.high %v1535, %v1535
        %1548 = vst.msk [vmem:[%s215 + $0x3] sm:$0x1] %vm581, %v1514
        %1549 = vst.msk [vmem:[%s215 + $0xb] sm:$0x1] %vm581, %v1528
        %1550 = vst.msk [vmem:[%s215 + $0x13] sm:$0x1] %vm581, %v1536
        %1551 = vst.msk [vmem:[%s215 + $0x1b] sm:$0x1] %vm581, %v1538
        %1552 = vst.msk [vmem:[%s215 + $0x23] sm:$0x1] %vm581, %v1521
        %1553 = vst.msk [vmem:[%s215 + $0x2b] sm:$0x1] %vm581, %v1535
        %1554 = vst.msk [vmem:[%s215 + $0x33] sm:$0x1] %vm581, %v1537
        %1555 = vst.msk [vmem:[%s215 + $0x3b] sm:$0x1] %vm581, %v1539
        %v1556 = vld [vmem:[%s224 + $0x8] sm:$0x1]
        %v1557 = vld [vmem:[%s224 + $0x18] sm:$0x1]
        %v1558 = vld [vmem:[%s224 + $0x28] sm:$0x1]
        %v1559 = vld [vmem:[%s224 + $0x38] sm:$0x1]
        %v1560 = vmax.f32 %v1556, 0.0
        %v1561 = vmax.f32 %v1557, 0.0
        %v1562 = vmax.f32 %v1558, 0.0
        %v1563 = vmax.f32 %v1559, 0.0
        %v1564 = vld [vmem:[%s224 + $0x9] sm:$0x1]
        %v1565 = vld [vmem:[%s224 + $0x19] sm:$0x1]
        %v1566 = vld [vmem:[%s224 + $0x29] sm:$0x1]
        %v1567 = vld [vmem:[%s224 + $0x39] sm:$0x1]
        %v1568 = vmax.f32 %v1564, 0.0
        %v1569 = vmax.f32 %v1565, 0.0
        %v1570 = vmax.f32 %v1566, 0.0
        %v1571 = vmax.f32 %v1567, 0.0
        %v1576 = vrot.slane %v1561, 7
        %v1577 = vsel %vm269, %v1576, %v1560
        %v1578 = vrot.slane %v1562, 6
        %v1579 = vsel %vm272, %v1578, %v1577
        %v1580 = vrot.slane %v1563, 5
        %v1581 = vsel %vm275, %v1580, %v1579
        %v1582 = vsel %vm277, %v1581, 0
        %1584 = vmatprep.subr.mxu0 0.0
        %1585 = vmatpush1.msra.mxu0 %v239
        %1586 = vmatprep.subr.mxu0 0.0
        %1587 = vmatpush1.msra.mxu0 %v240
        %1588 = vmatprep.subr.mxu0 0.0
        %1589 = vmatpush1.msra.mxu0 0.0
        %1590 = vmatprep.subr.mxu0 0.0
        %1591 = vmatpush1.msra.mxu0 0.0
        %1592 = vmatprep.subr.mxu0 0.0
        %1593 = vmatpush1.msra.mxu0 0.0
        %1594 = vmatprep.subr.mxu0 0.0
        %1595 = vmatpush1.msra.mxu0 0.0
        %1596 = vmatprep.subr.mxu0 0.0
        %1597 = vmatpush1.msra.mxu0 0.0
        %1598 = vmatprep.subr.mxu0 0.0
        %1599 = vmatpush1.msra.mxu0 0.0
        %1600 = vmatprep.subr.mxu0 0.0
        %1601 = vmatpush1.msra.mxu0 0.0
        %1602 = vmatprep.subr.mxu0 0.0
        %1603 = vmatpush1.msra.mxu0 0.0
        %1604 = vmatprep.subr.mxu0 0.0
        %1605 = vmatpush1.msra.mxu0 0.0
        %1606 = vmatprep.subr.mxu0 0.0
        %1607 = vmatpush1.msra.mxu0 0.0
        %1608 = vmatprep.subr.mxu0 0.0
        %1609 = vmatpush1.msra.mxu0 0.0
        %1610 = vmatprep.subr.mxu0 0.0
        %1611 = vmatpush1.msra.mxu0 0.0
        %1612 = vmatprep.subr.mxu0 0.0
        %1613 = vmatpush1.msra.mxu0 0.0
        %1614 = vmatprep.subr.mxu0 0.0
        %1615 = vmatpush1.msra.mxu0 0.0
        %1616 = vmatprep.subr.mxu0 0.0
        %1617 = vmatpush1.msra.mxu0 0.0
        %1618 = vmatprep.subr.mxu0 0.0
        %1619 = vmatpush1.msra.mxu0 0.0
        %1620 = vmatprep.subr.mxu0 0.0
        %1621 = vmatpush1.msra.mxu0 0.0
        %1622 = vmatprep.subr.mxu0 0.0
        %1623 = vmatpush1.msra.mxu0 0.0
        %1624 = vmatprep.subr.mxu0 0.0
        %1625 = vmatpush1.msra.mxu0 0.0
        %1626 = vmatprep.subr.mxu0 0.0
        %1627 = vmatpush1.msra.mxu0 0.0
        %1628 = vmatprep.subr.mxu0 0.0
        %1629 = vmatpush1.msra.mxu0 0.0
        %1630 = vmatprep.subr.mxu0 0.0
        %1631 = vmatpush1.msra.mxu0 0.0
        %1632 = vmatprep.subr.mxu0 0.0
        %1633 = vmatpush1.msra.mxu0 0.0
        %1634 = vmatprep.subr.mxu0 0.0
        %1635 = vmatpush1.msra.mxu0 0.0
        %1636 = vmatprep.subr.mxu0 0.0
        %1637 = vmatpush1.msra.mxu0 0.0
        %1638 = vmatprep.subr.mxu0 0.0
        %1639 = vmatpush1.msra.mxu0 0.0
        %1640 = vmatprep.subr.mxu0 0.0
        %1641 = vmatpush1.msra.mxu0 0.0
        %1642 = vmatprep.subr.mxu0 0.0
        %1643 = vmatpush1.msra.mxu0 0.0
        %1644 = vmatprep.subr.mxu0 0.0
        %1645 = vmatpush1.msra.mxu0 0.0
        %1646 = vmatprep.subr.mxu0 0.0
        %1647 = vmatpush1.msra.mxu0 0.0
        %1648 = vmatprep.mubr.f32.mxu0 0.0
        %1649 = vmatmul.mubr.f32.gmra.mrb[0].mxu0 %v1582
        %v1650 = vpop.f32.mrb[0].mxu0
        %v1651 = vadd.f32 0.0, %v1650
        %v1652 = vpop.f32.mrb[0].mxu0
        %1653 = vdwg.mxu0
        %v1658 = vrot.slane %v1569, 7
        %v1659 = vsel %vm269, %v1658, %v1568
        %v1660 = vrot.slane %v1570, 6
        %v1661 = vsel %vm272, %v1660, %v1659
        %v1662 = vrot.slane %v1571, 5
        %v1663 = vsel %vm275, %v1662, %v1661
        %v1664 = vsel %vm277, %v1663, 0
        %1666 = vmatprep.subr.mxu0 0.0
        %1667 = vmatpush1.msra.mxu0 %v246
        %1668 = vmatprep.subr.mxu0 0.0
        %1669 = vmatpush1.msra.mxu0 %v247
        %1670 = vmatprep.subr.mxu0 0.0
        %1671 = vmatpush1.msra.mxu0 0.0
        %1672 = vmatprep.subr.mxu0 0.0
        %1673 = vmatpush1.msra.mxu0 0.0
        %1674 = vmatprep.subr.mxu0 0.0
        %1675 = vmatpush1.msra.mxu0 0.0
        %1676 = vmatprep.subr.mxu0 0.0
        %1677 = vmatpush1.msra.mxu0 0.0
        %1678 = vmatprep.subr.mxu0 0.0
        %1679 = vmatpush1.msra.mxu0 0.0
        %1680 = vmatprep.subr.mxu0 0.0
        %1681 = vmatpush1.msra.mxu0 0.0
        %1682 = vmatprep.subr.mxu0 0.0
        %1683 = vmatpush1.msra.mxu0 0.0
        %1684 = vmatprep.subr.mxu0 0.0
        %1685 = vmatpush1.msra.mxu0 0.0
        %1686 = vmatprep.subr.mxu0 0.0
        %1687 = vmatpush1.msra.mxu0 0.0
        %1688 = vmatprep.subr.mxu0 0.0
        %1689 = vmatpush1.msra.mxu0 0.0
        %1690 = vmatprep.subr.mxu0 0.0
        %1691 = vmatpush1.msra.mxu0 0.0
        %1692 = vmatprep.subr.mxu0 0.0
        %1693 = vmatpush1.msra.mxu0 0.0
        %1694 = vmatprep.subr.mxu0 0.0
        %1695 = vmatpush1.msra.mxu0 0.0
        %1696 = vmatprep.subr.mxu0 0.0
        %1697 = vmatpush1.msra.mxu0 0.0
        %1698 = vmatprep.subr.mxu0 0.0
        %1699 = vmatpush1.msra.mxu0 0.0
        %1700 = vmatprep.subr.mxu0 0.0
        %1701 = vmatpush1.msra.mxu0 0.0
        %1702 = vmatprep.subr.mxu0 0.0
        %1703 = vmatpush1.msra.mxu0 0.0
        %1704 = vmatprep.subr.mxu0 0.0
        %1705 = vmatpush1.msra.mxu0 0.0
        %1706 = vmatprep.subr.mxu0 0.0
        %1707 = vmatpush1.msra.mxu0 0.0
        %1708 = vmatprep.subr.mxu0 0.0
        %1709 = vmatpush1.msra.mxu0 0.0
        %1710 = vmatprep.subr.mxu0 0.0
        %1711 = vmatpush1.msra.mxu0 0.0
        %1712 = vmatprep.subr.mxu0 0.0
        %1713 = vmatpush1.msra.mxu0 0.0
        %1714 = vmatprep.subr.mxu0 0.0
        %1715 = vmatpush1.msra.mxu0 0.0
        %1716 = vmatprep.subr.mxu0 0.0
        %1717 = vmatpush1.msra.mxu0 0.0
        %1718 = vmatprep.subr.mxu0 0.0
        %1719 = vmatpush1.msra.mxu0 0.0
        %1720 = vmatprep.subr.mxu0 0.0
        %1721 = vmatpush1.msra.mxu0 0.0
        %1722 = vmatprep.subr.mxu0 0.0
        %1723 = vmatpush1.msra.mxu0 0.0
        %1724 = vmatprep.subr.mxu0 0.0
        %1725 = vmatpush1.msra.mxu0 0.0
        %1726 = vmatprep.subr.mxu0 0.0
        %1727 = vmatpush1.msra.mxu0 0.0
        %1728 = vmatprep.subr.mxu0 0.0
        %1729 = vmatpush1.msra.mxu0 0.0
        %1730 = vmatprep.mubr.f32.mxu0 0.0
        %1731 = vmatmul.mubr.f32.gmra.mrb[0].mxu0 %v1664
        %v1732 = vpop.f32.mrb[0].mxu0
        %v1733 = vadd.f32 0.0, %v1732
        %v1734 = vpop.f32.mrb[0].mxu0
        %1735 = vdwg.mxu0
        %v1737 = vrot.slane %v1733, 4
        %v1739 = vsel %vm435, %v1651, %v1737
        %1740 = vmatprep.subr.mxu0 0.0
        %1741 = vmatpush1.msra.mxu0 %v1739
        %1742 = vmatprep.subr.mxu0 0.0
        %1743 = vmatpush1.msra.mxu0 0.0
        %1744 = vmatprep.subr.mxu0 0.0
        %1745 = vmatpush1.msra.mxu0 0.0
        %1746 = vmatprep.subr.mxu0 0.0
        %1747 = vmatpush1.msra.mxu0 0.0
        %1748 = vmatprep.subr.mxu0 0.0
        %1749 = vmatpush1.msra.mxu0 0.0
        %1750 = vmatprep.subr.mxu0 0.0
        %1751 = vmatpush1.msra.mxu0 0.0
        %1752 = vmatprep.subr.mxu0 0.0
        %1753 = vmatpush1.msra.mxu0 0.0
        %1754 = vmatprep.subr.mxu0 0.0
        %1755 = vmatpush1.msra.mxu0 0.0
        %1756 = vmatprep.subr.mxu0 0.0
        %1757 = vmatpush1.msra.mxu0 0.0
        %1758 = vmatprep.subr.mxu0 0.0
        %1759 = vmatpush1.msra.mxu0 0.0
        %1760 = vmatprep.subr.mxu0 0.0
        %1761 = vmatpush1.msra.mxu0 0.0
        %1762 = vmatprep.subr.mxu0 0.0
        %1763 = vmatpush1.msra.mxu0 0.0
        %1764 = vmatprep.subr.mxu0 0.0
        %1765 = vmatpush1.msra.mxu0 0.0
        %1766 = vmatprep.subr.mxu0 0.0
        %1767 = vmatpush1.msra.mxu0 0.0
        %1768 = vmatprep.subr.mxu0 0.0
        %1769 = vmatpush1.msra.mxu0 0.0
        %1770 = vmatprep.subr.mxu0 0.0
        %1771 = vmatpush1.msra.mxu0 0.0
        %1772 = vmatprep.subr.mxu0 0.0
        %1773 = vmatpush1.msra.mxu0 0.0
        %1774 = vmatprep.subr.mxu0 0.0
        %1775 = vmatpush1.msra.mxu0 0.0
        %1776 = vmatprep.subr.mxu0 0.0
        %1777 = vmatpush1.msra.mxu0 0.0
        %1778 = vmatprep.subr.mxu0 0.0
        %1779 = vmatpush1.msra.mxu0 0.0
        %1780 = vmatprep.subr.mxu0 0.0
        %1781 = vmatpush1.msra.mxu0 0.0
        %1782 = vmatprep.subr.mxu0 0.0
        %1783 = vmatpush1.msra.mxu0 0.0
        %1784 = vmatprep.subr.mxu0 0.0
        %1785 = vmatpush1.msra.mxu0 0.0
        %1786 = vmatprep.subr.mxu0 0.0
        %1787 = vmatpush1.msra.mxu0 0.0
        %1788 = vmatprep.subr.mxu0 0.0
        %1789 = vmatpush1.msra.mxu0 0.0
        %1790 = vmatprep.subr.mxu0 0.0
        %1791 = vmatpush1.msra.mxu0 0.0
        %1792 = vmatprep.subr.mxu0 0.0
        %1793 = vmatpush1.msra.mxu0 0.0
        %1794 = vmatprep.subr.mxu0 0.0
        %1795 = vmatpush1.msra.mxu0 0.0
        %1796 = vmatprep.subr.mxu0 0.0
        %1797 = vmatpush1.msra.mxu0 0.0
        %1798 = vmatprep.subr.mxu0 0.0
        %1799 = vmatpush1.msra.mxu0 0.0
        %1800 = vmatprep.subr.mxu0 0.0
        %1801 = vmatpush1.msra.mxu0 0.0
        %1802 = vmatprep.subr.mxu0 0.0
        %1803 = vmatpush1.msra.mxu0 0.0
        %1804 = vmatprep.mubr.f32.mxu0 0.0
        %1805 = vmatmul.mubr.f32.gmra.mrb[0].mxu0 %v439
        %v1806 = vpop.f32.mrb[0].mxu0
        %v1807 = vadd.f32 0.0, %v1806
        %v1808 = vpop.f32.mrb[0].mxu0
        %1809 = vdwg.mxu0
        %v1810 = vmul.f32 %v1807, %v514
        %v1811 = vadd.f32 %v1810, %v520
        %v1813 = vcombine.high %v1811, %v1811
        %v1815 = vunpack.c.l.s4 1966171168
        %v1816 = vunpack.c.0.s8 %v1815
        %v1817 = vlaneseq
        %v1818 = vshrl.u32 %v1817, 7
        %v1819 = vsub.s32 %v1816, %v1818
        %v1820 = vrot.slane %v1811, %v1819
        %v1822 = vunpack.c.l.s4 1966171168
        %v1823 = vunpack.c.0.s8 %v1822
        %v1824 = vlaneseq
        %v1825 = vshrl.u32 %v1824, 7
        %v1826 = vsub.s32 %v1823, %v1825
        %v1827 = vrot.slane %v1813, %v1826
        %v1828 = vcombine.high %v1820, %v1820
        %v1829 = vcombine.high %v1827, %v1827
        %v1831 = vunpack.c.l.s4 1966171168
        %v1832 = vunpack.c.0.s8 %v1831
        %v1833 = vlaneseq
        %v1834 = vshrl.u32 %v1833, 7
        %v1835 = vsub.s32 %v1832, %v1834
        %v1836 = vrot.slane %v1820, %v1835
        %v1838 = vunpack.c.l.s4 1966171168
        %v1839 = vunpack.c.0.s8 %v1838
        %v1840 = vlaneseq
        %v1841 = vshrl.u32 %v1840, 7
        %v1842 = vsub.s32 %v1839, %v1841
        %v1843 = vrot.slane %v1827, %v1842
        %v1845 = vunpack.c.l.s4 1966171168
        %v1846 = vunpack.c.0.s8 %v1845
        %v1847 = vlaneseq
        %v1848 = vshrl.u32 %v1847, 7
        %v1849 = vsub.s32 %v1846, %v1848
        %v1850 = vrot.slane %v1828, %v1849
        %v1852 = vunpack.c.l.s4 1966171168
        %v1853 = vunpack.c.0.s8 %v1852
        %v1854 = vlaneseq
        %v1855 = vshrl.u32 %v1854, 7
        %v1856 = vsub.s32 %v1853, %v1855
        %v1857 = vrot.slane %v1829, %v1856
        %v1858 = vcombine.high %v1836, %v1836
        %v1859 = vcombine.high %v1843, %v1843
        %v1860 = vcombine.high %v1850, %v1850
        %v1861 = vcombine.high %v1857, %v1857
        %1870 = vst.msk [vmem:[%s215 + $0x4] sm:$0x1] %vm581, %v1836
        %1871 = vst.msk [vmem:[%s215 + $0xc] sm:$0x1] %vm581, %v1850
        %1872 = vst.msk [vmem:[%s215 + $0x14] sm:$0x1] %vm581, %v1858
        %1873 = vst.msk [vmem:[%s215 + $0x1c] sm:$0x1] %vm581, %v1860
        %1874 = vst.msk [vmem:[%s215 + $0x24] sm:$0x1] %vm581, %v1843
        %1875 = vst.msk [vmem:[%s215 + $0x2c] sm:$0x1] %vm581, %v1857
        %1876 = vst.msk [vmem:[%s215 + $0x34] sm:$0x1] %vm581, %v1859
        %1877 = vst.msk [vmem:[%s215 + $0x3c] sm:$0x1] %vm581, %v1861
        %v1878 = vld [vmem:[%s224 + $0xa] sm:$0x1]
        %v1879 = vld [vmem:[%s224 + $0x1a] sm:$0x1]
        %v1880 = vld [vmem:[%s224 + $0x2a] sm:$0x1]
        %v1881 = vld [vmem:[%s224 + $0x3a] sm:$0x1]
        %v1882 = vmax.f32 %v1878, 0.0
        %v1883 = vmax.f32 %v1879, 0.0
        %v1884 = vmax.f32 %v1880, 0.0
        %v1885 = vmax.f32 %v1881, 0.0
        %v1886 = vld [vmem:[%s224 + $0xb] sm:$0x1]
        %v1887 = vld [vmem:[%s224 + $0x1b] sm:$0x1]
        %v1888 = vld [vmem:[%s224 + $0x2b] sm:$0x1]
        %v1889 = vld [vmem:[%s224 + $0x3b] sm:$0x1]
        %v1890 = vmax.f32 %v1886, 0.0
        %v1891 = vmax.f32 %v1887, 0.0
        %v1892 = vmax.f32 %v1888, 0.0
        %v1893 = vmax.f32 %v1889, 0.0
        %v1898 = vrot.slane %v1883, 7
        %v1899 = vsel %vm269, %v1898, %v1882
        %v1900 = vrot.slane %v1884, 6
        %v1901 = vsel %vm272, %v1900, %v1899
        %v1902 = vrot.slane %v1885, 5
        %v1903 = vsel %vm275, %v1902, %v1901
        %v1904 = vsel %vm277, %v1903, 0
        %1906 = vmatprep.subr.mxu0 0.0
        %1907 = vmatpush1.msra.mxu0 %v239
        %1908 = vmatprep.subr.mxu0 0.0
        %1909 = vmatpush1.msra.mxu0 %v240
        %1910 = vmatprep.subr.mxu0 0.0
        %1911 = vmatpush1.msra.mxu0 0.0
        %1912 = vmatprep.subr.mxu0 0.0
        %1913 = vmatpush1.msra.mxu0 0.0
        %1914 = vmatprep.subr.mxu0 0.0
        %1915 = vmatpush1.msra.mxu0 0.0
        %1916 = vmatprep.subr.mxu0 0.0
        %1917 = vmatpush1.msra.mxu0 0.0
        %1918 = vmatprep.subr.mxu0 0.0
        %1919 = vmatpush1.msra.mxu0 0.0
        %1920 = vmatprep.subr.mxu0 0.0
        %1921 = vmatpush1.msra.mxu0 0.0
        %1922 = vmatprep.subr.mxu0 0.0
        %1923 = vmatpush1.msra.mxu0 0.0
        %1924 = vmatprep.subr.mxu0 0.0
        %1925 = vmatpush1.msra.mxu0 0.0
        %1926 = vmatprep.subr.mxu0 0.0
        %1927 = vmatpush1.msra.mxu0 0.0
        %1928 = vmatprep.subr.mxu0 0.0
        %1929 = vmatpush1.msra.mxu0 0.0
        %1930 = vmatprep.subr.mxu0 0.0
        %1931 = vmatpush1.msra.mxu0 0.0
        %1932 = vmatprep.subr.mxu0 0.0
        %1933 = vmatpush1.msra.mxu0 0.0
        %1934 = vmatprep.subr.mxu0 0.0
        %1935 = vmatpush1.msra.mxu0 0.0
        %1936 = vmatprep.subr.mxu0 0.0
        %1937 = vmatpush1.msra.mxu0 0.0
        %1938 = vmatprep.subr.mxu0 0.0
        %1939 = vmatpush1.msra.mxu0 0.0
        %1940 = vmatprep.subr.mxu0 0.0
        %1941 = vmatpush1.msra.mxu0 0.0
        %1942 = vmatprep.subr.mxu0 0.0
        %1943 = vmatpush1.msra.mxu0 0.0
        %1944 = vmatprep.subr.mxu0 0.0
        %1945 = vmatpush1.msra.mxu0 0.0
        %1946 = vmatprep.subr.mxu0 0.0
        %1947 = vmatpush1.msra.mxu0 0.0
        %1948 = vmatprep.subr.mxu0 0.0
        %1949 = vmatpush1.msra.mxu0 0.0
        %1950 = vmatprep.subr.mxu0 0.0
        %1951 = vmatpush1.msra.mxu0 0.0
        %1952 = vmatprep.subr.mxu0 0.0
        %1953 = vmatpush1.msra.mxu0 0.0
        %1954 = vmatprep.subr.mxu0 0.0
        %1955 = vmatpush1.msra.mxu0 0.0
        %1956 = vmatprep.subr.mxu0 0.0
        %1957 = vmatpush1.msra.mxu0 0.0
        %1958 = vmatprep.subr.mxu0 0.0
        %1959 = vmatpush1.msra.mxu0 0.0
        %1960 = vmatprep.subr.mxu0 0.0
        %1961 = vmatpush1.msra.mxu0 0.0
        %1962 = vmatprep.subr.mxu0 0.0
        %1963 = vmatpush1.msra.mxu0 0.0
        %1964 = vmatprep.subr.mxu0 0.0
        %1965 = vmatpush1.msra.mxu0 0.0
        %1966 = vmatprep.subr.mxu0 0.0
        %1967 = vmatpush1.msra.mxu0 0.0
        %1968 = vmatprep.subr.mxu0 0.0
        %1969 = vmatpush1.msra.mxu0 0.0
        %1970 = vmatprep.mubr.f32.mxu0 0.0
        %1971 = vmatmul.mubr.f32.gmra.mrb[0].mxu0 %v1904
        %v1972 = vpop.f32.mrb[0].mxu0
        %v1973 = vadd.f32 0.0, %v1972
        %v1974 = vpop.f32.mrb[0].mxu0
        %1975 = vdwg.mxu0
        %v1980 = vrot.slane %v1891, 7
        %v1981 = vsel %vm269, %v1980, %v1890
        %v1982 = vrot.slane %v1892, 6
        %v1983 = vsel %vm272, %v1982, %v1981
        %v1984 = vrot.slane %v1893, 5
        %v1985 = vsel %vm275, %v1984, %v1983
        %v1986 = vsel %vm277, %v1985, 0
        %1988 = vmatprep.subr.mxu0 0.0
        %1989 = vmatpush1.msra.mxu0 %v246
        %1990 = vmatprep.subr.mxu0 0.0
        %1991 = vmatpush1.msra.mxu0 %v247
        %1992 = vmatprep.subr.mxu0 0.0
        %1993 = vmatpush1.msra.mxu0 0.0
        %1994 = vmatprep.subr.mxu0 0.0
        %1995 = vmatpush1.msra.mxu0 0.0
        %1996 = vmatprep.subr.mxu0 0.0
        %1997 = vmatpush1.msra.mxu0 0.0
        %1998 = vmatprep.subr.mxu0 0.0
        %1999 = vmatpush1.msra.mxu0 0.0
        %2000 = vmatprep.subr.mxu0 0.0
        %2001 = vmatpush1.msra.mxu0 0.0
        %2002 = vmatprep.subr.mxu0 0.0
        %2003 = vmatpush1.msra.mxu0 0.0
        %2004 = vmatprep.subr.mxu0 0.0
        %2005 = vmatpush1.msra.mxu0 0.0
        %2006 = vmatprep.subr.mxu0 0.0
        %2007 = vmatpush1.msra.mxu0 0.0
        %2008 = vmatprep.subr.mxu0 0.0
        %2009 = vmatpush1.msra.mxu0 0.0
        %2010 = vmatprep.subr.mxu0 0.0
        %2011 = vmatpush1.msra.mxu0 0.0
        %2012 = vmatprep.subr.mxu0 0.0
        %2013 = vmatpush1.msra.mxu0 0.0
        %2014 = vmatprep.subr.mxu0 0.0
        %2015 = vmatpush1.msra.mxu0 0.0
        %2016 = vmatprep.subr.mxu0 0.0
        %2017 = vmatpush1.msra.mxu0 0.0
        %2018 = vmatprep.subr.mxu0 0.0
        %2019 = vmatpush1.msra.mxu0 0.0
        %2020 = vmatprep.subr.mxu0 0.0
        %2021 = vmatpush1.msra.mxu0 0.0
        %2022 = vmatprep.subr.mxu0 0.0
        %2023 = vmatpush1.msra.mxu0 0.0
        %2024 = vmatprep.subr.mxu0 0.0
        %2025 = vmatpush1.msra.mxu0 0.0
        %2026 = vmatprep.subr.mxu0 0.0
        %2027 = vmatpush1.msra.mxu0 0.0
        %2028 = vmatprep.subr.mxu0 0.0
        %2029 = vmatpush1.msra.mxu0 0.0
        %2030 = vmatprep.subr.mxu0 0.0
        %2031 = vmatpush1.msra.mxu0 0.0
        %2032 = vmatprep.subr.mxu0 0.0
        %2033 = vmatpush1.msra.mxu0 0.0
        %2034 = vmatprep.subr.mxu0 0.0
        %2035 = vmatpush1.msra.mxu0 0.0
        %2036 = vmatprep.subr.mxu0 0.0
        %2037 = vmatpush1.msra.mxu0 0.0
        %2038 = vmatprep.subr.mxu0 0.0
        %2039 = vmatpush1.msra.mxu0 0.0
        %2040 = vmatprep.subr.mxu0 0.0
        %2041 = vmatpush1.msra.mxu0 0.0
        %2042 = vmatprep.subr.mxu0 0.0
        %2043 = vmatpush1.msra.mxu0 0.0
        %2044 = vmatprep.subr.mxu0 0.0
        %2045 = vmatpush1.msra.mxu0 0.0
        %2046 = vmatprep.subr.mxu0 0.0
        %2047 = vmatpush1.msra.mxu0 0.0
        %2048 = vmatprep.subr.mxu0 0.0
        %2049 = vmatpush1.msra.mxu0 0.0
        %2050 = vmatprep.subr.mxu0 0.0
        %2051 = vmatpush1.msra.mxu0 0.0
        %2052 = vmatprep.mubr.f32.mxu0 0.0
        %2053 = vmatmul.mubr.f32.gmra.mrb[0].mxu0 %v1986
        %v2054 = vpop.f32.mrb[0].mxu0
        %v2055 = vadd.f32 0.0, %v2054
        %v2056 = vpop.f32.mrb[0].mxu0
        %2057 = vdwg.mxu0
        %v2059 = vrot.slane %v2055, 4
        %v2061 = vsel %vm435, %v1973, %v2059
        %2062 = vmatprep.subr.mxu0 0.0
        %2063 = vmatpush1.msra.mxu0 %v2061
        %2064 = vmatprep.subr.mxu0 0.0
        %2065 = vmatpush1.msra.mxu0 0.0
        %2066 = vmatprep.subr.mxu0 0.0
        %2067 = vmatpush1.msra.mxu0 0.0
        %2068 = vmatprep.subr.mxu0 0.0
        %2069 = vmatpush1.msra.mxu0 0.0
        %2070 = vmatprep.subr.mxu0 0.0
        %2071 = vmatpush1.msra.mxu0 0.0
        %2072 = vmatprep.subr.mxu0 0.0
        %2073 = vmatpush1.msra.mxu0 0.0
        %2074 = vmatprep.subr.mxu0 0.0
        %2075 = vmatpush1.msra.mxu0 0.0
        %2076 = vmatprep.subr.mxu0 0.0
        %2077 = vmatpush1.msra.mxu0 0.0
        %2078 = vmatprep.subr.mxu0 0.0
        %2079 = vmatpush1.msra.mxu0 0.0
        %2080 = vmatprep.subr.mxu0 0.0
        %2081 = vmatpush1.msra.mxu0 0.0
        %2082 = vmatprep.subr.mxu0 0.0
        %2083 = vmatpush1.msra.mxu0 0.0
        %2084 = vmatprep.subr.mxu0 0.0
        %2085 = vmatpush1.msra.mxu0 0.0
        %2086 = vmatprep.subr.mxu0 0.0
        %2087 = vmatpush1.msra.mxu0 0.0
        %2088 = vmatprep.subr.mxu0 0.0
        %2089 = vmatpush1.msra.mxu0 0.0
        %2090 = vmatprep.subr.mxu0 0.0
        %2091 = vmatpush1.msra.mxu0 0.0
        %2092 = vmatprep.subr.mxu0 0.0
        %2093 = vmatpush1.msra.mxu0 0.0
        %2094 = vmatprep.subr.mxu0 0.0
        %2095 = vmatpush1.msra.mxu0 0.0
        %2096 = vmatprep.subr.mxu0 0.0
        %2097 = vmatpush1.msra.mxu0 0.0
        %2098 = vmatprep.subr.mxu0 0.0
        %2099 = vmatpush1.msra.mxu0 0.0
        %2100 = vmatprep.subr.mxu0 0.0
        %2101 = vmatpush1.msra.mxu0 0.0
        %2102 = vmatprep.subr.mxu0 0.0
        %2103 = vmatpush1.msra.mxu0 0.0
        %2104 = vmatprep.subr.mxu0 0.0
        %2105 = vmatpush1.msra.mxu0 0.0
        %2106 = vmatprep.subr.mxu0 0.0
        %2107 = vmatpush1.msra.mxu0 0.0
        %2108 = vmatprep.subr.mxu0 0.0
        %2109 = vmatpush1.msra.mxu0 0.0
        %2110 = vmatprep.subr.mxu0 0.0
        %2111 = vmatpush1.msra.mxu0 0.0
        %2112 = vmatprep.subr.mxu0 0.0
        %2113 = vmatpush1.msra.mxu0 0.0
        %2114 = vmatprep.subr.mxu0 0.0
        %2115 = vmatpush1.msra.mxu0 0.0
        %2116 = vmatprep.subr.mxu0 0.0
        %2117 = vmatpush1.msra.mxu0 0.0
        %2118 = vmatprep.subr.mxu0 0.0
        %2119 = vmatpush1.msra.mxu0 0.0
        %2120 = vmatprep.subr.mxu0 0.0
        %2121 = vmatpush1.msra.mxu0 0.0
        %2122 = vmatprep.subr.mxu0 0.0
        %2123 = vmatpush1.msra.mxu0 0.0
        %2124 = vmatprep.subr.mxu0 0.0
        %2125 = vmatpush1.msra.mxu0 0.0
        %2126 = vmatprep.mubr.f32.mxu0 0.0
        %2127 = vmatmul.mubr.f32.gmra.mrb[0].mxu0 %v439
        %v2128 = vpop.f32.mrb[0].mxu0
        %v2129 = vadd.f32 0.0, %v2128
        %v2130 = vpop.f32.mrb[0].mxu0
        %2131 = vdwg.mxu0
        %v2132 = vmul.f32 %v2129, %v514
        %v2133 = vadd.f32 %v2132, %v520
        %v2135 = vcombine.high %v2133, %v2133
        %v2137 = vunpack.c.l.s4 1966171168
        %v2138 = vunpack.c.0.s8 %v2137
        %v2139 = vlaneseq
        %v2140 = vshrl.u32 %v2139, 7
        %v2141 = vsub.s32 %v2138, %v2140
        %v2142 = vrot.slane %v2133, %v2141
        %v2144 = vunpack.c.l.s4 1966171168
        %v2145 = vunpack.c.0.s8 %v2144
        %v2146 = vlaneseq
        %v2147 = vshrl.u32 %v2146, 7
        %v2148 = vsub.s32 %v2145, %v2147
        %v2149 = vrot.slane %v2135, %v2148
        %v2150 = vcombine.high %v2142, %v2142
        %v2151 = vcombine.high %v2149, %v2149
        %v2153 = vunpack.c.l.s4 1966171168
        %v2154 = vunpack.c.0.s8 %v2153
        %v2155 = vlaneseq
        %v2156 = vshrl.u32 %v2155, 7
        %v2157 = vsub.s32 %v2154, %v2156
        %v2158 = vrot.slane %v2142, %v2157
        %v2160 = vunpack.c.l.s4 1966171168
        %v2161 = vunpack.c.0.s8 %v2160
        %v2162 = vlaneseq
        %v2163 = vshrl.u32 %v2162, 7
        %v2164 = vsub.s32 %v2161, %v2163
        %v2165 = vrot.slane %v2149, %v2164
        %v2167 = vunpack.c.l.s4 1966171168
        %v2168 = vunpack.c.0.s8 %v2167
        %v2169 = vlaneseq
        %v2170 = vshrl.u32 %v2169, 7
        %v2171 = vsub.s32 %v2168, %v2170
        %v2172 = vrot.slane %v2150, %v2171
        %v2174 = vunpack.c.l.s4 1966171168
        %v2175 = vunpack.c.0.s8 %v2174
        %v2176 = vlaneseq
        %v2177 = vshrl.u32 %v2176, 7
        %v2178 = vsub.s32 %v2175, %v2177
        %v2179 = vrot.slane %v2151, %v2178
        %v2180 = vcombine.high %v2158, %v2158
        %v2181 = vcombine.high %v2165, %v2165
        %v2182 = vcombine.high %v2172, %v2172
        %v2183 = vcombine.high %v2179, %v2179
        %2192 = vst.msk [vmem:[%s215 + $0x5] sm:$0x1] %vm581, %v2158
        %2193 = vst.msk [vmem:[%s215 + $0xd] sm:$0x1] %vm581, %v2172
        %2194 = vst.msk [vmem:[%s215 + $0x15] sm:$0x1] %vm581, %v2180
        %2195 = vst.msk [vmem:[%s215 + $0x1d] sm:$0x1] %vm581, %v2182
        %2196 = vst.msk [vmem:[%s215 + $0x25] sm:$0x1] %vm581, %v2165
        %2197 = vst.msk [vmem:[%s215 + $0x2d] sm:$0x1] %vm581, %v2179
        %2198 = vst.msk [vmem:[%s215 + $0x35] sm:$0x1] %vm581, %v2181
        %2199 = vst.msk [vmem:[%s215 + $0x3d] sm:$0x1] %vm581, %v2183
        %v2200 = vld [vmem:[%s224 + $0xc] sm:$0x1]
        %v2201 = vld [vmem:[%s224 + $0x1c] sm:$0x1]
        %v2202 = vld [vmem:[%s224 + $0x2c] sm:$0x1]
        %v2203 = vld [vmem:[%s224 + $0x3c] sm:$0x1]
        %v2204 = vmax.f32 %v2200, 0.0
        %v2205 = vmax.f32 %v2201, 0.0
        %v2206 = vmax.f32 %v2202, 0.0
        %v2207 = vmax.f32 %v2203, 0.0
        %v2208 = vld [vmem:[%s224 + $0xd] sm:$0x1]
        %v2209 = vld [vmem:[%s224 + $0x1d] sm:$0x1]
        %v2210 = vld [vmem:[%s224 + $0x2d] sm:$0x1]
        %v2211 = vld [vmem:[%s224 + $0x3d] sm:$0x1]
        %v2212 = vmax.f32 %v2208, 0.0
        %v2213 = vmax.f32 %v2209, 0.0
        %v2214 = vmax.f32 %v2210, 0.0
        %v2215 = vmax.f32 %v2211, 0.0
        %v2220 = vrot.slane %v2205, 7
        %v2221 = vsel %vm269, %v2220, %v2204
        %v2222 = vrot.slane %v2206, 6
        %v2223 = vsel %vm272, %v2222, %v2221
        %v2224 = vrot.slane %v2207, 5
        %v2225 = vsel %vm275, %v2224, %v2223
        %v2226 = vsel %vm277, %v2225, 0
        %2228 = vmatprep.subr.mxu0 0.0
        %2229 = vmatpush1.msra.mxu0 %v239
        %2230 = vmatprep.subr.mxu0 0.0
        %2231 = vmatpush1.msra.mxu0 %v240
        %2232 = vmatprep.subr.mxu0 0.0
        %2233 = vmatpush1.msra.mxu0 0.0
        %2234 = vmatprep.subr.mxu0 0.0
        %2235 = vmatpush1.msra.mxu0 0.0
        %2236 = vmatprep.subr.mxu0 0.0
        %2237 = vmatpush1.msra.mxu0 0.0
        %2238 = vmatprep.subr.mxu0 0.0
        %2239 = vmatpush1.msra.mxu0 0.0
        %2240 = vmatprep.subr.mxu0 0.0
        %2241 = vmatpush1.msra.mxu0 0.0
        %2242 = vmatprep.subr.mxu0 0.0
        %2243 = vmatpush1.msra.mxu0 0.0
        %2244 = vmatprep.subr.mxu0 0.0
        %2245 = vmatpush1.msra.mxu0 0.0
        %2246 = vmatprep.subr.mxu0 0.0
        %2247 = vmatpush1.msra.mxu0 0.0
        %2248 = vmatprep.subr.mxu0 0.0
        %2249 = vmatpush1.msra.mxu0 0.0
        %2250 = vmatprep.subr.mxu0 0.0
        %2251 = vmatpush1.msra.mxu0 0.0
        %2252 = vmatprep.subr.mxu0 0.0
        %2253 = vmatpush1.msra.mxu0 0.0
        %2254 = vmatprep.subr.mxu0 0.0
        %2255 = vmatpush1.msra.mxu0 0.0
        %2256 = vmatprep.subr.mxu0 0.0
        %2257 = vmatpush1.msra.mxu0 0.0
        %2258 = vmatprep.subr.mxu0 0.0
        %2259 = vmatpush1.msra.mxu0 0.0
        %2260 = vmatprep.subr.mxu0 0.0
        %2261 = vmatpush1.msra.mxu0 0.0
        %2262 = vmatprep.subr.mxu0 0.0
        %2263 = vmatpush1.msra.mxu0 0.0
        %2264 = vmatprep.subr.mxu0 0.0
        %2265 = vmatpush1.msra.mxu0 0.0
        %2266 = vmatprep.subr.mxu0 0.0
        %2267 = vmatpush1.msra.mxu0 0.0
        %2268 = vmatprep.subr.mxu0 0.0
        %2269 = vmatpush1.msra.mxu0 0.0
        %2270 = vmatprep.subr.mxu0 0.0
        %2271 = vmatpush1.msra.mxu0 0.0
        %2272 = vmatprep.subr.mxu0 0.0
        %2273 = vmatpush1.msra.mxu0 0.0
        %2274 = vmatprep.subr.mxu0 0.0
        %2275 = vmatpush1.msra.mxu0 0.0
        %2276 = vmatprep.subr.mxu0 0.0
        %2277 = vmatpush1.msra.mxu0 0.0
        %2278 = vmatprep.subr.mxu0 0.0
        %2279 = vmatpush1.msra.mxu0 0.0
        %2280 = vmatprep.subr.mxu0 0.0
        %2281 = vmatpush1.msra.mxu0 0.0
        %2282 = vmatprep.subr.mxu0 0.0
        %2283 = vmatpush1.msra.mxu0 0.0
        %2284 = vmatprep.subr.mxu0 0.0
        %2285 = vmatpush1.msra.mxu0 0.0
        %2286 = vmatprep.subr.mxu0 0.0
        %2287 = vmatpush1.msra.mxu0 0.0
        %2288 = vmatprep.subr.mxu0 0.0
        %2289 = vmatpush1.msra.mxu0 0.0
        %2290 = vmatprep.subr.mxu0 0.0
        %2291 = vmatpush1.msra.mxu0 0.0
        %2292 = vmatprep.mubr.f32.mxu0 0.0
        %2293 = vmatmul.mubr.f32.gmra.mrb[0].mxu0 %v2226
        %v2294 = vpop.f32.mrb[0].mxu0
        %v2295 = vadd.f32 0.0, %v2294
        %v2296 = vpop.f32.mrb[0].mxu0
        %2297 = vdwg.mxu0
        %v2302 = vrot.slane %v2213, 7
        %v2303 = vsel %vm269, %v2302, %v2212
        %v2304 = vrot.slane %v2214, 6
        %v2305 = vsel %vm272, %v2304, %v2303
        %v2306 = vrot.slane %v2215, 5
        %v2307 = vsel %vm275, %v2306, %v2305
        %v2308 = vsel %vm277, %v2307, 0
        %2310 = vmatprep.subr.mxu0 0.0
        %2311 = vmatpush1.msra.mxu0 %v246
        %2312 = vmatprep.subr.mxu0 0.0
        %2313 = vmatpush1.msra.mxu0 %v247
        %2314 = vmatprep.subr.mxu0 0.0
        %2315 = vmatpush1.msra.mxu0 0.0
        %2316 = vmatprep.subr.mxu0 0.0
        %2317 = vmatpush1.msra.mxu0 0.0
        %2318 = vmatprep.subr.mxu0 0.0
        %2319 = vmatpush1.msra.mxu0 0.0
        %2320 = vmatprep.subr.mxu0 0.0
        %2321 = vmatpush1.msra.mxu0 0.0
        %2322 = vmatprep.subr.mxu0 0.0
        %2323 = vmatpush1.msra.mxu0 0.0
        %2324 = vmatprep.subr.mxu0 0.0
        %2325 = vmatpush1.msra.mxu0 0.0
        %2326 = vmatprep.subr.mxu0 0.0
        %2327 = vmatpush1.msra.mxu0 0.0
        %2328 = vmatprep.subr.mxu0 0.0
        %2329 = vmatpush1.msra.mxu0 0.0
        %2330 = vmatprep.subr.mxu0 0.0
        %2331 = vmatpush1.msra.mxu0 0.0
        %2332 = vmatprep.subr.mxu0 0.0
        %2333 = vmatpush1.msra.mxu0 0.0
        %2334 = vmatprep.subr.mxu0 0.0
        %2335 = vmatpush1.msra.mxu0 0.0
        %2336 = vmatprep.subr.mxu0 0.0
        %2337 = vmatpush1.msra.mxu0 0.0
        %2338 = vmatprep.subr.mxu0 0.0
        %2339 = vmatpush1.msra.mxu0 0.0
        %2340 = vmatprep.subr.mxu0 0.0
        %2341 = vmatpush1.msra.mxu0 0.0
        %2342 = vmatprep.subr.mxu0 0.0
        %2343 = vmatpush1.msra.mxu0 0.0
        %2344 = vmatprep.subr.mxu0 0.0
        %2345 = vmatpush1.msra.mxu0 0.0
        %2346 = vmatprep.subr.mxu0 0.0
        %2347 = vmatpush1.msra.mxu0 0.0
        %2348 = vmatprep.subr.mxu0 0.0
        %2349 = vmatpush1.msra.mxu0 0.0
        %2350 = vmatprep.subr.mxu0 0.0
        %2351 = vmatpush1.msra.mxu0 0.0
        %2352 = vmatprep.subr.mxu0 0.0
        %2353 = vmatpush1.msra.mxu0 0.0
        %2354 = vmatprep.subr.mxu0 0.0
        %2355 = vmatpush1.msra.mxu0 0.0
        %2356 = vmatprep.subr.mxu0 0.0
        %2357 = vmatpush1.msra.mxu0 0.0
        %2358 = vmatprep.subr.mxu0 0.0
        %2359 = vmatpush1.msra.mxu0 0.0
        %2360 = vmatprep.subr.mxu0 0.0
        %2361 = vmatpush1.msra.mxu0 0.0
        %2362 = vmatprep.subr.mxu0 0.0
        %2363 = vmatpush1.msra.mxu0 0.0
        %2364 = vmatprep.subr.mxu0 0.0
        %2365 = vmatpush1.msra.mxu0 0.0
        %2366 = vmatprep.subr.mxu0 0.0
        %2367 = vmatpush1.msra.mxu0 0.0
        %2368 = vmatprep.subr.mxu0 0.0
        %2369 = vmatpush1.msra.mxu0 0.0
        %2370 = vmatprep.subr.mxu0 0.0
        %2371 = vmatpush1.msra.mxu0 0.0
        %2372 = vmatprep.subr.mxu0 0.0
        %2373 = vmatpush1.msra.mxu0 0.0
        %2374 = vmatprep.mubr.f32.mxu0 0.0
        %2375 = vmatmul.mubr.f32.gmra.mrb[0].mxu0 %v2308
        %v2376 = vpop.f32.mrb[0].mxu0
        %v2377 = vadd.f32 0.0, %v2376
        %v2378 = vpop.f32.mrb[0].mxu0
        %2379 = vdwg.mxu0
        %v2381 = vrot.slane %v2377, 4
        %v2383 = vsel %vm435, %v2295, %v2381
        %2384 = vmatprep.subr.mxu0 0.0
        %2385 = vmatpush1.msra.mxu0 %v2383
        %2386 = vmatprep.subr.mxu0 0.0
        %2387 = vmatpush1.msra.mxu0 0.0
        %2388 = vmatprep.subr.mxu0 0.0
        %2389 = vmatpush1.msra.mxu0 0.0
        %2390 = vmatprep.subr.mxu0 0.0
        %2391 = vmatpush1.msra.mxu0 0.0
        %2392 = vmatprep.subr.mxu0 0.0
        %2393 = vmatpush1.msra.mxu0 0.0
        %2394 = vmatprep.subr.mxu0 0.0
        %2395 = vmatpush1.msra.mxu0 0.0
        %2396 = vmatprep.subr.mxu0 0.0
        %2397 = vmatpush1.msra.mxu0 0.0
        %2398 = vmatprep.subr.mxu0 0.0
        %2399 = vmatpush1.msra.mxu0 0.0
        %2400 = vmatprep.subr.mxu0 0.0
        %2401 = vmatpush1.msra.mxu0 0.0
        %2402 = vmatprep.subr.mxu0 0.0
        %2403 = vmatpush1.msra.mxu0 0.0
        %2404 = vmatprep.subr.mxu0 0.0
        %2405 = vmatpush1.msra.mxu0 0.0
        %2406 = vmatprep.subr.mxu0 0.0
        %2407 = vmatpush1.msra.mxu0 0.0
        %2408 = vmatprep.subr.mxu0 0.0
        %2409 = vmatpush1.msra.mxu0 0.0
        %2410 = vmatprep.subr.mxu0 0.0
        %2411 = vmatpush1.msra.mxu0 0.0
        %2412 = vmatprep.subr.mxu0 0.0
        %2413 = vmatpush1.msra.mxu0 0.0
        %2414 = vmatprep.subr.mxu0 0.0
        %2415 = vmatpush1.msra.mxu0 0.0
        %2416 = vmatprep.subr.mxu0 0.0
        %2417 = vmatpush1.msra.mxu0 0.0
        %2418 = vmatprep.subr.mxu0 0.0
        %2419 = vmatpush1.msra.mxu0 0.0
        %2420 = vmatprep.subr.mxu0 0.0
        %2421 = vmatpush1.msra.mxu0 0.0
        %2422 = vmatprep.subr.mxu0 0.0
        %2423 = vmatpush1.msra.mxu0 0.0
        %2424 = vmatprep.subr.mxu0 0.0
        %2425 = vmatpush1.msra.mxu0 0.0
        %2426 = vmatprep.subr.mxu0 0.0
        %2427 = vmatpush1.msra.mxu0 0.0
        %2428 = vmatprep.subr.mxu0 0.0
        %2429 = vmatpush1.msra.mxu0 0.0
        %2430 = vmatprep.subr.mxu0 0.0
        %2431 = vmatpush1.msra.mxu0 0.0
        %2432 = vmatprep.subr.mxu0 0.0
        %2433 = vmatpush1.msra.mxu0 0.0
        %2434 = vmatprep.subr.mxu0 0.0
        %2435 = vmatpush1.msra.mxu0 0.0
        %2436 = vmatprep.subr.mxu0 0.0
        %2437 = vmatpush1.msra.mxu0 0.0
        %2438 = vmatprep.subr.mxu0 0.0
        %2439 = vmatpush1.msra.mxu0 0.0
        %2440 = vmatprep.subr.mxu0 0.0
        %2441 = vmatpush1.msra.mxu0 0.0
        %2442 = vmatprep.subr.mxu0 0.0
        %2443 = vmatpush1.msra.mxu0 0.0
        %2444 = vmatprep.subr.mxu0 0.0
        %2445 = vmatpush1.msra.mxu0 0.0
        %2446 = vmatprep.subr.mxu0 0.0
        %2447 = vmatpush1.msra.mxu0 0.0
        %2448 = vmatprep.mubr.f32.mxu0 0.0
        %2449 = vmatmul.mubr.f32.gmra.mrb[0].mxu0 %v439
        %v2450 = vpop.f32.mrb[0].mxu0
        %v2451 = vadd.f32 0.0, %v2450
        %v2452 = vpop.f32.mrb[0].mxu0
        %2453 = vdwg.mxu0
        %v2454 = vmul.f32 %v2451, %v514
        %v2455 = vadd.f32 %v2454, %v520
        %v2457 = vcombine.high %v2455, %v2455
        %v2459 = vunpack.c.l.s4 1966171168
        %v2460 = vunpack.c.0.s8 %v2459
        %v2461 = vlaneseq
        %v2462 = vshrl.u32 %v2461, 7
        %v2463 = vsub.s32 %v2460, %v2462
        %v2464 = vrot.slane %v2455, %v2463
        %v2466 = vunpack.c.l.s4 1966171168
        %v2467 = vunpack.c.0.s8 %v2466
        %v2468 = vlaneseq
        %v2469 = vshrl.u32 %v2468, 7
        %v2470 = vsub.s32 %v2467, %v2469
        %v2471 = vrot.slane %v2457, %v2470
        %v2472 = vcombine.high %v2464, %v2464
        %v2473 = vcombine.high %v2471, %v2471
        %v2475 = vunpack.c.l.s4 1966171168
        %v2476 = vunpack.c.0.s8 %v2475
        %v2477 = vlaneseq
        %v2478 = vshrl.u32 %v2477, 7
        %v2479 = vsub.s32 %v2476, %v2478
        %v2480 = vrot.slane %v2464, %v2479
        %v2482 = vunpack.c.l.s4 1966171168
        %v2483 = vunpack.c.0.s8 %v2482
        %v2484 = vlaneseq
        %v2485 = vshrl.u32 %v2484, 7
        %v2486 = vsub.s32 %v2483, %v2485
        %v2487 = vrot.slane %v2471, %v2486
        %v2489 = vunpack.c.l.s4 1966171168
        %v2490 = vunpack.c.0.s8 %v2489
        %v2491 = vlaneseq
        %v2492 = vshrl.u32 %v2491, 7
        %v2493 = vsub.s32 %v2490, %v2492
        %v2494 = vrot.slane %v2472, %v2493
        %v2496 = vunpack.c.l.s4 1966171168
        %v2497 = vunpack.c.0.s8 %v2496
        %v2498 = vlaneseq
        %v2499 = vshrl.u32 %v2498, 7
        %v2500 = vsub.s32 %v2497, %v2499
        %v2501 = vrot.slane %v2473, %v2500
        %v2502 = vcombine.high %v2480, %v2480
        %v2503 = vcombine.high %v2487, %v2487
        %v2504 = vcombine.high %v2494, %v2494
        %v2505 = vcombine.high %v2501, %v2501
        %2514 = vst.msk [vmem:[%s215 + $0x6] sm:$0x1] %vm581, %v2480
        %2515 = vst.msk [vmem:[%s215 + $0xe] sm:$0x1] %vm581, %v2494
        %2516 = vst.msk [vmem:[%s215 + $0x16] sm:$0x1] %vm581, %v2502
        %2517 = vst.msk [vmem:[%s215 + $0x1e] sm:$0x1] %vm581, %v2504
        %2518 = vst.msk [vmem:[%s215 + $0x26] sm:$0x1] %vm581, %v2487
        %2519 = vst.msk [vmem:[%s215 + $0x2e] sm:$0x1] %vm581, %v2501
        %2520 = vst.msk [vmem:[%s215 + $0x36] sm:$0x1] %vm581, %v2503
        %2521 = vst.msk [vmem:[%s215 + $0x3e] sm:$0x1] %vm581, %v2505
        %v2522 = vld [vmem:[%s224 + $0xe] sm:$0x1]
        %v2523 = vld [vmem:[%s224 + $0x1e] sm:$0x1]
        %v2524 = vld [vmem:[%s224 + $0x2e] sm:$0x1]
        %v2525 = vld [vmem:[%s224 + $0x3e] sm:$0x1]
        %v2526 = vmax.f32 %v2522, 0.0
        %v2527 = vmax.f32 %v2523, 0.0
        %v2528 = vmax.f32 %v2524, 0.0
        %v2529 = vmax.f32 %v2525, 0.0
        %v2530 = vld [vmem:[%s224 + $0xf] sm:$0x1]
        %v2531 = vld [vmem:[%s224 + $0x1f] sm:$0x1]
        %v2532 = vld [vmem:[%s224 + $0x2f] sm:$0x1]
        %v2533 = vld [vmem:[%s224 + $0x3f] sm:$0x1]
        %v2534 = vmax.f32 %v2530, 0.0
        %v2535 = vmax.f32 %v2531, 0.0
        %v2536 = vmax.f32 %v2532, 0.0
        %v2537 = vmax.f32 %v2533, 0.0
        %v2542 = vrot.slane %v2527, 7
        %v2543 = vsel %vm269, %v2542, %v2526
        %v2544 = vrot.slane %v2528, 6
        %v2545 = vsel %vm272, %v2544, %v2543
        %v2546 = vrot.slane %v2529, 5
        %v2547 = vsel %vm275, %v2546, %v2545
        %v2548 = vsel %vm277, %v2547, 0
        %2550 = vmatprep.subr.mxu0 0.0
        %2551 = vmatpush1.msra.mxu0 %v239
        %2552 = vmatprep.subr.mxu0 0.0
        %2553 = vmatpush1.msra.mxu0 %v240
        %2554 = vmatprep.subr.mxu0 0.0
        %2555 = vmatpush1.msra.mxu0 0.0
        %2556 = vmatprep.subr.mxu0 0.0
        %2557 = vmatpush1.msra.mxu0 0.0
        %2558 = vmatprep.subr.mxu0 0.0
        %2559 = vmatpush1.msra.mxu0 0.0
        %2560 = vmatprep.subr.mxu0 0.0
        %2561 = vmatpush1.msra.mxu0 0.0
        %2562 = vmatprep.subr.mxu0 0.0
        %2563 = vmatpush1.msra.mxu0 0.0
        %2564 = vmatprep.subr.mxu0 0.0
        %2565 = vmatpush1.msra.mxu0 0.0
        %2566 = vmatprep.subr.mxu0 0.0
        %2567 = vmatpush1.msra.mxu0 0.0
        %2568 = vmatprep.subr.mxu0 0.0
        %2569 = vmatpush1.msra.mxu0 0.0
        %2570 = vmatprep.subr.mxu0 0.0
        %2571 = vmatpush1.msra.mxu0 0.0
        %2572 = vmatprep.subr.mxu0 0.0
        %2573 = vmatpush1.msra.mxu0 0.0
        %2574 = vmatprep.subr.mxu0 0.0
        %2575 = vmatpush1.msra.mxu0 0.0
        %2576 = vmatprep.subr.mxu0 0.0
        %2577 = vmatpush1.msra.mxu0 0.0
        %2578 = vmatprep.subr.mxu0 0.0
        %2579 = vmatpush1.msra.mxu0 0.0
        %2580 = vmatprep.subr.mxu0 0.0
        %2581 = vmatpush1.msra.mxu0 0.0
        %2582 = vmatprep.subr.mxu0 0.0
        %2583 = vmatpush1.msra.mxu0 0.0
        %2584 = vmatprep.subr.mxu0 0.0
        %2585 = vmatpush1.msra.mxu0 0.0
        %2586 = vmatprep.subr.mxu0 0.0
        %2587 = vmatpush1.msra.mxu0 0.0
        %2588 = vmatprep.subr.mxu0 0.0
        %2589 = vmatpush1.msra.mxu0 0.0
        %2590 = vmatprep.subr.mxu0 0.0
        %2591 = vmatpush1.msra.mxu0 0.0
        %2592 = vmatprep.subr.mxu0 0.0
        %2593 = vmatpush1.msra.mxu0 0.0
        %2594 = vmatprep.subr.mxu0 0.0
        %2595 = vmatpush1.msra.mxu0 0.0
        %2596 = vmatprep.subr.mxu0 0.0
        %2597 = vmatpush1.msra.mxu0 0.0
        %2598 = vmatprep.subr.mxu0 0.0
        %2599 = vmatpush1.msra.mxu0 0.0
        %2600 = vmatprep.subr.mxu0 0.0
        %2601 = vmatpush1.msra.mxu0 0.0
        %2602 = vmatprep.subr.mxu0 0.0
        %2603 = vmatpush1.msra.mxu0 0.0
        %2604 = vmatprep.subr.mxu0 0.0
        %2605 = vmatpush1.msra.mxu0 0.0
        %2606 = vmatprep.subr.mxu0 0.0
        %2607 = vmatpush1.msra.mxu0 0.0
        %2608 = vmatprep.subr.mxu0 0.0
        %2609 = vmatpush1.msra.mxu0 0.0
        %2610 = vmatprep.subr.mxu0 0.0
        %2611 = vmatpush1.msra.mxu0 0.0
        %2612 = vmatprep.subr.mxu0 0.0
        %2613 = vmatpush1.msra.mxu0 0.0
        %2614 = vmatprep.mubr.f32.mxu0 0.0
        %2615 = vmatmul.mubr.f32.gmra.mrb[0].mxu0 %v2548
        %v2616 = vpop.f32.mrb[0].mxu0
        %v2617 = vadd.f32 0.0, %v2616
        %v2618 = vpop.f32.mrb[0].mxu0
        %2619 = vdwg.mxu0
        %v2624 = vrot.slane %v2535, 7
        %v2625 = vsel %vm269, %v2624, %v2534
        %v2626 = vrot.slane %v2536, 6
        %v2627 = vsel %vm272, %v2626, %v2625
        %v2628 = vrot.slane %v2537, 5
        %v2629 = vsel %vm275, %v2628, %v2627
        %v2630 = vsel %vm277, %v2629, 0
        %2632 = vmatprep.subr.mxu0 0.0
        %2633 = vmatpush1.msra.mxu0 %v246
        %2634 = vmatprep.subr.mxu0 0.0
        %2635 = vmatpush1.msra.mxu0 %v247
        %2636 = vmatprep.subr.mxu0 0.0
        %2637 = vmatpush1.msra.mxu0 0.0
        %2638 = vmatprep.subr.mxu0 0.0
        %2639 = vmatpush1.msra.mxu0 0.0
        %2640 = vmatprep.subr.mxu0 0.0
        %2641 = vmatpush1.msra.mxu0 0.0
        %2642 = vmatprep.subr.mxu0 0.0
        %2643 = vmatpush1.msra.mxu0 0.0
        %2644 = vmatprep.subr.mxu0 0.0
        %2645 = vmatpush1.msra.mxu0 0.0
        %2646 = vmatprep.subr.mxu0 0.0
        %2647 = vmatpush1.msra.mxu0 0.0
        %2648 = vmatprep.subr.mxu0 0.0
        %2649 = vmatpush1.msra.mxu0 0.0
        %2650 = vmatprep.subr.mxu0 0.0
        %2651 = vmatpush1.msra.mxu0 0.0
        %2652 = vmatprep.subr.mxu0 0.0
        %2653 = vmatpush1.msra.mxu0 0.0
        %2654 = vmatprep.subr.mxu0 0.0
        %2655 = vmatpush1.msra.mxu0 0.0
        %2656 = vmatprep.subr.mxu0 0.0
        %2657 = vmatpush1.msra.mxu0 0.0
        %2658 = vmatprep.subr.mxu0 0.0
        %2659 = vmatpush1.msra.mxu0 0.0
        %2660 = vmatprep.subr.mxu0 0.0
        %2661 = vmatpush1.msra.mxu0 0.0
        %2662 = vmatprep.subr.mxu0 0.0
        %2663 = vmatpush1.msra.mxu0 0.0
        %2664 = vmatprep.subr.mxu0 0.0
        %2665 = vmatpush1.msra.mxu0 0.0
        %2666 = vmatprep.subr.mxu0 0.0
        %2667 = vmatpush1.msra.mxu0 0.0
        %2668 = vmatprep.subr.mxu0 0.0
        %2669 = vmatpush1.msra.mxu0 0.0
        %2670 = vmatprep.subr.mxu0 0.0
        %2671 = vmatpush1.msra.mxu0 0.0
        %2672 = vmatprep.subr.mxu0 0.0
        %2673 = vmatpush1.msra.mxu0 0.0
        %2674 = vmatprep.subr.mxu0 0.0
        %2675 = vmatpush1.msra.mxu0 0.0
        %2676 = vmatprep.subr.mxu0 0.0
        %2677 = vmatpush1.msra.mxu0 0.0
        %2678 = vmatprep.subr.mxu0 0.0
        %2679 = vmatpush1.msra.mxu0 0.0
        %2680 = vmatprep.subr.mxu0 0.0
        %2681 = vmatpush1.msra.mxu0 0.0
        %2682 = vmatprep.subr.mxu0 0.0
        %2683 = vmatpush1.msra.mxu0 0.0
        %2684 = vmatprep.subr.mxu0 0.0
        %2685 = vmatpush1.msra.mxu0 0.0
        %2686 = vmatprep.subr.mxu0 0.0
        %2687 = vmatpush1.msra.mxu0 0.0
        %2688 = vmatprep.subr.mxu0 0.0
        %2689 = vmatpush1.msra.mxu0 0.0
        %2690 = vmatprep.subr.mxu0 0.0
        %2691 = vmatpush1.msra.mxu0 0.0
        %2692 = vmatprep.subr.mxu0 0.0
        %2693 = vmatpush1.msra.mxu0 0.0
        %2694 = vmatprep.subr.mxu0 0.0
        %2695 = vmatpush1.msra.mxu0 0.0
        %2696 = vmatprep.mubr.f32.mxu0 0.0
        %2697 = vmatmul.mubr.f32.gmra.mrb[0].mxu0 %v2630
        %v2698 = vpop.f32.mrb[0].mxu0
        %v2699 = vadd.f32 0.0, %v2698
        %v2700 = vpop.f32.mrb[0].mxu0
        %2701 = vdwg.mxu0
        %v2703 = vrot.slane %v2699, 4
        %v2705 = vsel %vm435, %v2617, %v2703
        %2706 = vmatprep.subr.mxu0 0.0
        %2707 = vmatpush1.msra.mxu0 %v2705
        %2708 = vmatprep.subr.mxu0 0.0
        %2709 = vmatpush1.msra.mxu0 0.0
        %2710 = vmatprep.subr.mxu0 0.0
        %2711 = vmatpush1.msra.mxu0 0.0
        %2712 = vmatprep.subr.mxu0 0.0
        %2713 = vmatpush1.msra.mxu0 0.0
        %2714 = vmatprep.subr.mxu0 0.0
        %2715 = vmatpush1.msra.mxu0 0.0
        %2716 = vmatprep.subr.mxu0 0.0
        %2717 = vmatpush1.msra.mxu0 0.0
        %2718 = vmatprep.subr.mxu0 0.0
        %2719 = vmatpush1.msra.mxu0 0.0
        %2720 = vmatprep.subr.mxu0 0.0
        %2721 = vmatpush1.msra.mxu0 0.0
        %2722 = vmatprep.subr.mxu0 0.0
        %2723 = vmatpush1.msra.mxu0 0.0
        %2724 = vmatprep.subr.mxu0 0.0
        %2725 = vmatpush1.msra.mxu0 0.0
        %2726 = vmatprep.subr.mxu0 0.0
        %2727 = vmatpush1.msra.mxu0 0.0
        %2728 = vmatprep.subr.mxu0 0.0
        %2729 = vmatpush1.msra.mxu0 0.0
        %2730 = vmatprep.subr.mxu0 0.0
        %2731 = vmatpush1.msra.mxu0 0.0
        %2732 = vmatprep.subr.mxu0 0.0
        %2733 = vmatpush1.msra.mxu0 0.0
        %2734 = vmatprep.subr.mxu0 0.0
        %2735 = vmatpush1.msra.mxu0 0.0
        %2736 = vmatprep.subr.mxu0 0.0
        %2737 = vmatpush1.msra.mxu0 0.0
        %2738 = vmatprep.subr.mxu0 0.0
        %2739 = vmatpush1.msra.mxu0 0.0
        %2740 = vmatprep.subr.mxu0 0.0
        %2741 = vmatpush1.msra.mxu0 0.0
        %2742 = vmatprep.subr.mxu0 0.0
        %2743 = vmatpush1.msra.mxu0 0.0
        %2744 = vmatprep.subr.mxu0 0.0
        %2745 = vmatpush1.msra.mxu0 0.0
        %2746 = vmatprep.subr.mxu0 0.0
        %2747 = vmatpush1.msra.mxu0 0.0
        %2748 = vmatprep.subr.mxu0 0.0
        %2749 = vmatpush1.msra.mxu0 0.0
        %2750 = vmatprep.subr.mxu0 0.0
        %2751 = vmatpush1.msra.mxu0 0.0
        %2752 = vmatprep.subr.mxu0 0.0
        %2753 = vmatpush1.msra.mxu0 0.0
        %2754 = vmatprep.subr.mxu0 0.0
        %2755 = vmatpush1.msra.mxu0 0.0
        %2756 = vmatprep.subr.mxu0 0.0
        %2757 = vmatpush1.msra.mxu0 0.0
        %2758 = vmatprep.subr.mxu0 0.0
        %2759 = vmatpush1.msra.mxu0 0.0
        %2760 = vmatprep.subr.mxu0 0.0
        %2761 = vmatpush1.msra.mxu0 0.0
        %2762 = vmatprep.subr.mxu0 0.0
        %2763 = vmatpush1.msra.mxu0 0.0
        %2764 = vmatprep.subr.mxu0 0.0
        %2765 = vmatpush1.msra.mxu0 0.0
        %2766 = vmatprep.subr.mxu0 0.0
        %2767 = vmatpush1.msra.mxu0 0.0
        %2768 = vmatprep.subr.mxu0 0.0
        %2769 = vmatpush1.msra.mxu0 0.0
        %2770 = vmatprep.mubr.f32.mxu0 0.0
        %2771 = vmatmul.mubr.f32.gmra.mrb[0].mxu0 %v439
        %v2772 = vpop.f32.mrb[0].mxu0
        %v2773 = vadd.f32 0.0, %v2772
        %v2774 = vpop.f32.mrb[0].mxu0
        %2775 = vdwg.mxu0
        %v2776 = vmul.f32 %v2773, %v514
        %v2777 = vadd.f32 %v2776, %v520
        %v2779 = vcombine.high %v2777, %v2777
        %v2781 = vunpack.c.l.s4 1966171168
        %v2782 = vunpack.c.0.s8 %v2781
        %v2783 = vlaneseq
        %v2784 = vshrl.u32 %v2783, 7
        %v2785 = vsub.s32 %v2782, %v2784
        %v2786 = vrot.slane %v2777, %v2785
        %v2788 = vunpack.c.l.s4 1966171168
        %v2789 = vunpack.c.0.s8 %v2788
        %v2790 = vlaneseq
        %v2791 = vshrl.u32 %v2790, 7
        %v2792 = vsub.s32 %v2789, %v2791
        %v2793 = vrot.slane %v2779, %v2792
        %v2794 = vcombine.high %v2786, %v2786
        %v2795 = vcombine.high %v2793, %v2793
        %v2797 = vunpack.c.l.s4 1966171168
        %v2798 = vunpack.c.0.s8 %v2797
        %v2799 = vlaneseq
        %v2800 = vshrl.u32 %v2799, 7
        %v2801 = vsub.s32 %v2798, %v2800
        %v2802 = vrot.slane %v2786, %v2801
        %v2804 = vunpack.c.l.s4 1966171168
        %v2805 = vunpack.c.0.s8 %v2804
        %v2806 = vlaneseq
        %v2807 = vshrl.u32 %v2806, 7
        %v2808 = vsub.s32 %v2805, %v2807
        %v2809 = vrot.slane %v2793, %v2808
        %v2811 = vunpack.c.l.s4 1966171168
        %v2812 = vunpack.c.0.s8 %v2811
        %v2813 = vlaneseq
        %v2814 = vshrl.u32 %v2813, 7
        %v2815 = vsub.s32 %v2812, %v2814
        %v2816 = vrot.slane %v2794, %v2815
        %v2818 = vunpack.c.l.s4 1966171168
        %v2819 = vunpack.c.0.s8 %v2818
        %v2820 = vlaneseq
        %v2821 = vshrl.u32 %v2820, 7
        %v2822 = vsub.s32 %v2819, %v2821
        %v2823 = vrot.slane %v2795, %v2822
        %v2824 = vcombine.high %v2802, %v2802
        %v2825 = vcombine.high %v2809, %v2809
        %v2826 = vcombine.high %v2816, %v2816
        %v2827 = vcombine.high %v2823, %v2823
        %2836 = vst.msk [vmem:[%s215 + $0x7] sm:$0x1] %vm581, %v2802
        %2837 = vst.msk [vmem:[%s215 + $0xf] sm:$0x1] %vm581, %v2816
        %2838 = vst.msk [vmem:[%s215 + $0x17] sm:$0x1] %vm581, %v2824
        %2839 = vst.msk [vmem:[%s215 + $0x1f] sm:$0x1] %vm581, %v2826
        %2840 = vst.msk [vmem:[%s215 + $0x27] sm:$0x1] %vm581, %v2809
        %2841 = vst.msk [vmem:[%s215 + $0x2f] sm:$0x1] %vm581, %v2823
        %2842 = vst.msk [vmem:[%s215 + $0x37] sm:$0x1] %vm581, %v2825
        %2843 = vst.msk [vmem:[%s215 + $0x3f] sm:$0x1] %vm581, %v2827
        %s2844 = sand.u32 %s131, 1
        %s2845 = scalar_lea.sflag [#allocation3], %s2844
        %s2846 = sand.u32 %s131, 1
        %s2847 = smul.addr %s2846, 64
        %s2848 = scalar_lea.vmem [#allocation2], %s2847
        // Predicated region
        $region37: #{factorized_reduce.3} parent=35 // pred_check
          %p2849 = pneg %p141
        $region38: #{factorized_reduce.3} parent=35 // pred_check_branch
          %2851 = sbr.rel (%p2849) target = $region40
        $region39: #{factorized_reduce.3} parent=35 // pred_region
          %s2853 = ssub.s32 1024, 1024
          %2854 = vsyncadd %s2845, %s2853
          %s2855 = smul.addr %s22, 8
          %s2856 = sadd.s32 %s23, %s2855
          %s2857 = smul.addr %s2856, 128
          %s2858 = scalar_lea.hbm %s4, %s2857
          %s2859 = sshll.u32 %s2848, 4
          %s2860 = int_to_ptr.vmem [resolvable:$true] %s2859
          %2865 = dma.vmem_to_hbm [thread:$0]  %s2860, 1024, %s2858, %s2845, 128, 128, 8
        $region40: #{factorized_reduce.3} parent=35 // pred_fallthru
          _
      $region36: #{factorized_reduce.3} parent=5 // pred_fallthru
        _
      %p2866 = scmp.le.s32.totalorder 2, %s13
      // Predicated region
      $region41: #{factorized_reduce.3} parent=5 // pred_check
        %p2867 = pneg %p2866
      $region42: #{factorized_reduce.3} parent=5 // pred_check_branch
        %2869 = sbr.rel (%p2867) target = $region44
      $region43: #{factorized_reduce.3} parent=5 // pred_region
        %s2870 = ssub.s32 %s13, 2
        // Predicated region
        $region45: #{factorized_reduce.3} parent=43 // pred_check
          %p2871 = pneg %p147
        $region46: #{factorized_reduce.3} parent=43 // pred_check_branch
          %2873 = sbr.rel (%p2871) target = $region48
        $region47: #{factorized_reduce.3} parent=43 // pred_region
          %s2874 = sand.u32 %s132, 1
          %s2875 = scalar_lea.sflag [#allocation3], %s2874
          %s2876 = sand.u32 %s132, 1
          %s2877 = smul.addr %s2876, 64
          %s2878 = scalar_lea.vmem [#allocation2], %s2877
          %2879 = dma.done %s2875, 1024
        $region48: #{factorized_reduce.3} parent=43 // pred_fallthru
          _
      $region44: #{factorized_reduce.3} parent=5 // pred_fallthru
        _
    $region6: #{factorized_reduce.3} parent=1 // loop_footer
      %s17 = sadd.s32 1, %s13
    $region7: #{factorized_reduce.3} parent=1 // loop_footer_branch
      %12 = sbr.rel target = $region3
    $region8: #{factorized_reduce.3} parent=1 // loop_exit
      _
    %2880 = vsyncpa [#allocation3], 1
    %s2881 = scalar_lea.sflag [#allocation3], 1
    %2882 = vsyncpa %s2881, 1

</llo_original>
